<compile_context>
chip_gen: v7x
topology: tpu7x:2x2x1
jax: 0.10.0
libtpu: 0.0.40
codegen_flags: <defaults>
</compile_context>

<pallas_src>
import math
import jax
import jax.numpy as jnp
from jax.experimental import pallas as pl
from jax.experimental.pallas import tpu as pltpu

# Small, forward-consistent config (PyTorch defaults in comments).
INPUT_DIM   = 32    # default 1024
EMBED_DIM   = 32    # default 512
NUM_HEADS   = 4     # default 8
NUM_LAYERS  = 2
MAX_SEQ_LEN = 16    # default 50
FF_DIM      = 64    # nn.TransformerEncoderLayer default dim_feedforward=2048, scaled down
SEQ_LEN     = 8
BATCH       = 4
HEAD_DIM    = EMBED_DIM // NUM_HEADS
LN_EPS      = 1e-5
NEG_INF     = -1e9


# -------------------------------- kernel ------------------------------------

def _layer_norm(x, gamma, beta):
    mu = jnp.mean(x, axis=-1, keepdims=True)
    var = jnp.mean((x - mu) ** 2, axis=-1, keepdims=True)
    return (x - mu) * jax.lax.rsqrt(var + LN_EPS) * gamma + beta


def _bf16(x):
    return x.astype(jnp.bfloat16)


def fused_transformer_kernel(x_ref, kbias_ref, pe_ref,
                             in_w_ref, in_b_ref,
                             a_ref, c_ref, vo_ref, bo_ref,
                             g1_ref, be1_ref, w1_ref, b1_ref,
                             w2_ref, b2_ref, g2_ref, be2_ref,
                             out_w_ref, out_b_ref, o_ref):
    """One batch element (grid axis 0) of the Transformer forward, fully in VMEM."""
    x_in = x_ref[0]                              # (S, D_in) f32
    key_bias = kbias_ref[0]                      # (1, S)  f32, 0 / -1e9 per key

    # ---- input_proj + positional encoding (bf16 matmul, f32 accumulate)
    x = jnp.dot(_bf16(x_in), in_w_ref[...], preferred_element_type=jnp.float32)
    x = x + in_b_ref[...] + pe_ref[...]          # (S, E) f32 residual stream

    for l in range(NUM_LAYERS):                  # static layer unroll
        # ----- multi-head self attention (folded per-head weights, no slicing)
        xb = _bf16(x)
        attn = None
        for h in range(NUM_HEADS):               # static head unroll
            # scores_h = (x Wq_h + bq_h)(x Wk_h + bk_h)^T / sqrt(Dh); the k-bias
            # term is constant along the key axis (softmax-invariant) -> dropped.
            t = jnp.dot(xb, a_ref[l, h], preferred_element_type=jnp.float32)
            t = t + c_ref[l, h]                                      # (S, E)
            s = jax.lax.dot_general(_bf16(t), xb, (((1,), (1,)), ((), ())),
                                    preferred_element_type=jnp.float32)  # (S, S)
            s = s + key_bias
            s = s - jnp.max(s, axis=-1, keepdims=True)
            p = jnp.exp(s)
            p = p * pl.reciprocal(jnp.sum(p, axis=-1, keepdims=True), approx=True)
            # head-through-out_proj: (p @ x) @ (Wv_h Wo_h), accumulated over heads
            u = jnp.dot(_bf16(p), xb, preferred_element_type=jnp.float32)     # (S, E)
            part = jnp.dot(_bf16(u), vo_ref[l, h],
                           preferred_element_type=jnp.float32)                # (S, E)
            attn = part if attn is None else attn + part
        attn = attn + bo_ref[l]                  # bo + bv @ Wo (folded on host)

        # TODO(synk): dropout (p=0.1) omitted -- eval-mode semantics (identity).
        x = _layer_norm(x + attn, g1_ref[l], be1_ref[l])

        # ----- feed-forward -----
        xb = _bf16(x)
        h1 = jnp.dot(xb, w1_ref[l], preferred_element_type=jnp.float32) + b1_ref[l]
        h1 = jnp.maximum(h1, 0.0)                # ReLU (layer default)
        h2 = jnp.dot(_bf16(h1), w2_ref[l],
                     preferred_element_type=jnp.float32) + b2_ref[l]
        x = _layer_norm(x + h2, g2_ref[l], be2_ref[l])

    # ---- mean over sequence (includes padded positions, matching the reference),
    #      done on the MXU as (1/S) * ones(1,S) @ x, then output projection.
    s_len = x.shape[0]
    pool = jnp.full((1, s_len), 1.0 / s_len, dtype=jnp.bfloat16)
    m = jnp.dot(pool, _bf16(x), preferred_element_type=jnp.float32)          # (1, E)
    o = jnp.dot(_bf16(m), out_w_ref[...], preferred_element_type=jnp.float32)
    o_ref[0] = o + out_b_ref[...]


# ------------------------------ host-side glue -------------------------------

def sinusoidal_pe(max_len, embed_dim):
    position = jnp.arange(max_len, dtype=jnp.float32)[:, None]
    div_term = jnp.exp(jnp.arange(0, embed_dim, 2, dtype=jnp.float32)
                       * -(math.log(10000.0) / embed_dim))
    ang = position * div_term                                  # (L, E/2)
    # interleave sin/cos -> pe[:, 0::2]=sin, pe[:, 1::2]=cos
    return jnp.stack([jnp.sin(ang), jnp.cos(ang)], axis=-1).reshape(max_len, embed_dim)


def init_params(key):
    """Generates PyTorch-style weights, then folds the MHA weights on the host."""
    E, H, Dh = EMBED_DIM, NUM_HEADS, HEAD_DIM
    scale = 1.0 / math.sqrt(Dh)

    def dense_t(k, din, dout):                   # pre-transposed (in, out) weights
        kw, kb = jax.random.split(k)
        bound = 1.0 / math.sqrt(din)
        w_t = jax.random.uniform(kw, (din, dout), jnp.float32, -bound, bound)
        b = jax.random.uniform(kb, (1, dout), jnp.float32, -bound, bound)
        return w_t, b

    keys = jax.random.split(key, 2 + NUM_LAYERS)
    params = {}
    in_w, params['in_b'] = dense_t(keys[0], INPUT_DIM, E)
    out_w, params['out_b'] = dense_t(keys[1], E, E)

    A, C, VO, BO, W1, B1, W2, B2 = [], [], [], [], [], [], [], []
    for l in range(NUM_LAYERS):
        lk = jax.random.split(keys[2 + l], 4)
        wqkv, bqkv = dense_t(lk[0], E, 3 * E)    # columns = [Q | K | V], heads contiguous
        wo, bo = dense_t(lk[1], E, E)
        w1, b1 = dense_t(lk[2], E, FF_DIM)
        w2, b2 = dense_t(lk[3], FF_DIM, E)

        wq, wk, wv = wqkv[:, :E], wqkv[:, E:2 * E], wqkv[:, 2 * E:]
        bq, bv = bqkv[:, :E], bqkv[:, 2 * E:]
        # bk (key bias) only adds a per-query constant to the scores -> softmax-
        # invariant -> omitted from the fold (forward output is unchanged).
        a_l, c_l, vo_l = [], [], []
        for h in range(H):
            sl = slice(h * Dh, (h + 1) * Dh)
            a_l.append(scale * wq[:, sl] @ wk[:, sl].T)        # (E, E)
            c_l.append(scale * bq[:, sl] @ wk[:, sl].T)        # (1, E)
            vo_l.append(wv[:, sl] @ wo[sl, :])                 # (E, E)
        A.append(jnp.stack(a_l)); C.append(jnp.stack(c_l)); VO.append(jnp.stack(vo_l))
        BO.append(bo + bv @ wo)                                # (1, E): bo + sum_h bv_h Wo_h
        W1.append(w1); B1.append(b1); W2.append(w2); B2.append(b2)

    ones = jnp.ones((NUM_LAYERS, 1, E), jnp.float32)
    zeros = jnp.zeros((NUM_LAYERS, 1, E), jnp.float32)
    bf = jnp.bfloat16
    params.update(
        in_w=in_w.astype(bf), out_w=out_w.astype(bf),
        A=jnp.stack(A).astype(bf),          # (L, H, E, E)
        c=jnp.stack(C),                     # (L, H, 1, E) f32
        VO=jnp.stack(VO).astype(bf),        # (L, H, E, E)
        bo=jnp.stack(BO),                   # (L, 1, E)    f32
        g1=ones, be1=zeros, g2=ones, be2=zeros,
        w1=jnp.stack(W1).astype(bf), b1=jnp.stack(B1),
        w2=jnp.stack(W2).astype(bf), b2=jnp.stack(B2),
    )
    return params


@jax.jit
def transformer_forward(params, x, mask):
    """x: (B, S, INPUT_DIM) f32; mask: (B, S) key-padding mask (True = ignore)."""
    B, S, D_in = x.shape
    pe = sinusoidal_pe(MAX_SEQ_LEN, EMBED_DIM)[:S]
    # host-precomputed additive attention bias (0 / -1e9 per key)
    key_bias = (mask.astype(jnp.float32) * NEG_INF).reshape(B, 1, S)

    weights = (pe, params['in_w'], params['in_b'],
               params['A'], params['c'], params['VO'], params['bo'],
               params['g1'], params['be1'], params['w1'], params['b1'],
               params['w2'], params['b2'], params['g2'], params['be2'],
               params['out_w'], params['out_b'])
    resident = pl.BlockSpec(memory_space=pltpu.MemorySpace.VMEM)   # whole-array in VMEM

    out = pl.pallas_call(
        fused_transformer_kernel,
        out_shape=jax.ShapeDtypeStruct((B, 1, EMBED_DIM), jnp.float32),
        grid=(B,),
        in_specs=[pl.BlockSpec((1, S, D_in), lambda b: (b, 0, 0)),
                  pl.BlockSpec((1, 1, S), lambda b: (b, 0, 0))]
                 + [resident] * len(weights),
        out_specs=pl.BlockSpec((1, 1, EMBED_DIM), lambda b: (b, 0, 0)),
        compiler_params=pltpu.CompilerParams(
            dimension_semantics=("parallel",)),   # shards the batch over TCs on v7x
    )(x, key_bias, *weights)
    return out[:, 0, :]                           # (B, E)


if __name__ == "__main__":
    key = jax.random.PRNGKey(0)
    kp, kx = jax.random.split(key)
    params = init_params(kp)

    x = jax.random.normal(kx, (BATCH, SEQ_LEN, INPUT_DIM), dtype=jnp.float32)
    # key-padding mask (B, S): last two positions are padding (True = ignore)
    mask = jnp.zeros((BATCH, SEQ_LEN), dtype=bool).at[:, -2:].set(True)

    out = transformer_forward(params, x, mask)
    jax.block_until_ready(out)
    assert out.shape == (BATCH, EMBED_DIM) and out.dtype == jnp.float32
    assert bool(jnp.all(jnp.isfinite(out)))
    print("KERNEL_OK")
</pallas_src>

<mosaic_0001>
module attributes {stable_mosaic.version = 11 : i64} {
  func.func @fused_transformer_kernel(%arg0: i32, %arg1: memref<1x8x32xf32, #tpu.memory_space<vmem>>, %arg2: memref<1x1x8xf32, #tpu.memory_space<vmem>>, %arg3: memref<8x32xf32, #tpu.memory_space<vmem>>, %arg4: memref<32x32xbf16, #tpu.memory_space<vmem>>, %arg5: memref<1x32xf32, #tpu.memory_space<vmem>>, %arg6: memref<2x4x32x32xbf16, #tpu.memory_space<vmem>>, %arg7: memref<2x4x1x32xf32, #tpu.memory_space<vmem>>, %arg8: memref<2x4x32x32xbf16, #tpu.memory_space<vmem>>, %arg9: memref<2x1x32xf32, #tpu.memory_space<vmem>>, %arg10: memref<2x1x32xf32, #tpu.memory_space<vmem>>, %arg11: memref<2x1x32xf32, #tpu.memory_space<vmem>>, %arg12: memref<2x32x64xbf16, #tpu.memory_space<vmem>>, %arg13: memref<2x1x64xf32, #tpu.memory_space<vmem>>, %arg14: memref<2x64x32xbf16, #tpu.memory_space<vmem>>, %arg15: memref<2x1x32xf32, #tpu.memory_space<vmem>>, %arg16: memref<2x1x32xf32, #tpu.memory_space<vmem>>, %arg17: memref<2x1x32xf32, #tpu.memory_space<vmem>>, %arg18: memref<32x32xbf16, #tpu.memory_space<vmem>>, %arg19: memref<1x32xf32, #tpu.memory_space<vmem>>, %arg20: memref<1x1x32xf32, #tpu.memory_space<vmem>>) attributes {dimension_semantics = [#tpu.dimension_semantics<parallel>], iteration_bounds = array<i64: 4>, scalar_prefetch = 0 : i64, scratch_operands = 0 : i64, tpu.core_type = #tpu.core_type<tc>, window_params = [{transform_indices = @transform_0, window_bounds = array<i64: 1, 8, 32>}, {transform_indices = @transform_1, window_bounds = array<i64: 1, 1, 8>}, {pipeline_mode = #tpu.pipeline_mode<synchronous>, transform_indices = @transform_2, window_bounds = array<i64: 8, 32>}, {pipeline_mode = #tpu.pipeline_mode<synchronous>, transform_indices = @transform_3, window_bounds = array<i64: 32, 32>}, {pipeline_mode = #tpu.pipeline_mode<synchronous>, transform_indices = @transform_4, window_bounds = array<i64: 1, 32>}, {pipeline_mode = #tpu.pipeline_mode<synchronous>, transform_indices = @transform_5, window_bounds = array<i64: 2, 4, 32, 32>}, {pipeline_mode = #tpu.pipeline_mode<synchronous>, transform_indices = @transform_6, window_bounds = array<i64: 2, 4, 1, 32>}, {pipeline_mode = #tpu.pipeline_mode<synchronous>, transform_indices = @transform_7, window_bounds = array<i64: 2, 4, 32, 32>}, {pipeline_mode = #tpu.pipeline_mode<synchronous>, transform_indices = @transform_8, window_bounds = array<i64: 2, 1, 32>}, {pipeline_mode = #tpu.pipeline_mode<synchronous>, transform_indices = @transform_9, window_bounds = array<i64: 2, 1, 32>}, {pipeline_mode = #tpu.pipeline_mode<synchronous>, transform_indices = @transform_10, window_bounds = array<i64: 2, 1, 32>}, {pipeline_mode = #tpu.pipeline_mode<synchronous>, transform_indices = @transform_11, window_bounds = array<i64: 2, 32, 64>}, {pipeline_mode = #tpu.pipeline_mode<synchronous>, transform_indices = @transform_12, window_bounds = array<i64: 2, 1, 64>}, {pipeline_mode = #tpu.pipeline_mode<synchronous>, transform_indices = @transform_13, window_bounds = array<i64: 2, 64, 32>}, {pipeline_mode = #tpu.pipeline_mode<synchronous>, transform_indices = @transform_14, window_bounds = array<i64: 2, 1, 32>}, {pipeline_mode = #tpu.pipeline_mode<synchronous>, transform_indices = @transform_15, window_bounds = array<i64: 2, 1, 32>}, {pipeline_mode = #tpu.pipeline_mode<synchronous>, transform_indices = @transform_16, window_bounds = array<i64: 2, 1, 32>}, {pipeline_mode = #tpu.pipeline_mode<synchronous>, transform_indices = @transform_17, window_bounds = array<i64: 32, 32>}, {pipeline_mode = #tpu.pipeline_mode<synchronous>, transform_indices = @transform_18, window_bounds = array<i64: 1, 32>}, {transform_indices = @transform_19, window_bounds = array<i64: 1, 1, 32>}]} {
    %c0 = arith.constant 0 : index
    %c0_0 = arith.constant 0 : index
    %c0_1 = arith.constant 0 : index
    %0 = vector.load %arg1[%c0, %c0_0, %c0_1] : memref<1x8x32xf32, #tpu.memory_space<vmem>>, vector<1x8x32xf32>
    %1 = vector.shape_cast %0 : vector<1x8x32xf32> to vector<8x32xf32>
    %c0_2 = arith.constant 0 : index
    %c0_3 = arith.constant 0 : index
    %c0_4 = arith.constant 0 : index
    %2 = vector.load %arg2[%c0_2, %c0_3, %c0_4] : memref<1x1x8xf32, #tpu.memory_space<vmem>>, vector<1x1x8xf32>
    %3 = vector.shape_cast %2 : vector<1x1x8xf32> to vector<1x8xf32>
    %4 = arith.truncf %1 : vector<8x32xf32> to vector<8x32xbf16>
    %c0_5 = arith.constant 0 : index
    %c0_6 = arith.constant 0 : index
    %5 = vector.load %arg4[%c0_5, %c0_6] : memref<32x32xbf16, #tpu.memory_space<vmem>>, vector<32x32xbf16>
    %cst = arith.constant dense<0.000000e+00> : vector<8x32xf32>
    %6 = tpu.matmul %4, %5, %cst {dimension_numbers = #tpu.dot_dimension_numbers<[1], [0], [0], [1], [0, 0, 1, 1], [], []>} : vector<8x32xbf16>, vector<32x32xbf16>, vector<8x32xf32> -> vector<8x32xf32>
    %c0_7 = arith.constant 0 : index
    %c0_8 = arith.constant 0 : index
    %7 = vector.load %arg5[%c0_7, %c0_8] : memref<1x32xf32, #tpu.memory_space<vmem>>, vector<1x32xf32>
    %8 = vector.broadcast %7 : vector<1x32xf32> to vector<8x32xf32>
    %9 = arith.addf %6, %8 : vector<8x32xf32>
    %c0_9 = arith.constant 0 : index
    %c0_10 = arith.constant 0 : index
    %10 = vector.load %arg3[%c0_9, %c0_10] : memref<8x32xf32, #tpu.memory_space<vmem>>, vector<8x32xf32>
    %11 = arith.addf %9, %10 : vector<8x32xf32>
    %12 = arith.truncf %11 : vector<8x32xf32> to vector<8x32xbf16>
    %c0_11 = arith.constant 0 : index
    %c0_12 = arith.constant 0 : index
    %c0_13 = arith.constant 0 : index
    %c0_14 = arith.constant 0 : index
    %13 = vector.load %arg6[%c0_11, %c0_12, %c0_13, %c0_14] : memref<2x4x32x32xbf16, #tpu.memory_space<vmem>>, vector<1x1x32x32xbf16>
    %14 = vector.shape_cast %13 : vector<1x1x32x32xbf16> to vector<32x32xbf16>
    %cst_15 = arith.constant dense<0.000000e+00> : vector<8x32xf32>
    %15 = tpu.matmul %12, %14, %cst_15 {dimension_numbers = #tpu.dot_dimension_numbers<[1], [0], [0], [1], [0, 0, 1, 1], [], []>} : vector<8x32xbf16>, vector<32x32xbf16>, vector<8x32xf32> -> vector<8x32xf32>
    %c0_16 = arith.constant 0 : index
    %c0_17 = arith.constant 0 : index
    %c0_18 = arith.constant 0 : index
    %c0_19 = arith.constant 0 : index
    %16 = vector.load %arg7[%c0_16, %c0_17, %c0_18, %c0_19] : memref<2x4x1x32xf32, #tpu.memory_space<vmem>>, vector<1x1x1x32xf32>
    %17 = vector.shape_cast %16 : vector<1x1x1x32xf32> to vector<1x32xf32>
    %18 = vector.broadcast %17 : vector<1x32xf32> to vector<8x32xf32>
    %19 = arith.addf %15, %18 : vector<8x32xf32>
    %20 = arith.truncf %19 : vector<8x32xf32> to vector<8x32xbf16>
    %cst_20 = arith.constant dense<0.000000e+00> : vector<8x8xf32>
    %21 = tpu.matmul %20, %12, %cst_20 {dimension_numbers = #tpu.dot_dimension_numbers<[1], [1], [0], [0], [0, 0, 1, 0], [], []>} : vector<8x32xbf16>, vector<8x32xbf16>, vector<8x8xf32> -> vector<8x8xf32>
    %22 = vector.broadcast %3 : vector<1x8xf32> to vector<8x8xf32>
    %23 = arith.addf %21, %22 : vector<8x8xf32>
    %cst_21 = arith.constant dense<0xFF800000> : vector<8xf32>
    %24 = vector.multi_reduction <maximumf>, %23, %cst_21 [1] : vector<8x8xf32> to vector<8xf32>
    %25 = vector.shape_cast %24 : vector<8xf32> to vector<8x1xf32>
    %26 = vector.broadcast %25 : vector<8x1xf32> to vector<8x8xf32>
    %27 = arith.subf %23, %26 : vector<8x8xf32>
    %28 = math.exp %27 : vector<8x8xf32>
    %cst_22 = arith.constant dense<0.000000e+00> : vector<8xf32>
    %29 = vector.multi_reduction <add>, %28, %cst_22 [1] : vector<8x8xf32> to vector<8xf32>
    %30 = vector.shape_cast %29 : vector<8xf32> to vector<8x1xf32>
    %31 = tpu.reciprocal %30 {approx = true} : vector<8x1xf32> -> vector<8x1xf32>
    %32 = vector.broadcast %31 : vector<8x1xf32> to vector<8x8xf32>
    %33 = arith.mulf %28, %32 : vector<8x8xf32>
    %34 = arith.truncf %33 : vector<8x8xf32> to vector<8x8xbf16>
    %cst_23 = arith.constant dense<0.000000e+00> : vector<8x32xf32>
    %35 = tpu.matmul %34, %12, %cst_23 {dimension_numbers = #tpu.dot_dimension_numbers<[1], [0], [0], [1], [0, 0, 1, 1], [], []>} : vector<8x8xbf16>, vector<8x32xbf16>, vector<8x32xf32> -> vector<8x32xf32>
    %36 = arith.truncf %35 : vector<8x32xf32> to vector<8x32xbf16>
    %c0_24 = arith.constant 0 : index
    %c0_25 = arith.constant 0 : index
    %c0_26 = arith.constant 0 : index
    %c0_27 = arith.constant 0 : index
    %37 = vector.load %arg8[%c0_24, %c0_25, %c0_26, %c0_27] : memref<2x4x32x32xbf16, #tpu.memory_space<vmem>>, vector<1x1x32x32xbf16>
    %38 = vector.shape_cast %37 : vector<1x1x32x32xbf16> to vector<32x32xbf16>
    %cst_28 = arith.constant dense<0.000000e+00> : vector<8x32xf32>
    %39 = tpu.matmul %36, %38, %cst_28 {dimension_numbers = #tpu.dot_dimension_numbers<[1], [0], [0], [1], [0, 0, 1, 1], [], []>} : vector<8x32xbf16>, vector<32x32xbf16>, vector<8x32xf32> -> vector<8x32xf32>
    %c0_29 = arith.constant 0 : index
    %c1 = arith.constant 1 : index
    %c0_30 = arith.constant 0 : index
    %c0_31 = arith.constant 0 : index
    %40 = vector.load %arg6[%c0_29, %c1, %c0_30, %c0_31] : memref<2x4x32x32xbf16, #tpu.memory_space<vmem>>, vector<1x1x32x32xbf16>
    %41 = vector.shape_cast %40 : vector<1x1x32x32xbf16> to vector<32x32xbf16>
    %cst_32 = arith.constant dense<0.000000e+00> : vector<8x32xf32>
    %42 = tpu.matmul %12, %41, %cst_32 {dimension_numbers = #tpu.dot_dimension_numbers<[1], [0], [0], [1], [0, 0, 1, 1], [], []>} : vector<8x32xbf16>, vector<32x32xbf16>, vector<8x32xf32> -> vector<8x32xf32>
    %c0_33 = arith.constant 0 : index
    %c1_34 = arith.constant 1 : index
    %c0_35 = arith.constant 0 : index
    %c0_36 = arith.constant 0 : index
    %43 = vector.load %arg7[%c0_33, %c1_34, %c0_35, %c0_36] : memref<2x4x1x32xf32, #tpu.memory_space<vmem>>, vector<1x1x1x32xf32>
    %44 = vector.shape_cast %43 : vector<1x1x1x32xf32> to vector<1x32xf32>
    %45 = vector.broadcast %44 : vector<1x32xf32> to vector<8x32xf32>
    %46 = arith.addf %42, %45 : vector<8x32xf32>
    %47 = arith.truncf %46 : vector<8x32xf32> to vector<8x32xbf16>
    %cst_37 = arith.constant dense<0.000000e+00> : vector<8x8xf32>
    %48 = tpu.matmul %47, %12, %cst_37 {dimension_numbers = #tpu.dot_dimension_numbers<[1], [1], [0], [0], [0, 0, 1, 0], [], []>} : vector<8x32xbf16>, vector<8x32xbf16>, vector<8x8xf32> -> vector<8x8xf32>
    %49 = vector.broadcast %3 : vector<1x8xf32> to vector<8x8xf32>
    %50 = arith.addf %48, %49 : vector<8x8xf32>
    %cst_38 = arith.constant dense<0xFF800000> : vector<8xf32>
    %51 = vector.multi_reduction <maximumf>, %50, %cst_38 [1] : vector<8x8xf32> to vector<8xf32>
    %52 = vector.shape_cast %51 : vector<8xf32> to vector<8x1xf32>
    %53 = vector.broadcast %52 : vector<8x1xf32> to vector<8x8xf32>
    %54 = arith.subf %50, %53 : vector<8x8xf32>
    %55 = math.exp %54 : vector<8x8xf32>
    %cst_39 = arith.constant dense<0.000000e+00> : vector<8xf32>
    %56 = vector.multi_reduction <add>, %55, %cst_39 [1] : vector<8x8xf32> to vector<8xf32>
    %57 = vector.shape_cast %56 : vector<8xf32> to vector<8x1xf32>
    %58 = tpu.reciprocal %57 {approx = true} : vector<8x1xf32> -> vector<8x1xf32>
    %59 = vector.broadcast %58 : vector<8x1xf32> to vector<8x8xf32>
    %60 = arith.mulf %55, %59 : vector<8x8xf32>
    %61 = arith.truncf %60 : vector<8x8xf32> to vector<8x8xbf16>
    %cst_40 = arith.constant dense<0.000000e+00> : vector<8x32xf32>
    %62 = tpu.matmul %61, %12, %cst_40 {dimension_numbers = #tpu.dot_dimension_numbers<[1], [0], [0], [1], [0, 0, 1, 1], [], []>} : vector<8x8xbf16>, vector<8x32xbf16>, vector<8x32xf32> -> vector<8x32xf32>
    %63 = arith.truncf %62 : vector<8x32xf32> to vector<8x32xbf16>
    %c0_41 = arith.constant 0 : index
    %c1_42 = arith.constant 1 : index
    %c0_43 = arith.constant 0 : index
    %c0_44 = arith.constant 0 : index
    %64 = vector.load %arg8[%c0_41, %c1_42, %c0_43, %c0_44] : memref<2x4x32x32xbf16, #tpu.memory_space<vmem>>, vector<1x1x32x32xbf16>
    %65 = vector.shape_cast %64 : vector<1x1x32x32xbf16> to vector<32x32xbf16>
    %cst_45 = arith.constant dense<0.000000e+00> : vector<8x32xf32>
    %66 = tpu.matmul %63, %65, %cst_45 {dimension_numbers = #tpu.dot_dimension_numbers<[1], [0], [0], [1], [0, 0, 1, 1], [], []>} : vector<8x32xbf16>, vector<32x32xbf16>, vector<8x32xf32> -> vector<8x32xf32>
    %67 = arith.addf %39, %66 : vector<8x32xf32>
    %c0_46 = arith.constant 0 : index
    %c2 = arith.constant 2 : index
    %c0_47 = arith.constant 0 : index
    %c0_48 = arith.constant 0 : index
    %68 = vector.load %arg6[%c0_46, %c2, %c0_47, %c0_48] : memref<2x4x32x32xbf16, #tpu.memory_space<vmem>>, vector<1x1x32x32xbf16>
    %69 = vector.shape_cast %68 : vector<1x1x32x32xbf16> to vector<32x32xbf16>
    %cst_49 = arith.constant dense<0.000000e+00> : vector<8x32xf32>
    %70 = tpu.matmul %12, %69, %cst_49 {dimension_numbers = #tpu.dot_dimension_numbers<[1], [0], [0], [1], [0, 0, 1, 1], [], []>} : vector<8x32xbf16>, vector<32x32xbf16>, vector<8x32xf32> -> vector<8x32xf32>
    %c0_50 = arith.constant 0 : index
    %c2_51 = arith.constant 2 : index
    %c0_52 = arith.constant 0 : index
    %c0_53 = arith.constant 0 : index
    %71 = vector.load %arg7[%c0_50, %c2_51, %c0_52, %c0_53] : memref<2x4x1x32xf32, #tpu.memory_space<vmem>>, vector<1x1x1x32xf32>
    %72 = vector.shape_cast %71 : vector<1x1x1x32xf32> to vector<1x32xf32>
    %73 = vector.broadcast %72 : vector<1x32xf32> to vector<8x32xf32>
    %74 = arith.addf %70, %73 : vector<8x32xf32>
    %75 = arith.truncf %74 : vector<8x32xf32> to vector<8x32xbf16>
    %cst_54 = arith.constant dense<0.000000e+00> : vector<8x8xf32>
    %76 = tpu.matmul %75, %12, %cst_54 {dimension_numbers = #tpu.dot_dimension_numbers<[1], [1], [0], [0], [0, 0, 1, 0], [], []>} : vector<8x32xbf16>, vector<8x32xbf16>, vector<8x8xf32> -> vector<8x8xf32>
    %77 = vector.broadcast %3 : vector<1x8xf32> to vector<8x8xf32>
    %78 = arith.addf %76, %77 : vector<8x8xf32>
    %cst_55 = arith.constant dense<0xFF800000> : vector<8xf32>
    %79 = vector.multi_reduction <maximumf>, %78, %cst_55 [1] : vector<8x8xf32> to vector<8xf32>
    %80 = vector.shape_cast %79 : vector<8xf32> to vector<8x1xf32>
    %81 = vector.broadcast %80 : vector<8x1xf32> to vector<8x8xf32>
    %82 = arith.subf %78, %81 : vector<8x8xf32>
    %83 = math.exp %82 : vector<8x8xf32>
    %cst_56 = arith.constant dense<0.000000e+00> : vector<8xf32>
    %84 = vector.multi_reduction <add>, %83, %cst_56 [1] : vector<8x8xf32> to vector<8xf32>
    %85 = vector.shape_cast %84 : vector<8xf32> to vector<8x1xf32>
    %86 = tpu.reciprocal %85 {approx = true} : vector<8x1xf32> -> vector<8x1xf32>
    %87 = vector.broadcast %86 : vector<8x1xf32> to vector<8x8xf32>
    %88 = arith.mulf %83, %87 : vector<8x8xf32>
    %89 = arith.truncf %88 : vector<8x8xf32> to vector<8x8xbf16>
    %cst_57 = arith.constant dense<0.000000e+00> : vector<8x32xf32>
    %90 = tpu.matmul %89, %12, %cst_57 {dimension_numbers = #tpu.dot_dimension_numbers<[1], [0], [0], [1], [0, 0, 1, 1], [], []>} : vector<8x8xbf16>, vector<8x32xbf16>, vector<8x32xf32> -> vector<8x32xf32>
    %91 = arith.truncf %90 : vector<8x32xf32> to vector<8x32xbf16>
    %c0_58 = arith.constant 0 : index
    %c2_59 = arith.constant 2 : index
    %c0_60 = arith.constant 0 : index
    %c0_61 = arith.constant 0 : index
    %92 = vector.load %arg8[%c0_58, %c2_59, %c0_60, %c0_61] : memref<2x4x32x32xbf16, #tpu.memory_space<vmem>>, vector<1x1x32x32xbf16>
    %93 = vector.shape_cast %92 : vector<1x1x32x32xbf16> to vector<32x32xbf16>
    %cst_62 = arith.constant dense<0.000000e+00> : vector<8x32xf32>
    %94 = tpu.matmul %91, %93, %cst_62 {dimension_numbers = #tpu.dot_dimension_numbers<[1], [0], [0], [1], [0, 0, 1, 1], [], []>} : vector<8x32xbf16>, vector<32x32xbf16>, vector<8x32xf32> -> vector<8x32xf32>
    %95 = arith.addf %67, %94 : vector<8x32xf32>
    %c0_63 = arith.constant 0 : index
    %c3 = arith.constant 3 : index
    %c0_64 = arith.constant 0 : index
    %c0_65 = arith.constant 0 : index
    %96 = vector.load %arg6[%c0_63, %c3, %c0_64, %c0_65] : memref<2x4x32x32xbf16, #tpu.memory_space<vmem>>, vector<1x1x32x32xbf16>
    %97 = vector.shape_cast %96 : vector<1x1x32x32xbf16> to vector<32x32xbf16>
    %cst_66 = arith.constant dense<0.000000e+00> : vector<8x32xf32>
    %98 = tpu.matmul %12, %97, %cst_66 {dimension_numbers = #tpu.dot_dimension_numbers<[1], [0], [0], [1], [0, 0, 1, 1], [], []>} : vector<8x32xbf16>, vector<32x32xbf16>, vector<8x32xf32> -> vector<8x32xf32>
    %c0_67 = arith.constant 0 : index
    %c3_68 = arith.constant 3 : index
    %c0_69 = arith.constant 0 : index
    %c0_70 = arith.constant 0 : index
    %99 = vector.load %arg7[%c0_67, %c3_68, %c0_69, %c0_70] : memref<2x4x1x32xf32, #tpu.memory_space<vmem>>, vector<1x1x1x32xf32>
    %100 = vector.shape_cast %99 : vector<1x1x1x32xf32> to vector<1x32xf32>
    %101 = vector.broadcast %100 : vector<1x32xf32> to vector<8x32xf32>
    %102 = arith.addf %98, %101 : vector<8x32xf32>
    %103 = arith.truncf %102 : vector<8x32xf32> to vector<8x32xbf16>
    %cst_71 = arith.constant dense<0.000000e+00> : vector<8x8xf32>
    %104 = tpu.matmul %103, %12, %cst_71 {dimension_numbers = #tpu.dot_dimension_numbers<[1], [1], [0], [0], [0, 0, 1, 0], [], []>} : vector<8x32xbf16>, vector<8x32xbf16>, vector<8x8xf32> -> vector<8x8xf32>
    %105 = vector.broadcast %3 : vector<1x8xf32> to vector<8x8xf32>
    %106 = arith.addf %104, %105 : vector<8x8xf32>
    %cst_72 = arith.constant dense<0xFF800000> : vector<8xf32>
    %107 = vector.multi_reduction <maximumf>, %106, %cst_72 [1] : vector<8x8xf32> to vector<8xf32>
    %108 = vector.shape_cast %107 : vector<8xf32> to vector<8x1xf32>
    %109 = vector.broadcast %108 : vector<8x1xf32> to vector<8x8xf32>
    %110 = arith.subf %106, %109 : vector<8x8xf32>
    %111 = math.exp %110 : vector<8x8xf32>
    %cst_73 = arith.constant dense<0.000000e+00> : vector<8xf32>
    %112 = vector.multi_reduction <add>, %111, %cst_73 [1] : vector<8x8xf32> to vector<8xf32>
    %113 = vector.shape_cast %112 : vector<8xf32> to vector<8x1xf32>
    %114 = tpu.reciprocal %113 {approx = true} : vector<8x1xf32> -> vector<8x1xf32>
    %115 = vector.broadcast %114 : vector<8x1xf32> to vector<8x8xf32>
    %116 = arith.mulf %111, %115 : vector<8x8xf32>
    %117 = arith.truncf %116 : vector<8x8xf32> to vector<8x8xbf16>
    %cst_74 = arith.constant dense<0.000000e+00> : vector<8x32xf32>
    %118 = tpu.matmul %117, %12, %cst_74 {dimension_numbers = #tpu.dot_dimension_numbers<[1], [0], [0], [1], [0, 0, 1, 1], [], []>} : vector<8x8xbf16>, vector<8x32xbf16>, vector<8x32xf32> -> vector<8x32xf32>
    %119 = arith.truncf %118 : vector<8x32xf32> to vector<8x32xbf16>
    %c0_75 = arith.constant 0 : index
    %c3_76 = arith.constant 3 : index
    %c0_77 = arith.constant 0 : index
    %c0_78 = arith.constant 0 : index
    %120 = vector.load %arg8[%c0_75, %c3_76, %c0_77, %c0_78] : memref<2x4x32x32xbf16, #tpu.memory_space<vmem>>, vector<1x1x32x32xbf16>
    %121 = vector.shape_cast %120 : vector<1x1x32x32xbf16> to vector<32x32xbf16>
    %cst_79 = arith.constant dense<0.000000e+00> : vector<8x32xf32>
    %122 = tpu.matmul %119, %121, %cst_79 {dimension_numbers = #tpu.dot_dimension_numbers<[1], [0], [0], [1], [0, 0, 1, 1], [], []>} : vector<8x32xbf16>, vector<32x32xbf16>, vector<8x32xf32> -> vector<8x32xf32>
    %123 = arith.addf %95, %122 : vector<8x32xf32>
    %c0_80 = arith.constant 0 : index
    %c0_81 = arith.constant 0 : index
    %c0_82 = arith.constant 0 : index
    %124 = vector.load %arg9[%c0_80, %c0_81, %c0_82] : memref<2x1x32xf32, #tpu.memory_space<vmem>>, vector<1x1x32xf32>
    %125 = vector.shape_cast %124 : vector<1x1x32xf32> to vector<1x32xf32>
    %126 = vector.broadcast %125 : vector<1x32xf32> to vector<8x32xf32>
    %127 = arith.addf %123, %126 : vector<8x32xf32>
    %128 = arith.addf %11, %127 : vector<8x32xf32>
    %c0_83 = arith.constant 0 : index
    %c0_84 = arith.constant 0 : index
    %c0_85 = arith.constant 0 : index
    %129 = vector.load %arg10[%c0_83, %c0_84, %c0_85] : memref<2x1x32xf32, #tpu.memory_space<vmem>>, vector<1x1x32xf32>
    %130 = vector.shape_cast %129 : vector<1x1x32xf32> to vector<1x32xf32>
    %c0_86 = arith.constant 0 : index
    %c0_87 = arith.constant 0 : index
    %c0_88 = arith.constant 0 : index
    %131 = vector.load %arg11[%c0_86, %c0_87, %c0_88] : memref<2x1x32xf32, #tpu.memory_space<vmem>>, vector<1x1x32xf32>
    %132 = vector.shape_cast %131 : vector<1x1x32xf32> to vector<1x32xf32>
    %cst_89 = arith.constant dense<0.000000e+00> : vector<8xf32>
    %133 = vector.multi_reduction <add>, %128, %cst_89 [1] : vector<8x32xf32> to vector<8xf32>
    %134 = vector.shape_cast %133 : vector<8xf32> to vector<8x1xf32>
    %cst_90 = arith.constant 3.200000e+01 : f32
    %135 = vector.broadcast %cst_90 : f32 to vector<8x1xf32>
    %136 = arith.divf %134, %135 : vector<8x1xf32>
    %137 = vector.broadcast %136 : vector<8x1xf32> to vector<8x32xf32>
    %138 = arith.subf %128, %137 : vector<8x32xf32>
    %139 = arith.mulf %138, %138 : vector<8x32xf32>
    %cst_91 = arith.constant dense<0.000000e+00> : vector<8xf32>
    %140 = vector.multi_reduction <add>, %139, %cst_91 [1] : vector<8x32xf32> to vector<8xf32>
    %141 = vector.shape_cast %140 : vector<8xf32> to vector<8x1xf32>
    %cst_92 = arith.constant 3.200000e+01 : f32
    %142 = vector.broadcast %cst_92 : f32 to vector<8x1xf32>
    %143 = arith.divf %141, %142 : vector<8x1xf32>
    %144 = vector.broadcast %136 : vector<8x1xf32> to vector<8x32xf32>
    %145 = arith.subf %128, %144 : vector<8x32xf32>
    %cst_93 = arith.constant 9.99999974E-6 : f32
    %146 = vector.broadcast %cst_93 : f32 to vector<8x1xf32>
    %147 = arith.addf %143, %146 : vector<8x1xf32>
    %148 = math.rsqrt %147 : vector<8x1xf32>
    %149 = vector.broadcast %148 : vector<8x1xf32> to vector<8x32xf32>
    %150 = arith.mulf %145, %149 : vector<8x32xf32>
    %151 = vector.broadcast %130 : vector<1x32xf32> to vector<8x32xf32>
    %152 = arith.mulf %150, %151 : vector<8x32xf32>
    %153 = vector.broadcast %132 : vector<1x32xf32> to vector<8x32xf32>
    %154 = arith.addf %152, %153 : vector<8x32xf32>
    %155 = arith.truncf %154 : vector<8x32xf32> to vector<8x32xbf16>
    %c0_94 = arith.constant 0 : index
    %c0_95 = arith.constant 0 : index
    %c0_96 = arith.constant 0 : index
    %156 = vector.load %arg12[%c0_94, %c0_95, %c0_96] : memref<2x32x64xbf16, #tpu.memory_space<vmem>>, vector<1x32x64xbf16>
    %157 = vector.shape_cast %156 : vector<1x32x64xbf16> to vector<32x64xbf16>
    %cst_97 = arith.constant dense<0.000000e+00> : vector<8x64xf32>
    %158 = tpu.matmul %155, %157, %cst_97 {dimension_numbers = #tpu.dot_dimension_numbers<[1], [0], [0], [1], [0, 0, 1, 1], [], []>} : vector<8x32xbf16>, vector<32x64xbf16>, vector<8x64xf32> -> vector<8x64xf32>
    %c0_98 = arith.constant 0 : index
    %c0_99 = arith.constant 0 : index
    %c0_100 = arith.constant 0 : index
    %159 = vector.load %arg13[%c0_98, %c0_99, %c0_100] : memref<2x1x64xf32, #tpu.memory_space<vmem>>, vector<1x1x64xf32>
    %160 = vector.shape_cast %159 : vector<1x1x64xf32> to vector<1x64xf32>
    %161 = vector.broadcast %160 : vector<1x64xf32> to vector<8x64xf32>
    %162 = arith.addf %158, %161 : vector<8x64xf32>
    %cst_101 = arith.constant 0.000000e+00 : f32
    %163 = vector.broadcast %cst_101 : f32 to vector<8x64xf32>
    %164 = arith.maximumf %162, %163 : vector<8x64xf32>
    %165 = arith.truncf %164 : vector<8x64xf32> to vector<8x64xbf16>
    %c0_102 = arith.constant 0 : index
    %c0_103 = arith.constant 0 : index
    %c0_104 = arith.constant 0 : index
    %166 = vector.load %arg14[%c0_102, %c0_103, %c0_104] : memref<2x64x32xbf16, #tpu.memory_space<vmem>>, vector<1x64x32xbf16>
    %167 = vector.shape_cast %166 : vector<1x64x32xbf16> to vector<64x32xbf16>
    %cst_105 = arith.constant dense<0.000000e+00> : vector<8x32xf32>
    %168 = tpu.matmul %165, %167, %cst_105 {dimension_numbers = #tpu.dot_dimension_numbers<[1], [0], [0], [1], [0, 0, 1, 1], [], []>} : vector<8x64xbf16>, vector<64x32xbf16>, vector<8x32xf32> -> vector<8x32xf32>
    %c0_106 = arith.constant 0 : index
    %c0_107 = arith.constant 0 : index
    %c0_108 = arith.constant 0 : index
    %169 = vector.load %arg15[%c0_106, %c0_107, %c0_108] : memref<2x1x32xf32, #tpu.memory_space<vmem>>, vector<1x1x32xf32>
    %170 = vector.shape_cast %169 : vector<1x1x32xf32> to vector<1x32xf32>
    %171 = vector.broadcast %170 : vector<1x32xf32> to vector<8x32xf32>
    %172 = arith.addf %168, %171 : vector<8x32xf32>
    %173 = arith.addf %154, %172 : vector<8x32xf32>
    %c0_109 = arith.constant 0 : index
    %c0_110 = arith.constant 0 : index
    %c0_111 = arith.constant 0 : index
    %174 = vector.load %arg16[%c0_109, %c0_110, %c0_111] : memref<2x1x32xf32, #tpu.memory_space<vmem>>, vector<1x1x32xf32>
    %175 = vector.shape_cast %174 : vector<1x1x32xf32> to vector<1x32xf32>
    %c0_112 = arith.constant 0 : index
    %c0_113 = arith.constant 0 : index
    %c0_114 = arith.constant 0 : index
    %176 = vector.load %arg17[%c0_112, %c0_113, %c0_114] : memref<2x1x32xf32, #tpu.memory_space<vmem>>, vector<1x1x32xf32>
    %177 = vector.shape_cast %176 : vector<1x1x32xf32> to vector<1x32xf32>
    %cst_115 = arith.constant dense<0.000000e+00> : vector<8xf32>
    %178 = vector.multi_reduction <add>, %173, %cst_115 [1] : vector<8x32xf32> to vector<8xf32>
    %179 = vector.shape_cast %178 : vector<8xf32> to vector<8x1xf32>
    %cst_116 = arith.constant 3.200000e+01 : f32
    %180 = vector.broadcast %cst_116 : f32 to vector<8x1xf32>
    %181 = arith.divf %179, %180 : vector<8x1xf32>
    %182 = vector.broadcast %181 : vector<8x1xf32> to vector<8x32xf32>
    %183 = arith.subf %173, %182 : vector<8x32xf32>
    %184 = arith.mulf %183, %183 : vector<8x32xf32>
    %cst_117 = arith.constant dense<0.000000e+00> : vector<8xf32>
    %185 = vector.multi_reduction <add>, %184, %cst_117 [1] : vector<8x32xf32> to vector<8xf32>
    %186 = vector.shape_cast %185 : vector<8xf32> to vector<8x1xf32>
    %cst_118 = arith.constant 3.200000e+01 : f32
    %187 = vector.broadcast %cst_118 : f32 to vector<8x1xf32>
    %188 = arith.divf %186, %187 : vector<8x1xf32>
    %189 = vector.broadcast %181 : vector<8x1xf32> to vector<8x32xf32>
    %190 = arith.subf %173, %189 : vector<8x32xf32>
    %cst_119 = arith.constant 9.99999974E-6 : f32
    %191 = vector.broadcast %cst_119 : f32 to vector<8x1xf32>
    %192 = arith.addf %188, %191 : vector<8x1xf32>
    %193 = math.rsqrt %192 : vector<8x1xf32>
    %194 = vector.broadcast %193 : vector<8x1xf32> to vector<8x32xf32>
    %195 = arith.mulf %190, %194 : vector<8x32xf32>
    %196 = vector.broadcast %175 : vector<1x32xf32> to vector<8x32xf32>
    %197 = arith.mulf %195, %196 : vector<8x32xf32>
    %198 = vector.broadcast %177 : vector<1x32xf32> to vector<8x32xf32>
    %199 = arith.addf %197, %198 : vector<8x32xf32>
    %200 = arith.truncf %199 : vector<8x32xf32> to vector<8x32xbf16>
    %c1_120 = arith.constant 1 : index
    %c0_121 = arith.constant 0 : index
    %c0_122 = arith.constant 0 : index
    %c0_123 = arith.constant 0 : index
    %201 = vector.load %arg6[%c1_120, %c0_121, %c0_122, %c0_123] : memref<2x4x32x32xbf16, #tpu.memory_space<vmem>>, vector<1x1x32x32xbf16>
    %202 = vector.shape_cast %201 : vector<1x1x32x32xbf16> to vector<32x32xbf16>
    %cst_124 = arith.constant dense<0.000000e+00> : vector<8x32xf32>
    %203 = tpu.matmul %200, %202, %cst_124 {dimension_numbers = #tpu.dot_dimension_numbers<[1], [0], [0], [1], [0, 0, 1, 1], [], []>} : vector<8x32xbf16>, vector<32x32xbf16>, vector<8x32xf32> -> vector<8x32xf32>
    %c1_125 = arith.constant 1 : index
    %c0_126 = arith.constant 0 : index
    %c0_127 = arith.constant 0 : index
    %c0_128 = arith.constant 0 : index
    %204 = vector.load %arg7[%c1_125, %c0_126, %c0_127, %c0_128] : memref<2x4x1x32xf32, #tpu.memory_space<vmem>>, vector<1x1x1x32xf32>
    %205 = vector.shape_cast %204 : vector<1x1x1x32xf32> to vector<1x32xf32>
    %206 = vector.broadcast %205 : vector<1x32xf32> to vector<8x32xf32>
    %207 = arith.addf %203, %206 : vector<8x32xf32>
    %208 = arith.truncf %207 : vector<8x32xf32> to vector<8x32xbf16>
    %cst_129 = arith.constant dense<0.000000e+00> : vector<8x8xf32>
    %209 = tpu.matmul %208, %200, %cst_129 {dimension_numbers = #tpu.dot_dimension_numbers<[1], [1], [0], [0], [0, 0, 1, 0], [], []>} : vector<8x32xbf16>, vector<8x32xbf16>, vector<8x8xf32> -> vector<8x8xf32>
    %210 = vector.broadcast %3 : vector<1x8xf32> to vector<8x8xf32>
    %211 = arith.addf %209, %210 : vector<8x8xf32>
    %cst_130 = arith.constant dense<0xFF800000> : vector<8xf32>
    %212 = vector.multi_reduction <maximumf>, %211, %cst_130 [1] : vector<8x8xf32> to vector<8xf32>
    %213 = vector.shape_cast %212 : vector<8xf32> to vector<8x1xf32>
    %214 = vector.broadcast %213 : vector<8x1xf32> to vector<8x8xf32>
    %215 = arith.subf %211, %214 : vector<8x8xf32>
    %216 = math.exp %215 : vector<8x8xf32>
    %cst_131 = arith.constant dense<0.000000e+00> : vector<8xf32>
    %217 = vector.multi_reduction <add>, %216, %cst_131 [1] : vector<8x8xf32> to vector<8xf32>
    %218 = vector.shape_cast %217 : vector<8xf32> to vector<8x1xf32>
    %219 = tpu.reciprocal %218 {approx = true} : vector<8x1xf32> -> vector<8x1xf32>
    %220 = vector.broadcast %219 : vector<8x1xf32> to vector<8x8xf32>
    %221 = arith.mulf %216, %220 : vector<8x8xf32>
    %222 = arith.truncf %221 : vector<8x8xf32> to vector<8x8xbf16>
    %cst_132 = arith.constant dense<0.000000e+00> : vector<8x32xf32>
    %223 = tpu.matmul %222, %200, %cst_132 {dimension_numbers = #tpu.dot_dimension_numbers<[1], [0], [0], [1], [0, 0, 1, 1], [], []>} : vector<8x8xbf16>, vector<8x32xbf16>, vector<8x32xf32> -> vector<8x32xf32>
    %224 = arith.truncf %223 : vector<8x32xf32> to vector<8x32xbf16>
    %c1_133 = arith.constant 1 : index
    %c0_134 = arith.constant 0 : index
    %c0_135 = arith.constant 0 : index
    %c0_136 = arith.constant 0 : index
    %225 = vector.load %arg8[%c1_133, %c0_134, %c0_135, %c0_136] : memref<2x4x32x32xbf16, #tpu.memory_space<vmem>>, vector<1x1x32x32xbf16>
    %226 = vector.shape_cast %225 : vector<1x1x32x32xbf16> to vector<32x32xbf16>
    %cst_137 = arith.constant dense<0.000000e+00> : vector<8x32xf32>
    %227 = tpu.matmul %224, %226, %cst_137 {dimension_numbers = #tpu.dot_dimension_numbers<[1], [0], [0], [1], [0, 0, 1, 1], [], []>} : vector<8x32xbf16>, vector<32x32xbf16>, vector<8x32xf32> -> vector<8x32xf32>
    %c1_138 = arith.constant 1 : index
    %c1_139 = arith.constant 1 : index
    %c0_140 = arith.constant 0 : index
    %c0_141 = arith.constant 0 : index
    %228 = vector.load %arg6[%c1_138, %c1_139, %c0_140, %c0_141] : memref<2x4x32x32xbf16, #tpu.memory_space<vmem>>, vector<1x1x32x32xbf16>
    %229 = vector.shape_cast %228 : vector<1x1x32x32xbf16> to vector<32x32xbf16>
    %cst_142 = arith.constant dense<0.000000e+00> : vector<8x32xf32>
    %230 = tpu.matmul %200, %229, %cst_142 {dimension_numbers = #tpu.dot_dimension_numbers<[1], [0], [0], [1], [0, 0, 1, 1], [], []>} : vector<8x32xbf16>, vector<32x32xbf16>, vector<8x32xf32> -> vector<8x32xf32>
    %c1_143 = arith.constant 1 : index
    %c1_144 = arith.constant 1 : index
    %c0_145 = arith.constant 0 : index
    %c0_146 = arith.constant 0 : index
    %231 = vector.load %arg7[%c1_143, %c1_144, %c0_145, %c0_146] : memref<2x4x1x32xf32, #tpu.memory_space<vmem>>, vector<1x1x1x32xf32>
    %232 = vector.shape_cast %231 : vector<1x1x1x32xf32> to vector<1x32xf32>
    %233 = vector.broadcast %232 : vector<1x32xf32> to vector<8x32xf32>
    %234 = arith.addf %230, %233 : vector<8x32xf32>
    %235 = arith.truncf %234 : vector<8x32xf32> to vector<8x32xbf16>
    %cst_147 = arith.constant dense<0.000000e+00> : vector<8x8xf32>
    %236 = tpu.matmul %235, %200, %cst_147 {dimension_numbers = #tpu.dot_dimension_numbers<[1], [1], [0], [0], [0, 0, 1, 0], [], []>} : vector<8x32xbf16>, vector<8x32xbf16>, vector<8x8xf32> -> vector<8x8xf32>
    %237 = vector.broadcast %3 : vector<1x8xf32> to vector<8x8xf32>
    %238 = arith.addf %236, %237 : vector<8x8xf32>
    %cst_148 = arith.constant dense<0xFF800000> : vector<8xf32>
    %239 = vector.multi_reduction <maximumf>, %238, %cst_148 [1] : vector<8x8xf32> to vector<8xf32>
    %240 = vector.shape_cast %239 : vector<8xf32> to vector<8x1xf32>
    %241 = vector.broadcast %240 : vector<8x1xf32> to vector<8x8xf32>
    %242 = arith.subf %238, %241 : vector<8x8xf32>
    %243 = math.exp %242 : vector<8x8xf32>
    %cst_149 = arith.constant dense<0.000000e+00> : vector<8xf32>
    %244 = vector.multi_reduction <add>, %243, %cst_149 [1] : vector<8x8xf32> to vector<8xf32>
    %245 = vector.shape_cast %244 : vector<8xf32> to vector<8x1xf32>
    %246 = tpu.reciprocal %245 {approx = true} : vector<8x1xf32> -> vector<8x1xf32>
    %247 = vector.broadcast %246 : vector<8x1xf32> to vector<8x8xf32>
    %248 = arith.mulf %243, %247 : vector<8x8xf32>
    %249 = arith.truncf %248 : vector<8x8xf32> to vector<8x8xbf16>
    %cst_150 = arith.constant dense<0.000000e+00> : vector<8x32xf32>
    %250 = tpu.matmul %249, %200, %cst_150 {dimension_numbers = #tpu.dot_dimension_numbers<[1], [0], [0], [1], [0, 0, 1, 1], [], []>} : vector<8x8xbf16>, vector<8x32xbf16>, vector<8x32xf32> -> vector<8x32xf32>
    %251 = arith.truncf %250 : vector<8x32xf32> to vector<8x32xbf16>
    %c1_151 = arith.constant 1 : index
    %c1_152 = arith.constant 1 : index
    %c0_153 = arith.constant 0 : index
    %c0_154 = arith.constant 0 : index
    %252 = vector.load %arg8[%c1_151, %c1_152, %c0_153, %c0_154] : memref<2x4x32x32xbf16, #tpu.memory_space<vmem>>, vector<1x1x32x32xbf16>
    %253 = vector.shape_cast %252 : vector<1x1x32x32xbf16> to vector<32x32xbf16>
    %cst_155 = arith.constant dense<0.000000e+00> : vector<8x32xf32>
    %254 = tpu.matmul %251, %253, %cst_155 {dimension_numbers = #tpu.dot_dimension_numbers<[1], [0], [0], [1], [0, 0, 1, 1], [], []>} : vector<8x32xbf16>, vector<32x32xbf16>, vector<8x32xf32> -> vector<8x32xf32>
    %255 = arith.addf %227, %254 : vector<8x32xf32>
    %c1_156 = arith.constant 1 : index
    %c2_157 = arith.constant 2 : index
    %c0_158 = arith.constant 0 : index
    %c0_159 = arith.constant 0 : index
    %256 = vector.load %arg6[%c1_156, %c2_157, %c0_158, %c0_159] : memref<2x4x32x32xbf16, #tpu.memory_space<vmem>>, vector<1x1x32x32xbf16>
    %257 = vector.shape_cast %256 : vector<1x1x32x32xbf16> to vector<32x32xbf16>
    %cst_160 = arith.constant dense<0.000000e+00> : vector<8x32xf32>
    %258 = tpu.matmul %200, %257, %cst_160 {dimension_numbers = #tpu.dot_dimension_numbers<[1], [0], [0], [1], [0, 0, 1, 1], [], []>} : vector<8x32xbf16>, vector<32x32xbf16>, vector<8x32xf32> -> vector<8x32xf32>
    %c1_161 = arith.constant 1 : index
    %c2_162 = arith.constant 2 : index
    %c0_163 = arith.constant 0 : index
    %c0_164 = arith.constant 0 : index
    %259 = vector.load %arg7[%c1_161, %c2_162, %c0_163, %c0_164] : memref<2x4x1x32xf32, #tpu.memory_space<vmem>>, vector<1x1x1x32xf32>
    %260 = vector.shape_cast %259 : vector<1x1x1x32xf32> to vector<1x32xf32>
    %261 = vector.broadcast %260 : vector<1x32xf32> to vector<8x32xf32>
    %262 = arith.addf %258, %261 : vector<8x32xf32>
    %263 = arith.truncf %262 : vector<8x32xf32> to vector<8x32xbf16>
    %cst_165 = arith.constant dense<0.000000e+00> : vector<8x8xf32>
    %264 = tpu.matmul %263, %200, %cst_165 {dimension_numbers = #tpu.dot_dimension_numbers<[1], [1], [0], [0], [0, 0, 1, 0], [], []>} : vector<8x32xbf16>, vector<8x32xbf16>, vector<8x8xf32> -> vector<8x8xf32>
    %265 = vector.broadcast %3 : vector<1x8xf32> to vector<8x8xf32>
    %266 = arith.addf %264, %265 : vector<8x8xf32>
    %cst_166 = arith.constant dense<0xFF800000> : vector<8xf32>
    %267 = vector.multi_reduction <maximumf>, %266, %cst_166 [1] : vector<8x8xf32> to vector<8xf32>
    %268 = vector.shape_cast %267 : vector<8xf32> to vector<8x1xf32>
    %269 = vector.broadcast %268 : vector<8x1xf32> to vector<8x8xf32>
    %270 = arith.subf %266, %269 : vector<8x8xf32>
    %271 = math.exp %270 : vector<8x8xf32>
    %cst_167 = arith.constant dense<0.000000e+00> : vector<8xf32>
    %272 = vector.multi_reduction <add>, %271, %cst_167 [1] : vector<8x8xf32> to vector<8xf32>
    %273 = vector.shape_cast %272 : vector<8xf32> to vector<8x1xf32>
    %274 = tpu.reciprocal %273 {approx = true} : vector<8x1xf32> -> vector<8x1xf32>
    %275 = vector.broadcast %274 : vector<8x1xf32> to vector<8x8xf32>
    %276 = arith.mulf %271, %275 : vector<8x8xf32>
    %277 = arith.truncf %276 : vector<8x8xf32> to vector<8x8xbf16>
    %cst_168 = arith.constant dense<0.000000e+00> : vector<8x32xf32>
    %278 = tpu.matmul %277, %200, %cst_168 {dimension_numbers = #tpu.dot_dimension_numbers<[1], [0], [0], [1], [0, 0, 1, 1], [], []>} : vector<8x8xbf16>, vector<8x32xbf16>, vector<8x32xf32> -> vector<8x32xf32>
    %279 = arith.truncf %278 : vector<8x32xf32> to vector<8x32xbf16>
    %c1_169 = arith.constant 1 : index
    %c2_170 = arith.constant 2 : index
    %c0_171 = arith.constant 0 : index
    %c0_172 = arith.constant 0 : index
    %280 = vector.load %arg8[%c1_169, %c2_170, %c0_171, %c0_172] : memref<2x4x32x32xbf16, #tpu.memory_space<vmem>>, vector<1x1x32x32xbf16>
    %281 = vector.shape_cast %280 : vector<1x1x32x32xbf16> to vector<32x32xbf16>
    %cst_173 = arith.constant dense<0.000000e+00> : vector<8x32xf32>
    %282 = tpu.matmul %279, %281, %cst_173 {dimension_numbers = #tpu.dot_dimension_numbers<[1], [0], [0], [1], [0, 0, 1, 1], [], []>} : vector<8x32xbf16>, vector<32x32xbf16>, vector<8x32xf32> -> vector<8x32xf32>
    %283 = arith.addf %255, %282 : vector<8x32xf32>
    %c1_174 = arith.constant 1 : index
    %c3_175 = arith.constant 3 : index
    %c0_176 = arith.constant 0 : index
    %c0_177 = arith.constant 0 : index
    %284 = vector.load %arg6[%c1_174, %c3_175, %c0_176, %c0_177] : memref<2x4x32x32xbf16, #tpu.memory_space<vmem>>, vector<1x1x32x32xbf16>
    %285 = vector.shape_cast %284 : vector<1x1x32x32xbf16> to vector<32x32xbf16>
    %cst_178 = arith.constant dense<0.000000e+00> : vector<8x32xf32>
    %286 = tpu.matmul %200, %285, %cst_178 {dimension_numbers = #tpu.dot_dimension_numbers<[1], [0], [0], [1], [0, 0, 1, 1], [], []>} : vector<8x32xbf16>, vector<32x32xbf16>, vector<8x32xf32> -> vector<8x32xf32>
    %c1_179 = arith.constant 1 : index
    %c3_180 = arith.constant 3 : index
    %c0_181 = arith.constant 0 : index
    %c0_182 = arith.constant 0 : index
    %287 = vector.load %arg7[%c1_179, %c3_180, %c0_181, %c0_182] : memref<2x4x1x32xf32, #tpu.memory_space<vmem>>, vector<1x1x1x32xf32>
    %288 = vector.shape_cast %287 : vector<1x1x1x32xf32> to vector<1x32xf32>
    %289 = vector.broadcast %288 : vector<1x32xf32> to vector<8x32xf32>
    %290 = arith.addf %286, %289 : vector<8x32xf32>
    %291 = arith.truncf %290 : vector<8x32xf32> to vector<8x32xbf16>
    %cst_183 = arith.constant dense<0.000000e+00> : vector<8x8xf32>
    %292 = tpu.matmul %291, %200, %cst_183 {dimension_numbers = #tpu.dot_dimension_numbers<[1], [1], [0], [0], [0, 0, 1, 0], [], []>} : vector<8x32xbf16>, vector<8x32xbf16>, vector<8x8xf32> -> vector<8x8xf32>
    %293 = vector.broadcast %3 : vector<1x8xf32> to vector<8x8xf32>
    %294 = arith.addf %292, %293 : vector<8x8xf32>
    %cst_184 = arith.constant dense<0xFF800000> : vector<8xf32>
    %295 = vector.multi_reduction <maximumf>, %294, %cst_184 [1] : vector<8x8xf32> to vector<8xf32>
    %296 = vector.shape_cast %295 : vector<8xf32> to vector<8x1xf32>
    %297 = vector.broadcast %296 : vector<8x1xf32> to vector<8x8xf32>
    %298 = arith.subf %294, %297 : vector<8x8xf32>
    %299 = math.exp %298 : vector<8x8xf32>
    %cst_185 = arith.constant dense<0.000000e+00> : vector<8xf32>
    %300 = vector.multi_reduction <add>, %299, %cst_185 [1] : vector<8x8xf32> to vector<8xf32>
    %301 = vector.shape_cast %300 : vector<8xf32> to vector<8x1xf32>
    %302 = tpu.reciprocal %301 {approx = true} : vector<8x1xf32> -> vector<8x1xf32>
    %303 = vector.broadcast %302 : vector<8x1xf32> to vector<8x8xf32>
    %304 = arith.mulf %299, %303 : vector<8x8xf32>
    %305 = arith.truncf %304 : vector<8x8xf32> to vector<8x8xbf16>
    %cst_186 = arith.constant dense<0.000000e+00> : vector<8x32xf32>
    %306 = tpu.matmul %305, %200, %cst_186 {dimension_numbers = #tpu.dot_dimension_numbers<[1], [0], [0], [1], [0, 0, 1, 1], [], []>} : vector<8x8xbf16>, vector<8x32xbf16>, vector<8x32xf32> -> vector<8x32xf32>
    %307 = arith.truncf %306 : vector<8x32xf32> to vector<8x32xbf16>
    %c1_187 = arith.constant 1 : index
    %c3_188 = arith.constant 3 : index
    %c0_189 = arith.constant 0 : index
    %c0_190 = arith.constant 0 : index
    %308 = vector.load %arg8[%c1_187, %c3_188, %c0_189, %c0_190] : memref<2x4x32x32xbf16, #tpu.memory_space<vmem>>, vector<1x1x32x32xbf16>
    %309 = vector.shape_cast %308 : vector<1x1x32x32xbf16> to vector<32x32xbf16>
    %cst_191 = arith.constant dense<0.000000e+00> : vector<8x32xf32>
    %310 = tpu.matmul %307, %309, %cst_191 {dimension_numbers = #tpu.dot_dimension_numbers<[1], [0], [0], [1], [0, 0, 1, 1], [], []>} : vector<8x32xbf16>, vector<32x32xbf16>, vector<8x32xf32> -> vector<8x32xf32>
    %311 = arith.addf %283, %310 : vector<8x32xf32>
    %c1_192 = arith.constant 1 : index
    %c0_193 = arith.constant 0 : index
    %c0_194 = arith.constant 0 : index
    %312 = vector.load %arg9[%c1_192, %c0_193, %c0_194] : memref<2x1x32xf32, #tpu.memory_space<vmem>>, vector<1x1x32xf32>
    %313 = vector.shape_cast %312 : vector<1x1x32xf32> to vector<1x32xf32>
    %314 = vector.broadcast %313 : vector<1x32xf32> to vector<8x32xf32>
    %315 = arith.addf %311, %314 : vector<8x32xf32>
    %316 = arith.addf %199, %315 : vector<8x32xf32>
    %c1_195 = arith.constant 1 : index
    %c0_196 = arith.constant 0 : index
    %c0_197 = arith.constant 0 : index
    %317 = vector.load %arg10[%c1_195, %c0_196, %c0_197] : memref<2x1x32xf32, #tpu.memory_space<vmem>>, vector<1x1x32xf32>
    %318 = vector.shape_cast %317 : vector<1x1x32xf32> to vector<1x32xf32>
    %c1_198 = arith.constant 1 : index
    %c0_199 = arith.constant 0 : index
    %c0_200 = arith.constant 0 : index
    %319 = vector.load %arg11[%c1_198, %c0_199, %c0_200] : memref<2x1x32xf32, #tpu.memory_space<vmem>>, vector<1x1x32xf32>
    %320 = vector.shape_cast %319 : vector<1x1x32xf32> to vector<1x32xf32>
    %cst_201 = arith.constant dense<0.000000e+00> : vector<8xf32>
    %321 = vector.multi_reduction <add>, %316, %cst_201 [1] : vector<8x32xf32> to vector<8xf32>
    %322 = vector.shape_cast %321 : vector<8xf32> to vector<8x1xf32>
    %cst_202 = arith.constant 3.200000e+01 : f32
    %323 = vector.broadcast %cst_202 : f32 to vector<8x1xf32>
    %324 = arith.divf %322, %323 : vector<8x1xf32>
    %325 = vector.broadcast %324 : vector<8x1xf32> to vector<8x32xf32>
    %326 = arith.subf %316, %325 : vector<8x32xf32>
    %327 = arith.mulf %326, %326 : vector<8x32xf32>
    %cst_203 = arith.constant dense<0.000000e+00> : vector<8xf32>
    %328 = vector.multi_reduction <add>, %327, %cst_203 [1] : vector<8x32xf32> to vector<8xf32>
    %329 = vector.shape_cast %328 : vector<8xf32> to vector<8x1xf32>
    %cst_204 = arith.constant 3.200000e+01 : f32
    %330 = vector.broadcast %cst_204 : f32 to vector<8x1xf32>
    %331 = arith.divf %329, %330 : vector<8x1xf32>
    %332 = vector.broadcast %324 : vector<8x1xf32> to vector<8x32xf32>
    %333 = arith.subf %316, %332 : vector<8x32xf32>
    %cst_205 = arith.constant 9.99999974E-6 : f32
    %334 = vector.broadcast %cst_205 : f32 to vector<8x1xf32>
    %335 = arith.addf %331, %334 : vector<8x1xf32>
    %336 = math.rsqrt %335 : vector<8x1xf32>
    %337 = vector.broadcast %336 : vector<8x1xf32> to vector<8x32xf32>
    %338 = arith.mulf %333, %337 : vector<8x32xf32>
    %339 = vector.broadcast %318 : vector<1x32xf32> to vector<8x32xf32>
    %340 = arith.mulf %338, %339 : vector<8x32xf32>
    %341 = vector.broadcast %320 : vector<1x32xf32> to vector<8x32xf32>
    %342 = arith.addf %340, %341 : vector<8x32xf32>
    %343 = arith.truncf %342 : vector<8x32xf32> to vector<8x32xbf16>
    %c1_206 = arith.constant 1 : index
    %c0_207 = arith.constant 0 : index
    %c0_208 = arith.constant 0 : index
    %344 = vector.load %arg12[%c1_206, %c0_207, %c0_208] : memref<2x32x64xbf16, #tpu.memory_space<vmem>>, vector<1x32x64xbf16>
    %345 = vector.shape_cast %344 : vector<1x32x64xbf16> to vector<32x64xbf16>
    %cst_209 = arith.constant dense<0.000000e+00> : vector<8x64xf32>
    %346 = tpu.matmul %343, %345, %cst_209 {dimension_numbers = #tpu.dot_dimension_numbers<[1], [0], [0], [1], [0, 0, 1, 1], [], []>} : vector<8x32xbf16>, vector<32x64xbf16>, vector<8x64xf32> -> vector<8x64xf32>
    %c1_210 = arith.constant 1 : index
    %c0_211 = arith.constant 0 : index
    %c0_212 = arith.constant 0 : index
    %347 = vector.load %arg13[%c1_210, %c0_211, %c0_212] : memref<2x1x64xf32, #tpu.memory_space<vmem>>, vector<1x1x64xf32>
    %348 = vector.shape_cast %347 : vector<1x1x64xf32> to vector<1x64xf32>
    %349 = vector.broadcast %348 : vector<1x64xf32> to vector<8x64xf32>
    %350 = arith.addf %346, %349 : vector<8x64xf32>
    %cst_213 = arith.constant 0.000000e+00 : f32
    %351 = vector.broadcast %cst_213 : f32 to vector<8x64xf32>
    %352 = arith.maximumf %350, %351 : vector<8x64xf32>
    %353 = arith.truncf %352 : vector<8x64xf32> to vector<8x64xbf16>
    %c1_214 = arith.constant 1 : index
    %c0_215 = arith.constant 0 : index
    %c0_216 = arith.constant 0 : index
    %354 = vector.load %arg14[%c1_214, %c0_215, %c0_216] : memref<2x64x32xbf16, #tpu.memory_space<vmem>>, vector<1x64x32xbf16>
    %355 = vector.shape_cast %354 : vector<1x64x32xbf16> to vector<64x32xbf16>
    %cst_217 = arith.constant dense<0.000000e+00> : vector<8x32xf32>
    %356 = tpu.matmul %353, %355, %cst_217 {dimension_numbers = #tpu.dot_dimension_numbers<[1], [0], [0], [1], [0, 0, 1, 1], [], []>} : vector<8x64xbf16>, vector<64x32xbf16>, vector<8x32xf32> -> vector<8x32xf32>
    %c1_218 = arith.constant 1 : index
    %c0_219 = arith.constant 0 : index
    %c0_220 = arith.constant 0 : index
    %357 = vector.load %arg15[%c1_218, %c0_219, %c0_220] : memref<2x1x32xf32, #tpu.memory_space<vmem>>, vector<1x1x32xf32>
    %358 = vector.shape_cast %357 : vector<1x1x32xf32> to vector<1x32xf32>
    %359 = vector.broadcast %358 : vector<1x32xf32> to vector<8x32xf32>
    %360 = arith.addf %356, %359 : vector<8x32xf32>
    %361 = arith.addf %342, %360 : vector<8x32xf32>
    %c1_221 = arith.constant 1 : index
    %c0_222 = arith.constant 0 : index
    %c0_223 = arith.constant 0 : index
    %362 = vector.load %arg16[%c1_221, %c0_222, %c0_223] : memref<2x1x32xf32, #tpu.memory_space<vmem>>, vector<1x1x32xf32>
    %363 = vector.shape_cast %362 : vector<1x1x32xf32> to vector<1x32xf32>
    %c1_224 = arith.constant 1 : index
    %c0_225 = arith.constant 0 : index
    %c0_226 = arith.constant 0 : index
    %364 = vector.load %arg17[%c1_224, %c0_225, %c0_226] : memref<2x1x32xf32, #tpu.memory_space<vmem>>, vector<1x1x32xf32>
    %365 = vector.shape_cast %364 : vector<1x1x32xf32> to vector<1x32xf32>
    %cst_227 = arith.constant dense<0.000000e+00> : vector<8xf32>
    %366 = vector.multi_reduction <add>, %361, %cst_227 [1] : vector<8x32xf32> to vector<8xf32>
    %367 = vector.shape_cast %366 : vector<8xf32> to vector<8x1xf32>
    %cst_228 = arith.constant 3.200000e+01 : f32
    %368 = vector.broadcast %cst_228 : f32 to vector<8x1xf32>
    %369 = arith.divf %367, %368 : vector<8x1xf32>
    %370 = vector.broadcast %369 : vector<8x1xf32> to vector<8x32xf32>
    %371 = arith.subf %361, %370 : vector<8x32xf32>
    %372 = arith.mulf %371, %371 : vector<8x32xf32>
    %cst_229 = arith.constant dense<0.000000e+00> : vector<8xf32>
    %373 = vector.multi_reduction <add>, %372, %cst_229 [1] : vector<8x32xf32> to vector<8xf32>
    %374 = vector.shape_cast %373 : vector<8xf32> to vector<8x1xf32>
    %cst_230 = arith.constant 3.200000e+01 : f32
    %375 = vector.broadcast %cst_230 : f32 to vector<8x1xf32>
    %376 = arith.divf %374, %375 : vector<8x1xf32>
    %377 = vector.broadcast %369 : vector<8x1xf32> to vector<8x32xf32>
    %378 = arith.subf %361, %377 : vector<8x32xf32>
    %cst_231 = arith.constant 9.99999974E-6 : f32
    %379 = vector.broadcast %cst_231 : f32 to vector<8x1xf32>
    %380 = arith.addf %376, %379 : vector<8x1xf32>
    %381 = math.rsqrt %380 : vector<8x1xf32>
    %382 = vector.broadcast %381 : vector<8x1xf32> to vector<8x32xf32>
    %383 = arith.mulf %378, %382 : vector<8x32xf32>
    %384 = vector.broadcast %363 : vector<1x32xf32> to vector<8x32xf32>
    %385 = arith.mulf %383, %384 : vector<8x32xf32>
    %386 = vector.broadcast %365 : vector<1x32xf32> to vector<8x32xf32>
    %387 = arith.addf %385, %386 : vector<8x32xf32>
    %cst_232 = arith.constant 1.250000e-01 : bf16
    %388 = vector.broadcast %cst_232 : bf16 to vector<1x8xbf16>
    %389 = arith.truncf %387 : vector<8x32xf32> to vector<8x32xbf16>
    %cst_233 = arith.constant dense<0.000000e+00> : vector<1x32xf32>
    %390 = tpu.matmul %388, %389, %cst_233 {dimension_numbers = #tpu.dot_dimension_numbers<[1], [0], [0], [1], [0, 0, 1, 1], [], []>} : vector<1x8xbf16>, vector<8x32xbf16>, vector<1x32xf32> -> vector<1x32xf32>
    %391 = arith.truncf %390 : vector<1x32xf32> to vector<1x32xbf16>
    %c0_234 = arith.constant 0 : index
    %c0_235 = arith.constant 0 : index
    %392 = vector.load %arg18[%c0_234, %c0_235] : memref<32x32xbf16, #tpu.memory_space<vmem>>, vector<32x32xbf16>
    %cst_236 = arith.constant dense<0.000000e+00> : vector<1x32xf32>
    %393 = tpu.matmul %391, %392, %cst_236 {dimension_numbers = #tpu.dot_dimension_numbers<[1], [0], [0], [1], [0, 0, 1, 1], [], []>} : vector<1x32xbf16>, vector<32x32xbf16>, vector<1x32xf32> -> vector<1x32xf32>
    %c0_237 = arith.constant 0 : index
    %c0_238 = arith.constant 0 : index
    %394 = vector.load %arg19[%c0_237, %c0_238] : memref<1x32xf32, #tpu.memory_space<vmem>>, vector<1x32xf32>
    %395 = arith.addf %393, %394 : vector<1x32xf32>
    %c0_239 = arith.constant 0 : index
    %c0_240 = arith.constant 0 : index
    %c0_241 = arith.constant 0 : index
    %396 = vector.load %arg20[%c0_239, %c0_240, %c0_241] : memref<1x1x32xf32, #tpu.memory_space<vmem>>, vector<1x1x32xf32>
    %397 = vector.shape_cast %396 : vector<1x1x32xf32> to vector<1x32xf32>
    %398 = vector.shape_cast %395 : vector<1x32xf32> to vector<1x1x32xf32>
    tpu.vector_store %arg20[%c0_239, %c0_240, %c0_241], %398 {strides = array<i32>} : memref<1x1x32xf32, #tpu.memory_space<vmem>>, vector<1x1x32xf32>,
    return
  }
  func.func @transform_0(%arg0: i32) -> (i32, i32, i32) {
    %c0_i32 = arith.constant 0 : i32
    %c0_i32_0 = arith.constant 0 : i32
    %c0_i32_1 = arith.constant 0 : i32
    return %arg0, %c0_i32, %c0_i32_0 : i32, i32, i32
  }
  func.func @transform_1(%arg0: i32) -> (i32, i32, i32) {
    %c0_i32 = arith.constant 0 : i32
    %c0_i32_0 = arith.constant 0 : i32
    %c0_i32_1 = arith.constant 0 : i32
    return %arg0, %c0_i32, %c0_i32_0 : i32, i32, i32
  }
  func.func @transform_2(%arg0: i32) -> (i32, i32) {
    %c0_i32 = arith.constant 0 : i32
    %c0_i32_0 = arith.constant 0 : i32
    %c0_i32_1 = arith.constant 0 : i32
    return %c0_i32, %c0_i32_0 : i32, i32
  }
  func.func @transform_3(%arg0: i32) -> (i32, i32) {
    %c0_i32 = arith.constant 0 : i32
    %c0_i32_0 = arith.constant 0 : i32
    %c0_i32_1 = arith.constant 0 : i32
    return %c0_i32, %c0_i32_0 : i32, i32
  }
  func.func @transform_4(%arg0: i32) -> (i32, i32) {
    %c0_i32 = arith.constant 0 : i32
    %c0_i32_0 = arith.constant 0 : i32
    %c0_i32_1 = arith.constant 0 : i32
    return %c0_i32, %c0_i32_0 : i32, i32
  }
  func.func @transform_5(%arg0: i32) -> (i32, i32, i32, i32) {
    %c0_i32 = arith.constant 0 : i32
    %c0_i32_0 = arith.constant 0 : i32
    %c0_i32_1 = arith.constant 0 : i32
    %c0_i32_2 = arith.constant 0 : i32
    %c0_i32_3 = arith.constant 0 : i32
    return %c0_i32, %c0_i32_0, %c0_i32_1, %c0_i32_2 : i32, i32, i32, i32
  }
  func.func @transform_6(%arg0: i32) -> (i32, i32, i32, i32) {
    %c0_i32 = arith.constant 0 : i32
    %c0_i32_0 = arith.constant 0 : i32
    %c0_i32_1 = arith.constant 0 : i32
    %c0_i32_2 = arith.constant 0 : i32
    %c0_i32_3 = arith.constant 0 : i32
    return %c0_i32, %c0_i32_0, %c0_i32_1, %c0_i32_2 : i32, i32, i32, i32
  }
  func.func @transform_7(%arg0: i32) -> (i32, i32, i32, i32) {
    %c0_i32 = arith.constant 0 : i32
    %c0_i32_0 = arith.constant 0 : i32
    %c0_i32_1 = arith.constant 0 : i32
    %c0_i32_2 = arith.constant 0 : i32
    %c0_i32_3 = arith.constant 0 : i32
    return %c0_i32, %c0_i32_0, %c0_i32_1, %c0_i32_2 : i32, i32, i32, i32
  }
  func.func @transform_8(%arg0: i32) -> (i32, i32, i32) {
    %c0_i32 = arith.constant 0 : i32
    %c0_i32_0 = arith.constant 0 : i32
    %c0_i32_1 = arith.constant 0 : i32
    %c0_i32_2 = arith.constant 0 : i32
    return %c0_i32, %c0_i32_0, %c0_i32_1 : i32, i32, i32
  }
  func.func @transform_9(%arg0: i32) -> (i32, i32, i32) {
    %c0_i32 = arith.constant 0 : i32
    %c0_i32_0 = arith.constant 0 : i32
    %c0_i32_1 = arith.constant 0 : i32
    %c0_i32_2 = arith.constant 0 : i32
    return %c0_i32, %c0_i32_0, %c0_i32_1 : i32, i32, i32
  }
  func.func @transform_10(%arg0: i32) -> (i32, i32, i32) {
    %c0_i32 = arith.constant 0 : i32
    %c0_i32_0 = arith.constant 0 : i32
    %c0_i32_1 = arith.constant 0 : i32
    %c0_i32_2 = arith.constant 0 : i32
    return %c0_i32, %c0_i32_0, %c0_i32_1 : i32, i32, i32
  }
  func.func @transform_11(%arg0: i32) -> (i32, i32, i32) {
    %c0_i32 = arith.constant 0 : i32
    %c0_i32_0 = arith.constant 0 : i32
    %c0_i32_1 = arith.constant 0 : i32
    %c0_i32_2 = arith.constant 0 : i32
    return %c0_i32, %c0_i32_0, %c0_i32_1 : i32, i32, i32
  }
  func.func @transform_12(%arg0: i32) -> (i32, i32, i32) {
    %c0_i32 = arith.constant 0 : i32
    %c0_i32_0 = arith.constant 0 : i32
    %c0_i32_1 = arith.constant 0 : i32
    %c0_i32_2 = arith.constant 0 : i32
    return %c0_i32, %c0_i32_0, %c0_i32_1 : i32, i32, i32
  }
  func.func @transform_13(%arg0: i32) -> (i32, i32, i32) {
    %c0_i32 = arith.constant 0 : i32
    %c0_i32_0 = arith.constant 0 : i32
    %c0_i32_1 = arith.constant 0 : i32
    %c0_i32_2 = arith.constant 0 : i32
    return %c0_i32, %c0_i32_0, %c0_i32_1 : i32, i32, i32
  }
  func.func @transform_14(%arg0: i32) -> (i32, i32, i32) {
    %c0_i32 = arith.constant 0 : i32
    %c0_i32_0 = arith.constant 0 : i32
    %c0_i32_1 = arith.constant 0 : i32
    %c0_i32_2 = arith.constant 0 : i32
    return %c0_i32, %c0_i32_0, %c0_i32_1 : i32, i32, i32
  }
  func.func @transform_15(%arg0: i32) -> (i32, i32, i32) {
    %c0_i32 = arith.constant 0 : i32
    %c0_i32_0 = arith.constant 0 : i32
    %c0_i32_1 = arith.constant 0 : i32
    %c0_i32_2 = arith.constant 0 : i32
    return %c0_i32, %c0_i32_0, %c0_i32_1 : i32, i32, i32
  }
  func.func @transform_16(%arg0: i32) -> (i32, i32, i32) {
    %c0_i32 = arith.constant 0 : i32
    %c0_i32_0 = arith.constant 0 : i32
    %c0_i32_1 = arith.constant 0 : i32
    %c0_i32_2 = arith.constant 0 : i32
    return %c0_i32, %c0_i32_0, %c0_i32_1 : i32, i32, i32
  }
  func.func @transform_17(%arg0: i32) -> (i32, i32) {
    %c0_i32 = arith.constant 0 : i32
    %c0_i32_0 = arith.constant 0 : i32
    %c0_i32_1 = arith.constant 0 : i32
    return %c0_i32, %c0_i32_0 : i32, i32
  }
  func.func @transform_18(%arg0: i32) -> (i32, i32) {
    %c0_i32 = arith.constant 0 : i32
    %c0_i32_0 = arith.constant 0 : i32
    %c0_i32_1 = arith.constant 0 : i32
    return %c0_i32, %c0_i32_0 : i32, i32
  }
  func.func @transform_19(%arg0: i32) -> (i32, i32, i32) {
    %c0_i32 = arith.constant 0 : i32
    %c0_i32_0 = arith.constant 0 : i32
    %c0_i32_1 = arith.constant 0 : i32
    return %arg0, %c0_i32, %c0_i32_0 : i32, i32, i32
  }
}

</mosaic_0001>

<llo_original>
// kernel: transformer_forward.1
$region0: #{transformer_forward.1}
  #allocation0 [shape = 'u32[]', space=smem, size = 0x4, offset = 0x4, fixed_abs, tag = 'smem constant byte address 0x4 - core index']
  #allocation1 [shape = 'u32[144,128]{1,0:T(1,128)}', space=vmem, size = 0x12000, scoped, tag = 'internal scratch']
  %s0 = inlined_call_operand.vmem [shape: f32[4,8,32], index: 0, kind: input, shape index: {}]
  %s1 = inlined_call_operand.vmem [shape: f32[4,1,8], index: 1, kind: input, shape index: {}]
  %s2 = inlined_call_operand.vmem [shape: f32[8,32], index: 2, kind: input, shape index: {}]
  %s3 = inlined_call_operand.hbm [shape: bf16[32,32], index: 3, kind: input, shape index: {}]
  %s4 = inlined_call_operand.hbm [shape: f32[1,32], index: 4, kind: input, shape index: {}]
  %s5 = inlined_call_operand.vmem [shape: bf16[2,4,32,32], index: 5, kind: input, shape index: {}]
  %s6 = inlined_call_operand.hbm [shape: f32[2,4,1,32], index: 6, kind: input, shape index: {}]
  %s7 = inlined_call_operand.vmem [shape: bf16[2,4,32,32], index: 7, kind: input, shape index: {}]
  %s8 = inlined_call_operand.vmem [shape: f32[2,1,32], index: 8, kind: input, shape index: {}]
  %s9 = inlined_call_operand.hbm [shape: f32[2,1,32], index: 9, kind: input, shape index: {}]
  %s10 = inlined_call_operand.hbm [shape: f32[2,1,32], index: 10, kind: input, shape index: {}]
  %s11 = inlined_call_operand.vmem [shape: bf16[2,32,64], index: 11, kind: input, shape index: {}]
  %s12 = inlined_call_operand.hbm [shape: f32[2,1,64], index: 12, kind: input, shape index: {}]
  %s13 = inlined_call_operand.vmem [shape: bf16[2,64,32], index: 13, kind: input, shape index: {}]
  %s14 = inlined_call_operand.hbm [shape: f32[2,1,32], index: 14, kind: input, shape index: {}]
  %s15 = inlined_call_operand.hbm [shape: f32[2,1,32], index: 15, kind: input, shape index: {}]
  %s16 = inlined_call_operand.hbm [shape: f32[2,1,32], index: 16, kind: input, shape index: {}]
  %s17 = inlined_call_operand.vmem [shape: bf16[32,32], index: 17, kind: input, shape index: {}]
  %s18 = inlined_call_operand.hbm [shape: f32[1,32], index: 18, kind: input, shape index: {}]
  %s19 = inlined_call_operand.hbm [shape: f32[4,1,32], index: 19, kind: output, shape index: {}]
  %s20 = sld [smem:[#allocation0]]
  $region149: #{transformer_forward.1} parent=0
    _
  %s22 = ssub.s32 1, %s20
  %s23 = scalar_select 0, %s22, %s20
  $region1: #{transformer_forward.1} parent=0
    #allocation2 [shape = 'u8[8192]{0}', space=vmem, size = 0x2000, scoped, tag = 'input window, operand 3, single buffered']
    #allocation3 [shape = 's32[2]{0}', space=sflag, size = 0x8, scoped, tag = 'scoped memory for transformer_forward.1']
    #allocation4 [shape = 's32[2]{0}', space=sflag, size = 0x8, scoped, tag = 'scoped memory for transformer_forward.1']
    #allocation5 [shape = 'u8[512]{0}', space=vmem, size = 0x400, scoped, tag = 'input window, operand 4, single buffered']
    #allocation6 [shape = 's32[1]{0}', space=sflag, size = 0x4, scoped, tag = 'scoped memory for transformer_forward.1']
    #allocation7 [shape = 'u8[4096]{0}', space=vmem, size = 0x1000, scoped, tag = 'input window, operand 6, single buffered']
    #allocation8 [shape = 'u8[1024]{0}', space=vmem, size = 0x400, scoped, tag = 'input window, operand 9, single buffered']
    #allocation9 [shape = 's32[1]{0}', space=sflag, size = 0x4, scoped, tag = 'scoped memory for transformer_forward.1']
    #allocation10 [shape = 'u8[1024]{0}', space=vmem, size = 0x400, scoped, tag = 'input window, operand 10, single buffered']
    #allocation11 [shape = 'u8[1024]{0}', space=vmem, size = 0x400, scoped, tag = 'input window, operand 12, single buffered']
    #allocation12 [shape = 's32[1]{0}', space=sflag, size = 0x4, scoped, tag = 'scoped memory for transformer_forward.1']
    #allocation13 [shape = 'u8[1024]{0}', space=vmem, size = 0x400, scoped, tag = 'input window, operand 14, single buffered']
    #allocation14 [shape = 'u8[1024]{0}', space=vmem, size = 0x400, scoped, tag = 'input window, operand 15, single buffered']
    #allocation15 [shape = 's32[1]{0}', space=sflag, size = 0x4, scoped, tag = 'scoped memory for transformer_forward.1']
    #allocation16 [shape = 'u8[1024]{0}', space=vmem, size = 0x400, scoped, tag = 'input window, operand 16, single buffered']
    #allocation17 [shape = 'u8[512]{0}', space=vmem, size = 0x400, scoped, tag = 'input window, operand 18, single buffered']
    #allocation18 [shape = 's32[1]{0}', space=sflag, size = 0x4, scoped, tag = 'scoped memory for transformer_forward.1']
    #allocation19 [shape = 'u8[1024]{0}', space=vmem, size = 0x400, scoped, tag = 'output window, operand 0']
    %24 = vsyncpa [#allocation3], 0
    %25 = vsyncpa [#allocation6], 0
    %26 = vsyncpa [#allocation9], 0
    %27 = vsyncpa [#allocation12], 0
    %28 = vsyncpa [#allocation15], 0
    %29 = vsyncpa [#allocation18], 0
    %30 = vsyncpa [#allocation4], 0
    %s31 = scalar_lea.sflag [#allocation4], 1
    %32 = vsyncpa %s31, 0
    loop: start=0, step=1, limit=6
    $region2: #{transformer_forward.1} parent=1 // loop_pre_header
      _
    $region3: #{transformer_forward.1} parent=1 // loop_header
      %s34 = sphi 0, %s38
      %p35 = scmp.ge.s32.totalorder %s34, 6
      %s44 = sphi 0, %s46
      %s47 = sphi 0, %s44
      %s48 = sphi 0, %s47
      %s64 = sphi 0, %s48
      %s70 = sphi 0, %s72
      %s73 = sphi 0, %s70
      %s74 = sphi 0, %s73
      %s90 = sphi 0, %s74
      %s94 = sphi 0, %s94
      %s96 = sphi 0, %s94
      %s97 = sphi 0, %s96
      %s111 = sphi 0, %s97
      %s115 = sphi 0, %s115
      %s117 = sphi 0, %s115
      %s118 = sphi 0, %s117
      %s132 = sphi 0, %s118
      %s136 = sphi 0, %s136
      %s138 = sphi 0, %s136
      %s139 = sphi 0, %s138
      %s153 = sphi 0, %s139
      %s157 = sphi 0, %s157
      %s159 = sphi 0, %s157
      %s160 = sphi 0, %s159
      %s174 = sphi 0, %s160
      %s178 = sphi 0, %s178
      %s180 = sphi 0, %s178
      %s181 = sphi 0, %s180
      %s195 = sphi 0, %s181
      %s199 = sphi 0, %s199
      %s201 = sphi 0, %s199
      %s202 = sphi 0, %s201
      %s216 = sphi 0, %s202
      %s220 = sphi 0, %s220
      %s222 = sphi 0, %s220
      %s223 = sphi 0, %s222
      %s237 = sphi 0, %s223
      %s241 = sphi 0, %s241
      %s243 = sphi 0, %s241
      %s244 = sphi 0, %s243
      %s258 = sphi 0, %s244
      %s262 = sphi 0, %s262
      %s264 = sphi 0, %s262
      %s265 = sphi 0, %s264
      %s279 = sphi 0, %s265
      %s283 = sphi 0, %s283
      %s285 = sphi 0, %s283
      %s286 = sphi 0, %s285
      %s300 = sphi 0, %s286
      %s304 = sphi 0, %s304
      %s306 = sphi 0, %s304
      %s307 = sphi 0, %s306
      %s321 = sphi 0, %s307
      %s325 = sphi 0, %s325
      %s327 = sphi 0, %s325
      %s328 = sphi 0, %s327
      %s342 = sphi 0, %s328
      %s346 = sphi 0, %s346
      %s348 = sphi 0, %s346
      %s349 = sphi 0, %s348
      %s363 = sphi 0, %s349
      %s367 = sphi 0, %s367
      %s369 = sphi 0, %s367
      %s370 = sphi 0, %s369
      %s384 = sphi 0, %s370
      %s388 = sphi 0, %s388
      %s390 = sphi 0, %s388
      %s391 = sphi 0, %s390
      %s405 = sphi 0, %s391
      %s409 = sphi 0, %s409
      %s411 = sphi 0, %s409
      %s412 = sphi 0, %s411
      %s426 = sphi 0, %s412
      %s430 = sphi 0, %s430
      %s432 = sphi 0, %s430
      %s433 = sphi 0, %s432
      %s447 = sphi 0, %s433
      %s453 = sphi 0, %s455
      %s456 = sphi 0, %s453
      %s457 = sphi 0, %s456
      %s473 = sphi 0, %s457
    $region4: #{transformer_forward.1} parent=1 // loop_header_branch
      %37 = sbr.rel (%p35) target = $region8
    $region5: #{transformer_forward.1} parent=1 // loop_body
      %s39 = ssub.s32 %s34, 1
      %s40 = ssub.s32 %s34, 2
      %s41 = sadd.s32 %s34, 1
      %s42 = ssub.s32 %s34, %s41
      %p43 = scmp.eq.s32.totalorder %s42, 0
      %s45 = sadd.s32 %s44, 1
      %s46 = scalar_select %p43, %s44, %s45
      %p49 = pneg %p43
      %p50 = scmp.eq.s32.totalorder %s34, 3
      %p51 = por %p49, %p50
      %p52 = scmp.ne.s32.totalorder %s44, %s47
      %p53 = scmp.eq.s32.totalorder %s34, 0
      %p54 = por %p52, %p53
      %p55 = scmp.ne.s32.totalorder %s44, %s47
      %p56 = scmp.eq.s32.totalorder %s39, 3
      %p57 = por %p55, %p56
      %p58 = scmp.ne.s32.totalorder %s47, %s48
      %p59 = scmp.eq.s32.totalorder %s39, 0
      %p60 = por %p58, %p59
      %p61 = scmp.ne.s32.totalorder %s47, %s48
      %p62 = scmp.eq.s32.totalorder %s40, 3
      %p63 = por %p61, %p62
      %p65 = scmp.ne.s32.totalorder %s48, %s64
      %p66 = scmp.eq.s32.totalorder %s40, 0
      %p67 = por %p65, %p66
      %s68 = ssub.s32 %s34, %s41
      %p69 = scmp.eq.s32.totalorder %s68, 0
      %s71 = sadd.s32 %s70, 1
      %s72 = scalar_select %p69, %s70, %s71
      %p75 = pneg %p69
      %p76 = scmp.eq.s32.totalorder %s34, 3
      %p77 = por %p75, %p76
      %p78 = scmp.ne.s32.totalorder %s70, %s73
      %p79 = scmp.eq.s32.totalorder %s34, 0
      %p80 = por %p78, %p79
      %p81 = scmp.ne.s32.totalorder %s70, %s73
      %p82 = scmp.eq.s32.totalorder %s39, 3
      %p83 = por %p81, %p82
      %p84 = scmp.ne.s32.totalorder %s73, %s74
      %p85 = scmp.eq.s32.totalorder %s39, 0
      %p86 = por %p84, %p85
      %p87 = scmp.ne.s32.totalorder %s73, %s74
      %p88 = scmp.eq.s32.totalorder %s40, 3
      %p89 = por %p87, %p88
      %p91 = scmp.ne.s32.totalorder %s74, %s90
      %p92 = scmp.eq.s32.totalorder %s40, 0
      %p93 = por %p91, %p92
      %s95 = sadd.s32 %s94, 1
      %p98 = scmp.eq.s32.totalorder %s34, 3
      %p99 = scmp.ne.s32.totalorder %s94, %s96
      %p100 = scmp.eq.s32.totalorder %s34, 0
      %p101 = por %p99, %p100
      %p102 = scmp.ne.s32.totalorder %s94, %s96
      %p103 = scmp.eq.s32.totalorder %s39, 3
      %p104 = por %p102, %p103
      %p105 = scmp.ne.s32.totalorder %s96, %s97
      %p106 = scmp.eq.s32.totalorder %s39, 0
      %p107 = por %p105, %p106
      %p108 = scmp.ne.s32.totalorder %s96, %s97
      %p109 = scmp.eq.s32.totalorder %s40, 3
      %p110 = por %p108, %p109
      %p112 = scmp.ne.s32.totalorder %s97, %s111
      %p113 = scmp.eq.s32.totalorder %s40, 0
      %p114 = por %p112, %p113
      %s116 = sadd.s32 %s115, 1
      %p119 = scmp.eq.s32.totalorder %s34, 3
      %p120 = scmp.ne.s32.totalorder %s115, %s117
      %p121 = scmp.eq.s32.totalorder %s34, 0
      %p122 = por %p120, %p121
      %p123 = scmp.ne.s32.totalorder %s115, %s117
      %p124 = scmp.eq.s32.totalorder %s39, 3
      %p125 = por %p123, %p124
      %p126 = scmp.ne.s32.totalorder %s117, %s118
      %p127 = scmp.eq.s32.totalorder %s39, 0
      %p128 = por %p126, %p127
      %p129 = scmp.ne.s32.totalorder %s117, %s118
      %p130 = scmp.eq.s32.totalorder %s40, 3
      %p131 = por %p129, %p130
      %p133 = scmp.ne.s32.totalorder %s118, %s132
      %p134 = scmp.eq.s32.totalorder %s40, 0
      %p135 = por %p133, %p134
      %s137 = sadd.s32 %s136, 1
      %p140 = scmp.eq.s32.totalorder %s34, 3
      %p141 = scmp.ne.s32.totalorder %s136, %s138
      %p142 = scmp.eq.s32.totalorder %s34, 0
      %p143 = por %p141, %p142
      %p144 = scmp.ne.s32.totalorder %s136, %s138
      %p145 = scmp.eq.s32.totalorder %s39, 3
      %p146 = por %p144, %p145
      %p147 = scmp.ne.s32.totalorder %s138, %s139
      %p148 = scmp.eq.s32.totalorder %s39, 0
      %p149 = por %p147, %p148
      %p150 = scmp.ne.s32.totalorder %s138, %s139
      %p151 = scmp.eq.s32.totalorder %s40, 3
      %p152 = por %p150, %p151
      %p154 = scmp.ne.s32.totalorder %s139, %s153
      %p155 = scmp.eq.s32.totalorder %s40, 0
      %p156 = por %p154, %p155
      %s158 = sadd.s32 %s157, 1
      %p161 = scmp.eq.s32.totalorder %s34, 3
      %p162 = scmp.ne.s32.totalorder %s157, %s159
      %p163 = scmp.eq.s32.totalorder %s34, 0
      %p164 = por %p162, %p163
      %p165 = scmp.ne.s32.totalorder %s157, %s159
      %p166 = scmp.eq.s32.totalorder %s39, 3
      %p167 = por %p165, %p166
      %p168 = scmp.ne.s32.totalorder %s159, %s160
      %p169 = scmp.eq.s32.totalorder %s39, 0
      %p170 = por %p168, %p169
      %p171 = scmp.ne.s32.totalorder %s159, %s160
      %p172 = scmp.eq.s32.totalorder %s40, 3
      %p173 = por %p171, %p172
      %p175 = scmp.ne.s32.totalorder %s160, %s174
      %p176 = scmp.eq.s32.totalorder %s40, 0
      %p177 = por %p175, %p176
      %s179 = sadd.s32 %s178, 1
      %p182 = scmp.eq.s32.totalorder %s34, 3
      %p183 = scmp.ne.s32.totalorder %s178, %s180
      %p184 = scmp.eq.s32.totalorder %s34, 0
      %p185 = por %p183, %p184
      %p186 = scmp.ne.s32.totalorder %s178, %s180
      %p187 = scmp.eq.s32.totalorder %s39, 3
      %p188 = por %p186, %p187
      %p189 = scmp.ne.s32.totalorder %s180, %s181
      %p190 = scmp.eq.s32.totalorder %s39, 0
      %p191 = por %p189, %p190
      %p192 = scmp.ne.s32.totalorder %s180, %s181
      %p193 = scmp.eq.s32.totalorder %s40, 3
      %p194 = por %p192, %p193
      %p196 = scmp.ne.s32.totalorder %s181, %s195
      %p197 = scmp.eq.s32.totalorder %s40, 0
      %p198 = por %p196, %p197
      %s200 = sadd.s32 %s199, 1
      %p203 = scmp.eq.s32.totalorder %s34, 3
      %p204 = scmp.ne.s32.totalorder %s199, %s201
      %p205 = scmp.eq.s32.totalorder %s34, 0
      %p206 = por %p204, %p205
      %p207 = scmp.ne.s32.totalorder %s199, %s201
      %p208 = scmp.eq.s32.totalorder %s39, 3
      %p209 = por %p207, %p208
      %p210 = scmp.ne.s32.totalorder %s201, %s202
      %p211 = scmp.eq.s32.totalorder %s39, 0
      %p212 = por %p210, %p211
      %p213 = scmp.ne.s32.totalorder %s201, %s202
      %p214 = scmp.eq.s32.totalorder %s40, 3
      %p215 = por %p213, %p214
      %p217 = scmp.ne.s32.totalorder %s202, %s216
      %p218 = scmp.eq.s32.totalorder %s40, 0
      %p219 = por %p217, %p218
      %s221 = sadd.s32 %s220, 1
      %p224 = scmp.eq.s32.totalorder %s34, 3
      %p225 = scmp.ne.s32.totalorder %s220, %s222
      %p226 = scmp.eq.s32.totalorder %s34, 0
      %p227 = por %p225, %p226
      %p228 = scmp.ne.s32.totalorder %s220, %s222
      %p229 = scmp.eq.s32.totalorder %s39, 3
      %p230 = por %p228, %p229
      %p231 = scmp.ne.s32.totalorder %s222, %s223
      %p232 = scmp.eq.s32.totalorder %s39, 0
      %p233 = por %p231, %p232
      %p234 = scmp.ne.s32.totalorder %s222, %s223
      %p235 = scmp.eq.s32.totalorder %s40, 3
      %p236 = por %p234, %p235
      %p238 = scmp.ne.s32.totalorder %s223, %s237
      %p239 = scmp.eq.s32.totalorder %s40, 0
      %p240 = por %p238, %p239
      %s242 = sadd.s32 %s241, 1
      %p245 = scmp.eq.s32.totalorder %s34, 3
      %p246 = scmp.ne.s32.totalorder %s241, %s243
      %p247 = scmp.eq.s32.totalorder %s34, 0
      %p248 = por %p246, %p247
      %p249 = scmp.ne.s32.totalorder %s241, %s243
      %p250 = scmp.eq.s32.totalorder %s39, 3
      %p251 = por %p249, %p250
      %p252 = scmp.ne.s32.totalorder %s243, %s244
      %p253 = scmp.eq.s32.totalorder %s39, 0
      %p254 = por %p252, %p253
      %p255 = scmp.ne.s32.totalorder %s243, %s244
      %p256 = scmp.eq.s32.totalorder %s40, 3
      %p257 = por %p255, %p256
      %p259 = scmp.ne.s32.totalorder %s244, %s258
      %p260 = scmp.eq.s32.totalorder %s40, 0
      %p261 = por %p259, %p260
      %s263 = sadd.s32 %s262, 1
      %p266 = scmp.eq.s32.totalorder %s34, 3
      %p267 = scmp.ne.s32.totalorder %s262, %s264
      %p268 = scmp.eq.s32.totalorder %s34, 0
      %p269 = por %p267, %p268
      %p270 = scmp.ne.s32.totalorder %s262, %s264
      %p271 = scmp.eq.s32.totalorder %s39, 3
      %p272 = por %p270, %p271
      %p273 = scmp.ne.s32.totalorder %s264, %s265
      %p274 = scmp.eq.s32.totalorder %s39, 0
      %p275 = por %p273, %p274
      %p276 = scmp.ne.s32.totalorder %s264, %s265
      %p277 = scmp.eq.s32.totalorder %s40, 3
      %p278 = por %p276, %p277
      %p280 = scmp.ne.s32.totalorder %s265, %s279
      %p281 = scmp.eq.s32.totalorder %s40, 0
      %p282 = por %p280, %p281
      %s284 = sadd.s32 %s283, 1
      %p287 = scmp.eq.s32.totalorder %s34, 3
      %p288 = scmp.ne.s32.totalorder %s283, %s285
      %p289 = scmp.eq.s32.totalorder %s34, 0
      %p290 = por %p288, %p289
      %p291 = scmp.ne.s32.totalorder %s283, %s285
      %p292 = scmp.eq.s32.totalorder %s39, 3
      %p293 = por %p291, %p292
      %p294 = scmp.ne.s32.totalorder %s285, %s286
      %p295 = scmp.eq.s32.totalorder %s39, 0
      %p296 = por %p294, %p295
      %p297 = scmp.ne.s32.totalorder %s285, %s286
      %p298 = scmp.eq.s32.totalorder %s40, 3
      %p299 = por %p297, %p298
      %p301 = scmp.ne.s32.totalorder %s286, %s300
      %p302 = scmp.eq.s32.totalorder %s40, 0
      %p303 = por %p301, %p302
      %s305 = sadd.s32 %s304, 1
      %p308 = scmp.eq.s32.totalorder %s34, 3
      %p309 = scmp.ne.s32.totalorder %s304, %s306
      %p310 = scmp.eq.s32.totalorder %s34, 0
      %p311 = por %p309, %p310
      %p312 = scmp.ne.s32.totalorder %s304, %s306
      %p313 = scmp.eq.s32.totalorder %s39, 3
      %p314 = por %p312, %p313
      %p315 = scmp.ne.s32.totalorder %s306, %s307
      %p316 = scmp.eq.s32.totalorder %s39, 0
      %p317 = por %p315, %p316
      %p318 = scmp.ne.s32.totalorder %s306, %s307
      %p319 = scmp.eq.s32.totalorder %s40, 3
      %p320 = por %p318, %p319
      %p322 = scmp.ne.s32.totalorder %s307, %s321
      %p323 = scmp.eq.s32.totalorder %s40, 0
      %p324 = por %p322, %p323
      %s326 = sadd.s32 %s325, 1
      %p329 = scmp.eq.s32.totalorder %s34, 3
      %p330 = scmp.ne.s32.totalorder %s325, %s327
      %p331 = scmp.eq.s32.totalorder %s34, 0
      %p332 = por %p330, %p331
      %p333 = scmp.ne.s32.totalorder %s325, %s327
      %p334 = scmp.eq.s32.totalorder %s39, 3
      %p335 = por %p333, %p334
      %p336 = scmp.ne.s32.totalorder %s327, %s328
      %p337 = scmp.eq.s32.totalorder %s39, 0
      %p338 = por %p336, %p337
      %p339 = scmp.ne.s32.totalorder %s327, %s328
      %p340 = scmp.eq.s32.totalorder %s40, 3
      %p341 = por %p339, %p340
      %p343 = scmp.ne.s32.totalorder %s328, %s342
      %p344 = scmp.eq.s32.totalorder %s40, 0
      %p345 = por %p343, %p344
      %s347 = sadd.s32 %s346, 1
      %p350 = scmp.eq.s32.totalorder %s34, 3
      %p351 = scmp.ne.s32.totalorder %s346, %s348
      %p352 = scmp.eq.s32.totalorder %s34, 0
      %p353 = por %p351, %p352
      %p354 = scmp.ne.s32.totalorder %s346, %s348
      %p355 = scmp.eq.s32.totalorder %s39, 3
      %p356 = por %p354, %p355
      %p357 = scmp.ne.s32.totalorder %s348, %s349
      %p358 = scmp.eq.s32.totalorder %s39, 0
      %p359 = por %p357, %p358
      %p360 = scmp.ne.s32.totalorder %s348, %s349
      %p361 = scmp.eq.s32.totalorder %s40, 3
      %p362 = por %p360, %p361
      %p364 = scmp.ne.s32.totalorder %s349, %s363
      %p365 = scmp.eq.s32.totalorder %s40, 0
      %p366 = por %p364, %p365
      %s368 = sadd.s32 %s367, 1
      %p371 = scmp.eq.s32.totalorder %s34, 3
      %p372 = scmp.ne.s32.totalorder %s367, %s369
      %p373 = scmp.eq.s32.totalorder %s34, 0
      %p374 = por %p372, %p373
      %p375 = scmp.ne.s32.totalorder %s367, %s369
      %p376 = scmp.eq.s32.totalorder %s39, 3
      %p377 = por %p375, %p376
      %p378 = scmp.ne.s32.totalorder %s369, %s370
      %p379 = scmp.eq.s32.totalorder %s39, 0
      %p380 = por %p378, %p379
      %p381 = scmp.ne.s32.totalorder %s369, %s370
      %p382 = scmp.eq.s32.totalorder %s40, 3
      %p383 = por %p381, %p382
      %p385 = scmp.ne.s32.totalorder %s370, %s384
      %p386 = scmp.eq.s32.totalorder %s40, 0
      %p387 = por %p385, %p386
      %s389 = sadd.s32 %s388, 1
      %p392 = scmp.eq.s32.totalorder %s34, 3
      %p393 = scmp.ne.s32.totalorder %s388, %s390
      %p394 = scmp.eq.s32.totalorder %s34, 0
      %p395 = por %p393, %p394
      %p396 = scmp.ne.s32.totalorder %s388, %s390
      %p397 = scmp.eq.s32.totalorder %s39, 3
      %p398 = por %p396, %p397
      %p399 = scmp.ne.s32.totalorder %s390, %s391
      %p400 = scmp.eq.s32.totalorder %s39, 0
      %p401 = por %p399, %p400
      %p402 = scmp.ne.s32.totalorder %s390, %s391
      %p403 = scmp.eq.s32.totalorder %s40, 3
      %p404 = por %p402, %p403
      %p406 = scmp.ne.s32.totalorder %s391, %s405
      %p407 = scmp.eq.s32.totalorder %s40, 0
      %p408 = por %p406, %p407
      %s410 = sadd.s32 %s409, 1
      %p413 = scmp.eq.s32.totalorder %s34, 3
      %p414 = scmp.ne.s32.totalorder %s409, %s411
      %p415 = scmp.eq.s32.totalorder %s34, 0
      %p416 = por %p414, %p415
      %p417 = scmp.ne.s32.totalorder %s409, %s411
      %p418 = scmp.eq.s32.totalorder %s39, 3
      %p419 = por %p417, %p418
      %p420 = scmp.ne.s32.totalorder %s411, %s412
      %p421 = scmp.eq.s32.totalorder %s39, 0
      %p422 = por %p420, %p421
      %p423 = scmp.ne.s32.totalorder %s411, %s412
      %p424 = scmp.eq.s32.totalorder %s40, 3
      %p425 = por %p423, %p424
      %p427 = scmp.ne.s32.totalorder %s412, %s426
      %p428 = scmp.eq.s32.totalorder %s40, 0
      %p429 = por %p427, %p428
      %s431 = sadd.s32 %s430, 1
      %p434 = scmp.eq.s32.totalorder %s34, 3
      %p435 = scmp.ne.s32.totalorder %s430, %s432
      %p436 = scmp.eq.s32.totalorder %s34, 0
      %p437 = por %p435, %p436
      %p438 = scmp.ne.s32.totalorder %s430, %s432
      %p439 = scmp.eq.s32.totalorder %s39, 3
      %p440 = por %p438, %p439
      %p441 = scmp.ne.s32.totalorder %s432, %s433
      %p442 = scmp.eq.s32.totalorder %s39, 0
      %p443 = por %p441, %p442
      %p444 = scmp.ne.s32.totalorder %s432, %s433
      %p445 = scmp.eq.s32.totalorder %s40, 3
      %p446 = por %p444, %p445
      %p448 = scmp.ne.s32.totalorder %s433, %s447
      %p449 = scmp.eq.s32.totalorder %s40, 0
      %p450 = por %p448, %p449
      %s451 = ssub.s32 %s34, %s41
      %p452 = scmp.eq.s32.totalorder %s451, 0
      %s454 = sadd.s32 %s453, 1
      %s455 = scalar_select %p452, %s453, %s454
      %p458 = pneg %p452
      %p459 = scmp.eq.s32.totalorder %s34, 3
      %p460 = por %p458, %p459
      %p461 = scmp.ne.s32.totalorder %s453, %s456
      %p462 = scmp.eq.s32.totalorder %s34, 0
      %p463 = por %p461, %p462
      %p464 = scmp.ne.s32.totalorder %s453, %s456
      %p465 = scmp.eq.s32.totalorder %s39, 3
      %p466 = por %p464, %p465
      %p467 = scmp.ne.s32.totalorder %s456, %s457
      %p468 = scmp.eq.s32.totalorder %s39, 0
      %p469 = por %p467, %p468
      %p470 = scmp.ne.s32.totalorder %s456, %s457
      %p471 = scmp.eq.s32.totalorder %s40, 3
      %p472 = por %p470, %p471
      %p474 = scmp.ne.s32.totalorder %s457, %s473
      %p475 = scmp.eq.s32.totalorder %s40, 0
      %p476 = por %p474, %p475
      %p477 = scmp.le.s32.totalorder 1, %s34
      %p478 = scmp.lt.s32.totalorder %s34, 5
      %p479 = pnand %p477, %p478
      %p480 = pneg %p479
      // Predicated region
      $region9: #{transformer_forward.1} parent=5 // pred_check
        _
      $region10: #{transformer_forward.1} parent=5 // pred_check_branch
        %482 = sbr.rel (%p479) target = $region12
      $region11: #{transformer_forward.1} parent=5 // pred_region
        %s483 = ssub.s32 %s34, 1
        // Predicated region
        $region13: #{transformer_forward.1} parent=11 // pred_check
          %p484 = pneg %p107
        $region14: #{transformer_forward.1} parent=11 // pred_check_branch
          %486 = sbr.rel (%p484) target = $region16
        $region15: #{transformer_forward.1} parent=11 // pred_region
          _
        $region16: #{transformer_forward.1} parent=11 // pred_fallthru
          _
        // Predicated region
        $region17: #{transformer_forward.1} parent=11 // pred_check
          %p487 = pneg %p128
        $region18: #{transformer_forward.1} parent=11 // pred_check_branch
          %489 = sbr.rel (%p487) target = $region20
        $region19: #{transformer_forward.1} parent=11 // pred_region
          %s491 = ssub.s32 256, 256
          %492 = vsyncadd [#allocation3], %s491
          %s493 = sshll.u32 [#allocation2], 4
          %s494 = int_to_ptr.vmem [resolvable:$true] %s493
          %499 = dma.hbm_to_vmem [thread:$0]  %s3, 256, %s494, [#allocation3], 64, 64, 4
        $region20: #{transformer_forward.1} parent=11 // pred_fallthru
          _
        // Predicated region
        $region21: #{transformer_forward.1} parent=11 // pred_check
          %p500 = pneg %p149
        $region22: #{transformer_forward.1} parent=11 // pred_check_branch
          %502 = sbr.rel (%p500) target = $region24
        $region23: #{transformer_forward.1} parent=11 // pred_region
          %s504 = ssub.s32 16, 16
          %505 = vsyncadd [#allocation6], %s504
          %s507 = sshll.u32 [#allocation5], 4
          %s508 = int_to_ptr.vmem [resolvable:$true] %s507
          %510 = dma.hbm_to_vmem [thread:$0]  %s4, 16, %s508, [#allocation6]
        $region24: #{transformer_forward.1} parent=11 // pred_fallthru
          _
        // Predicated region
        $region25: #{transformer_forward.1} parent=11 // pred_check
          %p511 = pneg %p170
        $region26: #{transformer_forward.1} parent=11 // pred_check_branch
          %513 = sbr.rel (%p511) target = $region28
        $region27: #{transformer_forward.1} parent=11 // pred_region
          _
        $region28: #{transformer_forward.1} parent=11 // pred_fallthru
          _
        // Predicated region
        $region29: #{transformer_forward.1} parent=11 // pred_check
          %p514 = pneg %p191
        $region30: #{transformer_forward.1} parent=11 // pred_check_branch
          %516 = sbr.rel (%p514) target = $region32
        $region31: #{transformer_forward.1} parent=11 // pred_region
          %s518 = ssub.s32 128, 128
          %519 = vsyncadd [#allocation6], %s518
          %s520 = sshll.u32 [#allocation7], 4
          %s521 = int_to_ptr.vmem [resolvable:$true] %s520
          %526 = dma.hbm_to_vmem [thread:$0]  %s6, 128, %s521, [#allocation6], 16, 16, 1
        $region32: #{transformer_forward.1} parent=11 // pred_fallthru
          _
        // Predicated region
        $region33: #{transformer_forward.1} parent=11 // pred_check
          %p527 = pneg %p212
        $region34: #{transformer_forward.1} parent=11 // pred_check_branch
          %529 = sbr.rel (%p527) target = $region36
        $region35: #{transformer_forward.1} parent=11 // pred_region
          _
        $region36: #{transformer_forward.1} parent=11 // pred_fallthru
          _
        // Predicated region
        $region37: #{transformer_forward.1} parent=11 // pred_check
          %p530 = pneg %p233
        $region38: #{transformer_forward.1} parent=11 // pred_check_branch
          %532 = sbr.rel (%p530) target = $region40
        $region39: #{transformer_forward.1} parent=11 // pred_region
          _
        $region40: #{transformer_forward.1} parent=11 // pred_fallthru
          _
        // Predicated region
        $region41: #{transformer_forward.1} parent=11 // pred_check
          %p533 = pneg %p254
        $region42: #{transformer_forward.1} parent=11 // pred_check_branch
          %535 = sbr.rel (%p533) target = $region44
        $region43: #{transformer_forward.1} parent=11 // pred_region
          %s537 = ssub.s32 32, 32
          %538 = vsyncadd [#allocation9], %s537
          %s539 = sshll.u32 [#allocation8], 4
          %s540 = int_to_ptr.vmem [resolvable:$true] %s539
          %545 = dma.hbm_to_vmem [thread:$0]  %s9, 32, %s540, [#allocation9], 16, 16, 1
        $region44: #{transformer_forward.1} parent=11 // pred_fallthru
          _
        // Predicated region
        $region45: #{transformer_forward.1} parent=11 // pred_check
          %p546 = pneg %p275
        $region46: #{transformer_forward.1} parent=11 // pred_check_branch
          %548 = sbr.rel (%p546) target = $region48
        $region47: #{transformer_forward.1} parent=11 // pred_region
          %s550 = ssub.s32 32, 32
          %551 = vsyncadd [#allocation9], %s550
          %s552 = sshll.u32 [#allocation10], 4
          %s553 = int_to_ptr.vmem [resolvable:$true] %s552
          %558 = dma.hbm_to_vmem [thread:$0]  %s10, 32, %s553, [#allocation9], 16, 16, 1
        $region48: #{transformer_forward.1} parent=11 // pred_fallthru
          _
        // Predicated region
        $region49: #{transformer_forward.1} parent=11 // pred_check
          %p559 = pneg %p296
        $region50: #{transformer_forward.1} parent=11 // pred_check_branch
          %561 = sbr.rel (%p559) target = $region52
        $region51: #{transformer_forward.1} parent=11 // pred_region
          _
        $region52: #{transformer_forward.1} parent=11 // pred_fallthru
          _
        // Predicated region
        $region53: #{transformer_forward.1} parent=11 // pred_check
          %p562 = pneg %p317
        $region54: #{transformer_forward.1} parent=11 // pred_check_branch
          %564 = sbr.rel (%p562) target = $region56
        $region55: #{transformer_forward.1} parent=11 // pred_region
          %s566 = ssub.s32 32, 32
          %567 = vsyncadd [#allocation12], %s566
          %s568 = sshll.u32 [#allocation11], 4
          %s569 = int_to_ptr.vmem [resolvable:$true] %s568
          %574 = dma.hbm_to_vmem [thread:$0]  %s12, 32, %s569, [#allocation12], 16, 16, 1
        $region56: #{transformer_forward.1} parent=11 // pred_fallthru
          _
        // Predicated region
        $region57: #{transformer_forward.1} parent=11 // pred_check
          %p575 = pneg %p338
        $region58: #{transformer_forward.1} parent=11 // pred_check_branch
          %577 = sbr.rel (%p575) target = $region60
        $region59: #{transformer_forward.1} parent=11 // pred_region
          _
        $region60: #{transformer_forward.1} parent=11 // pred_fallthru
          _
        // Predicated region
        $region61: #{transformer_forward.1} parent=11 // pred_check
          %p578 = pneg %p359
        $region62: #{transformer_forward.1} parent=11 // pred_check_branch
          %580 = sbr.rel (%p578) target = $region64
        $region63: #{transformer_forward.1} parent=11 // pred_region
          %s582 = ssub.s32 32, 32
          %583 = vsyncadd [#allocation12], %s582
          %s584 = sshll.u32 [#allocation13], 4
          %s585 = int_to_ptr.vmem [resolvable:$true] %s584
          %590 = dma.hbm_to_vmem [thread:$0]  %s14, 32, %s585, [#allocation12], 16, 16, 1
        $region64: #{transformer_forward.1} parent=11 // pred_fallthru
          _
        // Predicated region
        $region65: #{transformer_forward.1} parent=11 // pred_check
          %p591 = pneg %p380
        $region66: #{transformer_forward.1} parent=11 // pred_check_branch
          %593 = sbr.rel (%p591) target = $region68
        $region67: #{transformer_forward.1} parent=11 // pred_region
          %s595 = ssub.s32 32, 32
          %596 = vsyncadd [#allocation15], %s595
          %s597 = sshll.u32 [#allocation14], 4
          %s598 = int_to_ptr.vmem [resolvable:$true] %s597
          %603 = dma.hbm_to_vmem [thread:$0]  %s15, 32, %s598, [#allocation15], 16, 16, 1
        $region68: #{transformer_forward.1} parent=11 // pred_fallthru
          _
        // Predicated region
        $region69: #{transformer_forward.1} parent=11 // pred_check
          %p604 = pneg %p401
        $region70: #{transformer_forward.1} parent=11 // pred_check_branch
          %606 = sbr.rel (%p604) target = $region72
        $region71: #{transformer_forward.1} parent=11 // pred_region
          %s608 = ssub.s32 32, 32
          %609 = vsyncadd [#allocation15], %s608
          %s610 = sshll.u32 [#allocation16], 4
          %s611 = int_to_ptr.vmem [resolvable:$true] %s610
          %616 = dma.hbm_to_vmem [thread:$0]  %s16, 32, %s611, [#allocation15], 16, 16, 1
        $region72: #{transformer_forward.1} parent=11 // pred_fallthru
          _
        // Predicated region
        $region73: #{transformer_forward.1} parent=11 // pred_check
          %p617 = pneg %p422
        $region74: #{transformer_forward.1} parent=11 // pred_check_branch
          %619 = sbr.rel (%p617) target = $region76
        $region75: #{transformer_forward.1} parent=11 // pred_region
          _
        $region76: #{transformer_forward.1} parent=11 // pred_fallthru
          _
        // Predicated region
        $region77: #{transformer_forward.1} parent=11 // pred_check
          %p620 = pneg %p443
        $region78: #{transformer_forward.1} parent=11 // pred_check_branch
          %622 = sbr.rel (%p620) target = $region80
        $region79: #{transformer_forward.1} parent=11 // pred_region
          %s624 = ssub.s32 16, 16
          %625 = vsyncadd [#allocation18], %s624
          %s627 = sshll.u32 [#allocation17], 4
          %s628 = int_to_ptr.vmem [resolvable:$true] %s627
          %630 = dma.hbm_to_vmem [thread:$0]  %s18, 16, %s628, [#allocation18]
        $region80: #{transformer_forward.1} parent=11 // pred_fallthru
          _
      $region12: #{transformer_forward.1} parent=5 // pred_fallthru
        _
      %p631 = scmp.lt.s32.totalorder %s34, 4
      // Predicated region
      $region81: #{transformer_forward.1} parent=5 // pred_check
        %p632 = pneg %p631
      $region82: #{transformer_forward.1} parent=5 // pred_check_branch
        %634 = sbr.rel (%p632) target = $region84
      $region83: #{transformer_forward.1} parent=5 // pred_region
        // Predicated region
        $region85: #{transformer_forward.1} parent=83 // pred_check
          %p635 = pneg %p54
        $region86: #{transformer_forward.1} parent=83 // pred_check_branch
          %637 = sbr.rel (%p635) target = $region88
        $region87: #{transformer_forward.1} parent=83 // pred_region
          %p638 = scmp.lt.s32.totalorder %s34, 3
          %s639 = scalar_select %p638, %s34, 3
          %s640 = smul.addr %s639, 8
          %s641 = scalar_lea.vmem %s0, %s640
        $region88: #{transformer_forward.1} parent=83 // pred_fallthru
          _
        // Predicated region
        $region89: #{transformer_forward.1} parent=83 // pred_check
          %p642 = pneg %p80
        $region90: #{transformer_forward.1} parent=83 // pred_check_branch
          %644 = sbr.rel (%p642) target = $region92
        $region91: #{transformer_forward.1} parent=83 // pred_region
          %p645 = scmp.lt.s32.totalorder %s34, 3
          %s646 = scalar_select %p645, %s34, 3
          %s647 = scalar_lea.vmem %s1, %s646
        $region92: #{transformer_forward.1} parent=83 // pred_fallthru
          _
      $region84: #{transformer_forward.1} parent=5 // pred_fallthru
        _
      %p648 = scmp.le.s32.totalorder 1, %s34
      %p649 = scmp.lt.s32.totalorder %s34, 5
      %p650 = pnand %p648, %p649
      %p651 = pneg %p650
      // Predicated region
      $region93: #{transformer_forward.1} parent=5 // pred_check
        _
      $region94: #{transformer_forward.1} parent=5 // pred_check_branch
        %653 = sbr.rel (%p650) target = $region96
      $region95: #{transformer_forward.1} parent=5 // pred_region
        %s654 = ssub.s32 %s34, 1
        // Predicated region
        $region97: #{transformer_forward.1} parent=95 // pred_check
          %p655 = pneg %p128
        $region98: #{transformer_forward.1} parent=95 // pred_check_branch
          %657 = sbr.rel (%p655) target = $region100
        $region99: #{transformer_forward.1} parent=95 // pred_region
          %658 = dma.done [#allocation3], 256
        $region100: #{transformer_forward.1} parent=95 // pred_fallthru
          _
        // Predicated region
        $region101: #{transformer_forward.1} parent=95 // pred_check
          %p659 = pneg %p149
        $region102: #{transformer_forward.1} parent=95 // pred_check_branch
          %661 = sbr.rel (%p659) target = $region104
        $region103: #{transformer_forward.1} parent=95 // pred_region
          %662 = dma.done [#allocation6], 16
        $region104: #{transformer_forward.1} parent=95 // pred_fallthru
          _
        // Predicated region
        $region105: #{transformer_forward.1} parent=95 // pred_check
          %p663 = pneg %p191
        $region106: #{transformer_forward.1} parent=95 // pred_check_branch
          %665 = sbr.rel (%p663) target = $region108
        $region107: #{transformer_forward.1} parent=95 // pred_region
          %666 = dma.done [#allocation6], 128
        $region108: #{transformer_forward.1} parent=95 // pred_fallthru
          _
        // Predicated region
        $region109: #{transformer_forward.1} parent=95 // pred_check
          %p667 = pneg %p254
        $region110: #{transformer_forward.1} parent=95 // pred_check_branch
          %669 = sbr.rel (%p667) target = $region112
        $region111: #{transformer_forward.1} parent=95 // pred_region
          %670 = dma.done [#allocation9], 32
        $region112: #{transformer_forward.1} parent=95 // pred_fallthru
          _
        // Predicated region
        $region113: #{transformer_forward.1} parent=95 // pred_check
          %p671 = pneg %p275
        $region114: #{transformer_forward.1} parent=95 // pred_check_branch
          %673 = sbr.rel (%p671) target = $region116
        $region115: #{transformer_forward.1} parent=95 // pred_region
          %674 = dma.done [#allocation9], 32
        $region116: #{transformer_forward.1} parent=95 // pred_fallthru
          _
        // Predicated region
        $region117: #{transformer_forward.1} parent=95 // pred_check
          %p675 = pneg %p317
        $region118: #{transformer_forward.1} parent=95 // pred_check_branch
          %677 = sbr.rel (%p675) target = $region120
        $region119: #{transformer_forward.1} parent=95 // pred_region
          %678 = dma.done [#allocation12], 32
        $region120: #{transformer_forward.1} parent=95 // pred_fallthru
          _
        // Predicated region
        $region121: #{transformer_forward.1} parent=95 // pred_check
          %p679 = pneg %p359
        $region122: #{transformer_forward.1} parent=95 // pred_check_branch
          %681 = sbr.rel (%p679) target = $region124
        $region123: #{transformer_forward.1} parent=95 // pred_region
          %682 = dma.done [#allocation12], 32
        $region124: #{transformer_forward.1} parent=95 // pred_fallthru
          _
        // Predicated region
        $region125: #{transformer_forward.1} parent=95 // pred_check
          %p683 = pneg %p380
        $region126: #{transformer_forward.1} parent=95 // pred_check_branch
          %685 = sbr.rel (%p683) target = $region128
        $region127: #{transformer_forward.1} parent=95 // pred_region
          %686 = dma.done [#allocation15], 32
        $region128: #{transformer_forward.1} parent=95 // pred_fallthru
          _
        // Predicated region
        $region129: #{transformer_forward.1} parent=95 // pred_check
          %p687 = pneg %p401
        $region130: #{transformer_forward.1} parent=95 // pred_check_branch
          %689 = sbr.rel (%p687) target = $region132
        $region131: #{transformer_forward.1} parent=95 // pred_region
          %690 = dma.done [#allocation15], 32
        $region132: #{transformer_forward.1} parent=95 // pred_fallthru
          _
        // Predicated region
        $region133: #{transformer_forward.1} parent=95 // pred_check
          %p691 = pneg %p443
        $region134: #{transformer_forward.1} parent=95 // pred_check_branch
          %693 = sbr.rel (%p691) target = $region136
        $region135: #{transformer_forward.1} parent=95 // pred_region
          %694 = dma.done [#allocation18], 16
        $region136: #{transformer_forward.1} parent=95 // pred_fallthru
          _
        %p695 = scmp.lt.s32.totalorder %s39, 3
        %s696 = scalar_select %p695, %s39, 3
        %s697 = smul.addr %s696, 8
        %s698 = scalar_lea.vmem %s0, %s697
        %p699 = pneg %p60
        %p700 = pneg %p57
        %p701 = scmp.lt.s32.totalorder %s39, 3
        %s702 = scalar_select %p701, %s39, 3
        %s703 = scalar_lea.vmem %s1, %s702
        %p704 = pneg %p86
        %p705 = pneg %p83
        %p706 = pneg %p107
        %p707 = pneg %p104
        %p708 = pneg %p128
        %p709 = pneg %p125
        %p710 = pneg %p149
        %p711 = pneg %p146
        %p712 = pneg %p170
        %p713 = pneg %p167
        %p714 = pneg %p191
        %p715 = pneg %p188
        %p716 = pneg %p212
        %p717 = pneg %p209
        %p718 = pneg %p233
        %p719 = pneg %p230
        %p720 = pneg %p254
        %p721 = pneg %p251
        %p722 = pneg %p275
        %p723 = pneg %p272
        %p724 = pneg %p296
        %p725 = pneg %p293
        %p726 = pneg %p317
        %p727 = pneg %p314
        %p728 = pneg %p338
        %p729 = pneg %p335
        %p730 = pneg %p359
        %p731 = pneg %p356
        %p732 = pneg %p380
        %p733 = pneg %p377
        %p734 = pneg %p401
        %p735 = pneg %p398
        %p736 = pneg %p422
        %p737 = pneg %p419
        %p738 = pneg %p443
        %p739 = pneg %p440
        %p740 = pneg %p469
        %p741 = pneg %p466
        %s742 = sand.u32 %s456, 1
        %s743 = scalar_lea.sflag [#allocation4], %s742
        %s744 = sand.u32 %s456, 1
        %s745 = scalar_lea.vmem [#allocation19], %s744
        %p746 = scmp.lt.s32.totalorder %s39, 3
        %s747 = scalar_select %p746, %s39, 3
        %s748 = smul.addr %s747, 8
        %s749 = scalar_lea.vmem %s0, %s748
        %p750 = scmp.lt.s32.totalorder %s39, 3
        %s751 = scalar_select %p750, %s39, 3
        %s752 = scalar_lea.vmem %s1, %s751
        %v755 = vld [vmem:[%s749] sm:$0xff]
        %v756 = vld [vmem:[%s752] sm:$0x1]
        %v757 = vpack.c.bf16 %v755, %v755
        %v758 = vld [vmem:[#allocation2] sm:$0xf]
        %v759 = vld [vmem:[#allocation2 + $0x4] sm:$0xf]
        %v760 = vld [vmem:[#allocation2 + $0x8] sm:$0xf]
        %v761 = vld [vmem:[#allocation2 + $0xc] sm:$0xf]
        %v762 = vld [vmem:[#allocation5] sm:$0x1]
        %v764 = vlaneseq
        %v765 = vshrl.u32 %v764, 7
        %v766 = vsub.s32 0, %v765
        %v767 = vrot.slane %v762, %v766
        %v773 = vunpack.c.l.b16 %v758
        %v774 = vunpack.c.l.b16 %v759
        %v775 = vunpack.c.l.b16 %v760
        %v776 = vunpack.c.l.b16 %v761
        %v777 = vpack.c.b16 %v774, %v773
        %v778 = vpack.c.b16 %v776, %v775
        %vm781 = vcmask 261120
        %v783 = vsel %vm781, %v757, 0
        %785 = vmatprep.subr.bf16.mxu0 0
        %786 = vmatpush1.bf16.msra.mxu0 %v777
        %787 = vmatprep.subr.bf16.mxu0 0
        %788 = vmatpush1.bf16.msra.mxu0 %v778
        %789 = vmatprep.subr.bf16.mxu0 0
        %790 = vmatpush1.bf16.msra.mxu0 0
        %791 = vmatprep.subr.bf16.mxu0 0
        %792 = vmatpush1.bf16.msra.mxu0 0
        %793 = vmatprep.subr.bf16.mxu0 0
        %794 = vmatpush1.bf16.msra.mxu0 0
        %795 = vmatprep.subr.bf16.mxu0 0
        %796 = vmatpush1.bf16.msra.mxu0 0
        %797 = vmatprep.subr.bf16.mxu0 0
        %798 = vmatpush1.bf16.msra.mxu0 0
        %799 = vmatprep.subr.bf16.mxu0 0
        %800 = vmatpush1.bf16.msra.mxu0 0
        %801 = vmatprep.subr.bf16.mxu0 0
        %802 = vmatpush1.bf16.msra.mxu0 0
        %803 = vmatprep.subr.bf16.mxu0 0
        %804 = vmatpush1.bf16.msra.mxu0 0
        %805 = vmatprep.subr.bf16.mxu0 0
        %806 = vmatpush1.bf16.msra.mxu0 0
        %807 = vmatprep.subr.bf16.mxu0 0
        %808 = vmatpush1.bf16.msra.mxu0 0
        %809 = vmatprep.subr.bf16.mxu0 0
        %810 = vmatpush1.bf16.msra.mxu0 0
        %811 = vmatprep.subr.bf16.mxu0 0
        %812 = vmatpush1.bf16.msra.mxu0 0
        %813 = vmatprep.subr.bf16.mxu0 0
        %814 = vmatpush1.bf16.msra.mxu0 0
        %815 = vmatprep.subr.bf16.mxu0 0
        %816 = vmatpush1.bf16.msra.mxu0 0
        %817 = vmatprep.mubr.bf16.mxu0 0
        %818 = vmatmul.mubr.bf16.gmra.mrb[0].mxu0 %v783
        %v819 = vpop.f32.mrb[0].mxu0
        %v820 = vadd.f32 %v767, %v819
        %v821 = vpop.f32.mrb[0].mxu0
        %v822 = vpop.f32.mrb[0].mxu0
        %v823 = vpop.f32.mrb[0].mxu0
        %824 = vdwg.mxu0
        %v825 = vld [vmem:[%s2] sm:$0xff]
        %v826 = vadd.f32 %v820, %v825
        %v827 = vpack.c.bf16 %v826, %v826
        %v828 = vld [vmem:[%s5] sm:$0xf]
        %v829 = vld [vmem:[%s5 + $0x4] sm:$0xf]
        %v830 = vld [vmem:[%s5 + $0x8] sm:$0xf]
        %v831 = vld [vmem:[%s5 + $0xc] sm:$0xf]
        %v832 = vld [vmem:[#allocation7] sm:$0x1]
        %v834 = vlaneseq
        %v835 = vshrl.u32 %v834, 7
        %v836 = vsub.s32 0, %v835
        %v837 = vrot.slane %v832, %v836
        %v843 = vunpack.c.l.b16 %v828
        %v844 = vunpack.c.l.b16 %v829
        %v845 = vunpack.c.l.b16 %v830
        %v846 = vunpack.c.l.b16 %v831
        %v847 = vpack.c.b16 %v844, %v843
        %v848 = vpack.c.b16 %v846, %v845
        %v852 = vsel %vm781, %v827, 0
        %854 = vmatprep.subr.bf16.mxu0 0
        %855 = vmatpush1.bf16.msra.mxu0 %v847
        %856 = vmatprep.subr.bf16.mxu0 0
        %857 = vmatpush1.bf16.msra.mxu0 %v848
        %858 = vmatprep.subr.bf16.mxu0 0
        %859 = vmatpush1.bf16.msra.mxu0 0
        %860 = vmatprep.subr.bf16.mxu0 0
        %861 = vmatpush1.bf16.msra.mxu0 0
        %862 = vmatprep.subr.bf16.mxu0 0
        %863 = vmatpush1.bf16.msra.mxu0 0
        %864 = vmatprep.subr.bf16.mxu0 0
        %865 = vmatpush1.bf16.msra.mxu0 0
        %866 = vmatprep.subr.bf16.mxu0 0
        %867 = vmatpush1.bf16.msra.mxu0 0
        %868 = vmatprep.subr.bf16.mxu0 0
        %869 = vmatpush1.bf16.msra.mxu0 0
        %870 = vmatprep.subr.bf16.mxu0 0
        %871 = vmatpush1.bf16.msra.mxu0 0
        %872 = vmatprep.subr.bf16.mxu0 0
        %873 = vmatpush1.bf16.msra.mxu0 0
        %874 = vmatprep.subr.bf16.mxu0 0
        %875 = vmatpush1.bf16.msra.mxu0 0
        %876 = vmatprep.subr.bf16.mxu0 0
        %877 = vmatpush1.bf16.msra.mxu0 0
        %878 = vmatprep.subr.bf16.mxu0 0
        %879 = vmatpush1.bf16.msra.mxu0 0
        %880 = vmatprep.subr.bf16.mxu0 0
        %881 = vmatpush1.bf16.msra.mxu0 0
        %882 = vmatprep.subr.bf16.mxu0 0
        %883 = vmatpush1.bf16.msra.mxu0 0
        %884 = vmatprep.subr.bf16.mxu0 0
        %885 = vmatpush1.bf16.msra.mxu0 0
        %886 = vmatprep.mubr.bf16.mxu0 0
        %887 = vmatmul.mubr.bf16.gmra.mrb[0].mxu0 %v852
        %v888 = vpop.f32.mrb[0].mxu0
        %v889 = vadd.f32 %v837, %v888
        %v890 = vpop.f32.mrb[0].mxu0
        %v891 = vpop.f32.mrb[0].mxu0
        %v892 = vpop.f32.mrb[0].mxu0
        %893 = vdwg.mxu0
        %v894 = vpack.c.bf16 %v889, %v889
        %v896 = vlaneseq
        %v897 = vshrl.u32 %v896, 7
        %v898 = vsub.s32 0, %v897
        %v899 = vrot.slane %v756, %v898
        %v902 = vsel %vm781, %v894, 0
        %904 = vmatprep.subr.bf16.mxu0 0
        %905 = vmatpush1.bf16.xpose.msra.mxu0 %v852
        %906 = vmatprep.subr.bf16.mxu0 0
        %907 = vmatpush1.bf16.xpose.msra.mxu0 0
        %908 = vmatprep.subr.bf16.mxu0 0
        %909 = vmatpush1.bf16.xpose.msra.mxu0 0
        %910 = vmatprep.subr.bf16.mxu0 0
        %911 = vmatpush1.bf16.xpose.msra.mxu0 0
        %912 = vmatprep.subr.bf16.mxu0 0
        %913 = vmatpush1.bf16.xpose.msra.mxu0 0
        %914 = vmatprep.subr.bf16.mxu0 0
        %915 = vmatpush1.bf16.xpose.msra.mxu0 0
        %916 = vmatprep.subr.bf16.mxu0 0
        %917 = vmatpush1.bf16.xpose.msra.mxu0 0
        %918 = vmatprep.subr.bf16.mxu0 0
        %919 = vmatpush1.bf16.xpose.msra.mxu0 0
        %920 = vmatprep.subr.bf16.mxu0 0
        %921 = vmatpush1.bf16.xpose.msra.mxu0 0
        %922 = vmatprep.subr.bf16.mxu0 0
        %923 = vmatpush1.bf16.xpose.msra.mxu0 0
        %924 = vmatprep.subr.bf16.mxu0 0
        %925 = vmatpush1.bf16.xpose.msra.mxu0 0
        %926 = vmatprep.subr.bf16.mxu0 0
        %927 = vmatpush1.bf16.xpose.msra.mxu0 0
        %928 = vmatprep.subr.bf16.mxu0 0
        %929 = vmatpush1.bf16.xpose.msra.mxu0 0
        %930 = vmatprep.subr.bf16.mxu0 0
        %931 = vmatpush1.bf16.xpose.msra.mxu0 0
        %932 = vmatprep.subr.bf16.mxu0 0
        %933 = vmatpush1.bf16.xpose.msra.mxu0 0
        %934 = vmatprep.subr.bf16.mxu0 0
        %935 = vmatpush1.bf16.xpose.msra.mxu0 0
        %936 = vmatprep.mubr.bf16.mxu0 0
        %937 = vmatmul.mubr.bf16.gmra.mrb[0].mxu0 %v902
        %v938 = vpop.f32.mrb[0].mxu0
        %v939 = vadd.f32 %v899, %v938
        %v940 = vpop.f32.mrb[0].mxu0
        %v941 = vpop.f32.mrb[0].mxu0
        %v942 = vpop.f32.mrb[0].mxu0
        %943 = vdwg.mxu0
        %vm944 = vcmask 64512
        %v945 = vsel %vm944, %v939, -inf
        %946 = vmax.xlane.f32.xlu0 %v945
        %v947 = vpop.xlane.xlu0 %946
        %v948 = vsub.f32 %v939, %v947
        %v949 = vmul.f32 %v948, 1.442695
        %v950 = vpow.pop %v949
        %v951 = vsel %vm944, %v950, 0.0
        %952 = vadd.xlane.f32.xlu0 %v951
        %v953 = vpop.xlane.xlu0 %952
        %v954 = vrcp.pop %v953
        %v955 = vmul.f32 %v950, %v954
        %v956 = vpack.c.bf16 %v955, %v955
        %v958 = vsel %vm944, %v956, 0
        %vm960 = vcmask 1043456
        %v961 = vsel %vm960, %v827, 0
        %963 = vmatprep.subr.bf16.mxu0 0
        %964 = vmatpush1.bf16.msra.mxu0 %v961
        %965 = vmatprep.subr.bf16.mxu0 0
        %966 = vmatpush1.bf16.msra.mxu0 0
        %967 = vmatprep.subr.bf16.mxu0 0
        %968 = vmatpush1.bf16.msra.mxu0 0
        %969 = vmatprep.subr.bf16.mxu0 0
        %970 = vmatpush1.bf16.msra.mxu0 0
        %971 = vmatprep.subr.bf16.mxu0 0
        %972 = vmatpush1.bf16.msra.mxu0 0
        %973 = vmatprep.subr.bf16.mxu0 0
        %974 = vmatpush1.bf16.msra.mxu0 0
        %975 = vmatprep.subr.bf16.mxu0 0
        %976 = vmatpush1.bf16.msra.mxu0 0
        %977 = vmatprep.subr.bf16.mxu0 0
        %978 = vmatpush1.bf16.msra.mxu0 0
        %979 = vmatprep.subr.bf16.mxu0 0
        %980 = vmatpush1.bf16.msra.mxu0 0
        %981 = vmatprep.subr.bf16.mxu0 0
        %982 = vmatpush1.bf16.msra.mxu0 0
        %983 = vmatprep.subr.bf16.mxu0 0
        %984 = vmatpush1.bf16.msra.mxu0 0
        %985 = vmatprep.subr.bf16.mxu0 0
        %986 = vmatpush1.bf16.msra.mxu0 0
        %987 = vmatprep.subr.bf16.mxu0 0
        %988 = vmatpush1.bf16.msra.mxu0 0
        %989 = vmatprep.subr.bf16.mxu0 0
        %990 = vmatpush1.bf16.msra.mxu0 0
        %991 = vmatprep.subr.bf16.mxu0 0
        %992 = vmatpush1.bf16.msra.mxu0 0
        %993 = vmatprep.subr.bf16.mxu0 0
        %994 = vmatpush1.bf16.msra.mxu0 0
        %995 = vmatprep.mubr.bf16.mxu0 0
        %996 = vmatmul.mubr.bf16.gmra.mrb[0].mxu0 %v958
        %v997 = vpop.f32.mrb[0].mxu0
        %v998 = vadd.f32 0.0, %v997
        %v999 = vpop.f32.mrb[0].mxu0
        %v1000 = vpop.f32.mrb[0].mxu0
        %v1001 = vpop.f32.mrb[0].mxu0
        %1002 = vdwg.mxu0
        %v1003 = vpack.c.bf16 %v998, %v998
        %v1004 = vld [vmem:[%s7] sm:$0xf]
        %v1005 = vld [vmem:[%s7 + $0x4] sm:$0xf]
        %v1006 = vld [vmem:[%s7 + $0x8] sm:$0xf]
        %v1007 = vld [vmem:[%s7 + $0xc] sm:$0xf]
        %s1008 = scalar_lea.vmem %s5, 16
        %v1009 = vld [vmem:[%s1008] sm:$0xf]
        %v1010 = vld [vmem:[%s1008 + $0x4] sm:$0xf]
        %v1011 = vld [vmem:[%s1008 + $0x8] sm:$0xf]
        %v1012 = vld [vmem:[%s1008 + $0xc] sm:$0xf]
        %s1013 = scalar_lea.vmem [#allocation7], 1
        %v1014 = vld [vmem:[%s1013] sm:$0x1]
        %v1016 = vlaneseq
        %v1017 = vshrl.u32 %v1016, 7
        %v1018 = vsub.s32 0, %v1017
        %v1019 = vrot.slane %v1014, %v1018
        %v1025 = vunpack.c.l.b16 %v1009
        %v1026 = vunpack.c.l.b16 %v1010
        %v1027 = vunpack.c.l.b16 %v1011
        %v1028 = vunpack.c.l.b16 %v1012
        %v1029 = vpack.c.b16 %v1026, %v1025
        %v1030 = vpack.c.b16 %v1028, %v1027
        %1033 = vmatprep.subr.bf16.mxu0 0
        %1034 = vmatpush1.bf16.msra.mxu0 %v1029
        %1035 = vmatprep.subr.bf16.mxu0 0
        %1036 = vmatpush1.bf16.msra.mxu0 %v1030
        %1037 = vmatprep.subr.bf16.mxu0 0
        %1038 = vmatpush1.bf16.msra.mxu0 0
        %1039 = vmatprep.subr.bf16.mxu0 0
        %1040 = vmatpush1.bf16.msra.mxu0 0
        %1041 = vmatprep.subr.bf16.mxu0 0
        %1042 = vmatpush1.bf16.msra.mxu0 0
        %1043 = vmatprep.subr.bf16.mxu0 0
        %1044 = vmatpush1.bf16.msra.mxu0 0
        %1045 = vmatprep.subr.bf16.mxu0 0
        %1046 = vmatpush1.bf16.msra.mxu0 0
        %1047 = vmatprep.subr.bf16.mxu0 0
        %1048 = vmatpush1.bf16.msra.mxu0 0
        %1049 = vmatprep.subr.bf16.mxu0 0
        %1050 = vmatpush1.bf16.msra.mxu0 0
        %1051 = vmatprep.subr.bf16.mxu0 0
        %1052 = vmatpush1.bf16.msra.mxu0 0
        %1053 = vmatprep.subr.bf16.mxu0 0
        %1054 = vmatpush1.bf16.msra.mxu0 0
        %1055 = vmatprep.subr.bf16.mxu0 0
        %1056 = vmatpush1.bf16.msra.mxu0 0
        %1057 = vmatprep.subr.bf16.mxu0 0
        %1058 = vmatpush1.bf16.msra.mxu0 0
        %1059 = vmatprep.subr.bf16.mxu0 0
        %1060 = vmatpush1.bf16.msra.mxu0 0
        %1061 = vmatprep.subr.bf16.mxu0 0
        %1062 = vmatpush1.bf16.msra.mxu0 0
        %1063 = vmatprep.subr.bf16.mxu0 0
        %1064 = vmatpush1.bf16.msra.mxu0 0
        %1065 = vmatprep.mubr.bf16.mxu0 0
        %1066 = vmatmul.mubr.bf16.gmra.mrb[0].mxu0 %v852
        %v1067 = vpop.f32.mrb[0].mxu0
        %v1068 = vadd.f32 %v1019, %v1067
        %v1069 = vpop.f32.mrb[0].mxu0
        %v1070 = vpop.f32.mrb[0].mxu0
        %v1071 = vpop.f32.mrb[0].mxu0
        %1072 = vdwg.mxu0
        %v1073 = vpack.c.bf16 %v1068, %v1068
        %v1075 = vsel %vm781, %v1073, 0
        %1077 = vmatprep.subr.bf16.mxu0 0
        %1078 = vmatpush1.bf16.xpose.msra.mxu0 %v852
        %1079 = vmatprep.subr.bf16.mxu0 0
        %1080 = vmatpush1.bf16.xpose.msra.mxu0 0
        %1081 = vmatprep.subr.bf16.mxu0 0
        %1082 = vmatpush1.bf16.xpose.msra.mxu0 0
        %1083 = vmatprep.subr.bf16.mxu0 0
        %1084 = vmatpush1.bf16.xpose.msra.mxu0 0
        %1085 = vmatprep.subr.bf16.mxu0 0
        %1086 = vmatpush1.bf16.xpose.msra.mxu0 0
        %1087 = vmatprep.subr.bf16.mxu0 0
        %1088 = vmatpush1.bf16.xpose.msra.mxu0 0
        %1089 = vmatprep.subr.bf16.mxu0 0
        %1090 = vmatpush1.bf16.xpose.msra.mxu0 0
        %1091 = vmatprep.subr.bf16.mxu0 0
        %1092 = vmatpush1.bf16.xpose.msra.mxu0 0
        %1093 = vmatprep.subr.bf16.mxu0 0
        %1094 = vmatpush1.bf16.xpose.msra.mxu0 0
        %1095 = vmatprep.subr.bf16.mxu0 0
        %1096 = vmatpush1.bf16.xpose.msra.mxu0 0
        %1097 = vmatprep.subr.bf16.mxu0 0
        %1098 = vmatpush1.bf16.xpose.msra.mxu0 0
        %1099 = vmatprep.subr.bf16.mxu0 0
        %1100 = vmatpush1.bf16.xpose.msra.mxu0 0
        %1101 = vmatprep.subr.bf16.mxu0 0
        %1102 = vmatpush1.bf16.xpose.msra.mxu0 0
        %1103 = vmatprep.subr.bf16.mxu0 0
        %1104 = vmatpush1.bf16.xpose.msra.mxu0 0
        %1105 = vmatprep.subr.bf16.mxu0 0
        %1106 = vmatpush1.bf16.xpose.msra.mxu0 0
        %1107 = vmatprep.subr.bf16.mxu0 0
        %1108 = vmatpush1.bf16.xpose.msra.mxu0 0
        %1109 = vmatprep.mubr.bf16.mxu0 0
        %1110 = vmatmul.mubr.bf16.gmra.mrb[0].mxu0 %v1075
        %v1111 = vpop.f32.mrb[0].mxu0
        %v1112 = vadd.f32 %v899, %v1111
        %v1113 = vpop.f32.mrb[0].mxu0
        %v1114 = vpop.f32.mrb[0].mxu0
        %v1115 = vpop.f32.mrb[0].mxu0
        %1116 = vdwg.mxu0
        %v1117 = vsel %vm944, %v1112, -inf
        %1118 = vmax.xlane.f32.xlu0 %v1117
        %v1119 = vpop.xlane.xlu0 %1118
        %v1120 = vsub.f32 %v1112, %v1119
        %v1121 = vmul.f32 %v1120, 1.442695
        %v1122 = vpow.pop %v1121
        %v1123 = vsel %vm944, %v1122, 0.0
        %1124 = vadd.xlane.f32.xlu0 %v1123
        %v1125 = vpop.xlane.xlu0 %1124
        %v1126 = vrcp.pop %v1125
        %v1127 = vmul.f32 %v1122, %v1126
        %v1128 = vpack.c.bf16 %v1127, %v1127
        %v1130 = vsel %vm944, %v1128, 0
        %1132 = vmatprep.subr.bf16.mxu0 0
        %1133 = vmatpush1.bf16.msra.mxu0 %v961
        %1134 = vmatprep.subr.bf16.mxu0 0
        %1135 = vmatpush1.bf16.msra.mxu0 0
        %1136 = vmatprep.subr.bf16.mxu0 0
        %1137 = vmatpush1.bf16.msra.mxu0 0
        %1138 = vmatprep.subr.bf16.mxu0 0
        %1139 = vmatpush1.bf16.msra.mxu0 0
        %1140 = vmatprep.subr.bf16.mxu0 0
        %1141 = vmatpush1.bf16.msra.mxu0 0
        %1142 = vmatprep.subr.bf16.mxu0 0
        %1143 = vmatpush1.bf16.msra.mxu0 0
        %1144 = vmatprep.subr.bf16.mxu0 0
        %1145 = vmatpush1.bf16.msra.mxu0 0
        %1146 = vmatprep.subr.bf16.mxu0 0
        %1147 = vmatpush1.bf16.msra.mxu0 0
        %1148 = vmatprep.subr.bf16.mxu0 0
        %1149 = vmatpush1.bf16.msra.mxu0 0
        %1150 = vmatprep.subr.bf16.mxu0 0
        %1151 = vmatpush1.bf16.msra.mxu0 0
        %1152 = vmatprep.subr.bf16.mxu0 0
        %1153 = vmatpush1.bf16.msra.mxu0 0
        %1154 = vmatprep.subr.bf16.mxu0 0
        %1155 = vmatpush1.bf16.msra.mxu0 0
        %1156 = vmatprep.subr.bf16.mxu0 0
        %1157 = vmatpush1.bf16.msra.mxu0 0
        %1158 = vmatprep.subr.bf16.mxu0 0
        %1159 = vmatpush1.bf16.msra.mxu0 0
        %1160 = vmatprep.subr.bf16.mxu0 0
        %1161 = vmatpush1.bf16.msra.mxu0 0
        %1162 = vmatprep.subr.bf16.mxu0 0
        %1163 = vmatpush1.bf16.msra.mxu0 0
        %1164 = vmatprep.mubr.bf16.mxu0 0
        %1165 = vmatmul.mubr.bf16.gmra.mrb[0].mxu0 %v1130
        %v1166 = vpop.f32.mrb[0].mxu0
        %v1167 = vadd.f32 0.0, %v1166
        %v1168 = vpop.f32.mrb[0].mxu0
        %v1169 = vpop.f32.mrb[0].mxu0
        %v1170 = vpop.f32.mrb[0].mxu0
        %1171 = vdwg.mxu0
        %v1172 = vpack.c.bf16 %v1167, %v1167
        %s1173 = scalar_lea.vmem %s7, 16
        %v1174 = vld [vmem:[%s1173] sm:$0xf]
        %v1175 = vld [vmem:[%s1173 + $0x4] sm:$0xf]
        %v1176 = vld [vmem:[%s1173 + $0x8] sm:$0xf]
        %v1177 = vld [vmem:[%s1173 + $0xc] sm:$0xf]
        %v1182 = vunpack.c.l.b16 %v1174
        %v1183 = vunpack.c.l.b16 %v1175
        %v1184 = vunpack.c.l.b16 %v1176
        %v1185 = vunpack.c.l.b16 %v1177
        %v1186 = vpack.c.b16 %v1183, %v1182
        %v1187 = vpack.c.b16 %v1185, %v1184
        %v1191 = vsel %vm781, %v1172, 0
        %1193 = vmatprep.subr.bf16.mxu0 0
        %1194 = vmatpush1.bf16.msra.mxu0 %v1186
        %1195 = vmatprep.subr.bf16.mxu0 0
        %1196 = vmatpush1.bf16.msra.mxu0 %v1187
        %1197 = vmatprep.subr.bf16.mxu0 0
        %1198 = vmatpush1.bf16.msra.mxu0 0
        %1199 = vmatprep.subr.bf16.mxu0 0
        %1200 = vmatpush1.bf16.msra.mxu0 0
        %1201 = vmatprep.subr.bf16.mxu0 0
        %1202 = vmatpush1.bf16.msra.mxu0 0
        %1203 = vmatprep.subr.bf16.mxu0 0
        %1204 = vmatpush1.bf16.msra.mxu0 0
        %1205 = vmatprep.subr.bf16.mxu0 0
        %1206 = vmatpush1.bf16.msra.mxu0 0
        %1207 = vmatprep.subr.bf16.mxu0 0
        %1208 = vmatpush1.bf16.msra.mxu0 0
        %1209 = vmatprep.subr.bf16.mxu0 0
        %1210 = vmatpush1.bf16.msra.mxu0 0
        %1211 = vmatprep.subr.bf16.mxu0 0
        %1212 = vmatpush1.bf16.msra.mxu0 0
        %1213 = vmatprep.subr.bf16.mxu0 0
        %1214 = vmatpush1.bf16.msra.mxu0 0
        %1215 = vmatprep.subr.bf16.mxu0 0
        %1216 = vmatpush1.bf16.msra.mxu0 0
        %1217 = vmatprep.subr.bf16.mxu0 0
        %1218 = vmatpush1.bf16.msra.mxu0 0
        %1219 = vmatprep.subr.bf16.mxu0 0
        %1220 = vmatpush1.bf16.msra.mxu0 0
        %1221 = vmatprep.subr.bf16.mxu0 0
        %1222 = vmatpush1.bf16.msra.mxu0 0
        %1223 = vmatprep.subr.bf16.mxu0 0
        %1224 = vmatpush1.bf16.msra.mxu0 0
        %1225 = vmatprep.mubr.bf16.mxu0 0
        %1226 = vmatmul.mubr.bf16.gmra.mrb[0].mxu0 %v1191
        %v1227 = vpop.f32.mrb[0].mxu0
        %v1228 = vadd.f32 0.0, %v1227
        %v1229 = vpop.f32.mrb[0].mxu0
        %v1230 = vpop.f32.mrb[0].mxu0
        %v1231 = vpop.f32.mrb[0].mxu0
        %1232 = vdwg.mxu0
        %v1237 = vunpack.c.l.b16 %v1004
        %v1238 = vunpack.c.l.b16 %v1005
        %v1239 = vunpack.c.l.b16 %v1006
        %v1240 = vunpack.c.l.b16 %v1007
        %v1241 = vpack.c.b16 %v1238, %v1237
        %v1242 = vpack.c.b16 %v1240, %v1239
        %v1246 = vsel %vm781, %v1003, 0
        %1248 = vmatprep.subr.bf16.mxu0 0
        %1249 = vmatpush1.bf16.msra.mxu0 %v1241
        %1250 = vmatprep.subr.bf16.mxu0 0
        %1251 = vmatpush1.bf16.msra.mxu0 %v1242
        %1252 = vmatprep.subr.bf16.mxu0 0
        %1253 = vmatpush1.bf16.msra.mxu0 0
        %1254 = vmatprep.subr.bf16.mxu0 0
        %1255 = vmatpush1.bf16.msra.mxu0 0
        %1256 = vmatprep.subr.bf16.mxu0 0
        %1257 = vmatpush1.bf16.msra.mxu0 0
        %1258 = vmatprep.subr.bf16.mxu0 0
        %1259 = vmatpush1.bf16.msra.mxu0 0
        %1260 = vmatprep.subr.bf16.mxu0 0
        %1261 = vmatpush1.bf16.msra.mxu0 0
        %1262 = vmatprep.subr.bf16.mxu0 0
        %1263 = vmatpush1.bf16.msra.mxu0 0
        %1264 = vmatprep.subr.bf16.mxu0 0
        %1265 = vmatpush1.bf16.msra.mxu0 0
        %1266 = vmatprep.subr.bf16.mxu0 0
        %1267 = vmatpush1.bf16.msra.mxu0 0
        %1268 = vmatprep.subr.bf16.mxu0 0
        %1269 = vmatpush1.bf16.msra.mxu0 0
        %1270 = vmatprep.subr.bf16.mxu0 0
        %1271 = vmatpush1.bf16.msra.mxu0 0
        %1272 = vmatprep.subr.bf16.mxu0 0
        %1273 = vmatpush1.bf16.msra.mxu0 0
        %1274 = vmatprep.subr.bf16.mxu0 0
        %1275 = vmatpush1.bf16.msra.mxu0 0
        %1276 = vmatprep.subr.bf16.mxu0 0
        %1277 = vmatpush1.bf16.msra.mxu0 0
        %1278 = vmatprep.subr.bf16.mxu0 0
        %1279 = vmatpush1.bf16.msra.mxu0 0
        %1280 = vmatprep.mubr.bf16.mxu0 0
        %1281 = vmatmul.mubr.bf16.gmra.mrb[0].mxu0 %v1246
        %v1282 = vpop.f32.mrb[0].mxu0
        %v1283 = vadd.f32 %v1228, %v1282
        %v1284 = vpop.f32.mrb[0].mxu0
        %v1285 = vpop.f32.mrb[0].mxu0
        %v1286 = vpop.f32.mrb[0].mxu0
        %1287 = vdwg.mxu0
        %s1288 = scalar_lea.vmem %s5, 32
        %v1289 = vld [vmem:[%s1288] sm:$0xf]
        %v1290 = vld [vmem:[%s1288 + $0x4] sm:$0xf]
        %v1291 = vld [vmem:[%s1288 + $0x8] sm:$0xf]
        %v1292 = vld [vmem:[%s1288 + $0xc] sm:$0xf]
        %s1293 = scalar_lea.vmem [#allocation7], 2
        %v1294 = vld [vmem:[%s1293] sm:$0x1]
        %v1296 = vlaneseq
        %v1297 = vshrl.u32 %v1296, 7
        %v1298 = vsub.s32 0, %v1297
        %v1299 = vrot.slane %v1294, %v1298
        %v1305 = vunpack.c.l.b16 %v1289
        %v1306 = vunpack.c.l.b16 %v1290
        %v1307 = vunpack.c.l.b16 %v1291
        %v1308 = vunpack.c.l.b16 %v1292
        %v1309 = vpack.c.b16 %v1306, %v1305
        %v1310 = vpack.c.b16 %v1308, %v1307
        %1313 = vmatprep.subr.bf16.mxu0 0
        %1314 = vmatpush1.bf16.msra.mxu0 %v1309
        %1315 = vmatprep.subr.bf16.mxu0 0
        %1316 = vmatpush1.bf16.msra.mxu0 %v1310
        %1317 = vmatprep.subr.bf16.mxu0 0
        %1318 = vmatpush1.bf16.msra.mxu0 0
        %1319 = vmatprep.subr.bf16.mxu0 0
        %1320 = vmatpush1.bf16.msra.mxu0 0
        %1321 = vmatprep.subr.bf16.mxu0 0
        %1322 = vmatpush1.bf16.msra.mxu0 0
        %1323 = vmatprep.subr.bf16.mxu0 0
        %1324 = vmatpush1.bf16.msra.mxu0 0
        %1325 = vmatprep.subr.bf16.mxu0 0
        %1326 = vmatpush1.bf16.msra.mxu0 0
        %1327 = vmatprep.subr.bf16.mxu0 0
        %1328 = vmatpush1.bf16.msra.mxu0 0
        %1329 = vmatprep.subr.bf16.mxu0 0
        %1330 = vmatpush1.bf16.msra.mxu0 0
        %1331 = vmatprep.subr.bf16.mxu0 0
        %1332 = vmatpush1.bf16.msra.mxu0 0
        %1333 = vmatprep.subr.bf16.mxu0 0
        %1334 = vmatpush1.bf16.msra.mxu0 0
        %1335 = vmatprep.subr.bf16.mxu0 0
        %1336 = vmatpush1.bf16.msra.mxu0 0
        %1337 = vmatprep.subr.bf16.mxu0 0
        %1338 = vmatpush1.bf16.msra.mxu0 0
        %1339 = vmatprep.subr.bf16.mxu0 0
        %1340 = vmatpush1.bf16.msra.mxu0 0
        %1341 = vmatprep.subr.bf16.mxu0 0
        %1342 = vmatpush1.bf16.msra.mxu0 0
        %1343 = vmatprep.subr.bf16.mxu0 0
        %1344 = vmatpush1.bf16.msra.mxu0 0
        %1345 = vmatprep.mubr.bf16.mxu0 0
        %1346 = vmatmul.mubr.bf16.gmra.mrb[0].mxu0 %v852
        %v1347 = vpop.f32.mrb[0].mxu0
        %v1348 = vadd.f32 %v1299, %v1347
        %v1349 = vpop.f32.mrb[0].mxu0
        %v1350 = vpop.f32.mrb[0].mxu0
        %v1351 = vpop.f32.mrb[0].mxu0
        %1352 = vdwg.mxu0
        %v1353 = vpack.c.bf16 %v1348, %v1348
        %v1355 = vsel %vm781, %v1353, 0
        %1357 = vmatprep.subr.bf16.mxu0 0
        %1358 = vmatpush1.bf16.xpose.msra.mxu0 %v852
        %1359 = vmatprep.subr.bf16.mxu0 0
        %1360 = vmatpush1.bf16.xpose.msra.mxu0 0
        %1361 = vmatprep.subr.bf16.mxu0 0
        %1362 = vmatpush1.bf16.xpose.msra.mxu0 0
        %1363 = vmatprep.subr.bf16.mxu0 0
        %1364 = vmatpush1.bf16.xpose.msra.mxu0 0
        %1365 = vmatprep.subr.bf16.mxu0 0
        %1366 = vmatpush1.bf16.xpose.msra.mxu0 0
        %1367 = vmatprep.subr.bf16.mxu0 0
        %1368 = vmatpush1.bf16.xpose.msra.mxu0 0
        %1369 = vmatprep.subr.bf16.mxu0 0
        %1370 = vmatpush1.bf16.xpose.msra.mxu0 0
        %1371 = vmatprep.subr.bf16.mxu0 0
        %1372 = vmatpush1.bf16.xpose.msra.mxu0 0
        %1373 = vmatprep.subr.bf16.mxu0 0
        %1374 = vmatpush1.bf16.xpose.msra.mxu0 0
        %1375 = vmatprep.subr.bf16.mxu0 0
        %1376 = vmatpush1.bf16.xpose.msra.mxu0 0
        %1377 = vmatprep.subr.bf16.mxu0 0
        %1378 = vmatpush1.bf16.xpose.msra.mxu0 0
        %1379 = vmatprep.subr.bf16.mxu0 0
        %1380 = vmatpush1.bf16.xpose.msra.mxu0 0
        %1381 = vmatprep.subr.bf16.mxu0 0
        %1382 = vmatpush1.bf16.xpose.msra.mxu0 0
        %1383 = vmatprep.subr.bf16.mxu0 0
        %1384 = vmatpush1.bf16.xpose.msra.mxu0 0
        %1385 = vmatprep.subr.bf16.mxu0 0
        %1386 = vmatpush1.bf16.xpose.msra.mxu0 0
        %1387 = vmatprep.subr.bf16.mxu0 0
        %1388 = vmatpush1.bf16.xpose.msra.mxu0 0
        %1389 = vmatprep.mubr.bf16.mxu0 0
        %1390 = vmatmul.mubr.bf16.gmra.mrb[0].mxu0 %v1355
        %v1391 = vpop.f32.mrb[0].mxu0
        %v1392 = vadd.f32 %v899, %v1391
        %v1393 = vpop.f32.mrb[0].mxu0
        %v1394 = vpop.f32.mrb[0].mxu0
        %v1395 = vpop.f32.mrb[0].mxu0
        %1396 = vdwg.mxu0
        %v1397 = vsel %vm944, %v1392, -inf
        %1398 = vmax.xlane.f32.xlu0 %v1397
        %v1399 = vpop.xlane.xlu0 %1398
        %v1400 = vsub.f32 %v1392, %v1399
        %v1401 = vmul.f32 %v1400, 1.442695
        %v1402 = vpow.pop %v1401
        %v1403 = vsel %vm944, %v1402, 0.0
        %1404 = vadd.xlane.f32.xlu0 %v1403
        %v1405 = vpop.xlane.xlu0 %1404
        %v1406 = vrcp.pop %v1405
        %v1407 = vmul.f32 %v1402, %v1406
        %v1408 = vpack.c.bf16 %v1407, %v1407
        %v1410 = vsel %vm944, %v1408, 0
        %1412 = vmatprep.subr.bf16.mxu0 0
        %1413 = vmatpush1.bf16.msra.mxu0 %v961
        %1414 = vmatprep.subr.bf16.mxu0 0
        %1415 = vmatpush1.bf16.msra.mxu0 0
        %1416 = vmatprep.subr.bf16.mxu0 0
        %1417 = vmatpush1.bf16.msra.mxu0 0
        %1418 = vmatprep.subr.bf16.mxu0 0
        %1419 = vmatpush1.bf16.msra.mxu0 0
        %1420 = vmatprep.subr.bf16.mxu0 0
        %1421 = vmatpush1.bf16.msra.mxu0 0
        %1422 = vmatprep.subr.bf16.mxu0 0
        %1423 = vmatpush1.bf16.msra.mxu0 0
        %1424 = vmatprep.subr.bf16.mxu0 0
        %1425 = vmatpush1.bf16.msra.mxu0 0
        %1426 = vmatprep.subr.bf16.mxu0 0
        %1427 = vmatpush1.bf16.msra.mxu0 0
        %1428 = vmatprep.subr.bf16.mxu0 0
        %1429 = vmatpush1.bf16.msra.mxu0 0
        %1430 = vmatprep.subr.bf16.mxu0 0
        %1431 = vmatpush1.bf16.msra.mxu0 0
        %1432 = vmatprep.subr.bf16.mxu0 0
        %1433 = vmatpush1.bf16.msra.mxu0 0
        %1434 = vmatprep.subr.bf16.mxu0 0
        %1435 = vmatpush1.bf16.msra.mxu0 0
        %1436 = vmatprep.subr.bf16.mxu0 0
        %1437 = vmatpush1.bf16.msra.mxu0 0
        %1438 = vmatprep.subr.bf16.mxu0 0
        %1439 = vmatpush1.bf16.msra.mxu0 0
        %1440 = vmatprep.subr.bf16.mxu0 0
        %1441 = vmatpush1.bf16.msra.mxu0 0
        %1442 = vmatprep.subr.bf16.mxu0 0
        %1443 = vmatpush1.bf16.msra.mxu0 0
        %1444 = vmatprep.mubr.bf16.mxu0 0
        %1445 = vmatmul.mubr.bf16.gmra.mrb[0].mxu0 %v1410
        %v1446 = vpop.f32.mrb[0].mxu0
        %v1447 = vadd.f32 0.0, %v1446
        %v1448 = vpop.f32.mrb[0].mxu0
        %v1449 = vpop.f32.mrb[0].mxu0
        %v1450 = vpop.f32.mrb[0].mxu0
        %1451 = vdwg.mxu0
        %v1452 = vpack.c.bf16 %v1447, %v1447
        %s1453 = scalar_lea.vmem %s7, 32
        %v1454 = vld [vmem:[%s1453] sm:$0xf]
        %v1455 = vld [vmem:[%s1453 + $0x4] sm:$0xf]
        %v1456 = vld [vmem:[%s1453 + $0x8] sm:$0xf]
        %v1457 = vld [vmem:[%s1453 + $0xc] sm:$0xf]
        %v1462 = vunpack.c.l.b16 %v1454
        %v1463 = vunpack.c.l.b16 %v1455
        %v1464 = vunpack.c.l.b16 %v1456
        %v1465 = vunpack.c.l.b16 %v1457
        %v1466 = vpack.c.b16 %v1463, %v1462
        %v1467 = vpack.c.b16 %v1465, %v1464
        %v1471 = vsel %vm781, %v1452, 0
        %1473 = vmatprep.subr.bf16.mxu0 0
        %1474 = vmatpush1.bf16.msra.mxu0 %v1466
        %1475 = vmatprep.subr.bf16.mxu0 0
        %1476 = vmatpush1.bf16.msra.mxu0 %v1467
        %1477 = vmatprep.subr.bf16.mxu0 0
        %1478 = vmatpush1.bf16.msra.mxu0 0
        %1479 = vmatprep.subr.bf16.mxu0 0
        %1480 = vmatpush1.bf16.msra.mxu0 0
        %1481 = vmatprep.subr.bf16.mxu0 0
        %1482 = vmatpush1.bf16.msra.mxu0 0
        %1483 = vmatprep.subr.bf16.mxu0 0
        %1484 = vmatpush1.bf16.msra.mxu0 0
        %1485 = vmatprep.subr.bf16.mxu0 0
        %1486 = vmatpush1.bf16.msra.mxu0 0
        %1487 = vmatprep.subr.bf16.mxu0 0
        %1488 = vmatpush1.bf16.msra.mxu0 0
        %1489 = vmatprep.subr.bf16.mxu0 0
        %1490 = vmatpush1.bf16.msra.mxu0 0
        %1491 = vmatprep.subr.bf16.mxu0 0
        %1492 = vmatpush1.bf16.msra.mxu0 0
        %1493 = vmatprep.subr.bf16.mxu0 0
        %1494 = vmatpush1.bf16.msra.mxu0 0
        %1495 = vmatprep.subr.bf16.mxu0 0
        %1496 = vmatpush1.bf16.msra.mxu0 0
        %1497 = vmatprep.subr.bf16.mxu0 0
        %1498 = vmatpush1.bf16.msra.mxu0 0
        %1499 = vmatprep.subr.bf16.mxu0 0
        %1500 = vmatpush1.bf16.msra.mxu0 0
        %1501 = vmatprep.subr.bf16.mxu0 0
        %1502 = vmatpush1.bf16.msra.mxu0 0
        %1503 = vmatprep.subr.bf16.mxu0 0
        %1504 = vmatpush1.bf16.msra.mxu0 0
        %1505 = vmatprep.mubr.bf16.mxu0 0
        %1506 = vmatmul.mubr.bf16.gmra.mrb[0].mxu0 %v1471
        %v1507 = vpop.f32.mrb[0].mxu0
        %v1508 = vadd.f32 0.0, %v1507
        %v1509 = vpop.f32.mrb[0].mxu0
        %v1510 = vpop.f32.mrb[0].mxu0
        %v1511 = vpop.f32.mrb[0].mxu0
        %1512 = vdwg.mxu0
        %v1513 = vadd.f32 %v1283, %v1508
        %s1514 = scalar_lea.vmem %s5, 48
        %v1515 = vld [vmem:[%s1514] sm:$0xf]
        %v1516 = vld [vmem:[%s1514 + $0x4] sm:$0xf]
        %v1517 = vld [vmem:[%s1514 + $0x8] sm:$0xf]
        %v1518 = vld [vmem:[%s1514 + $0xc] sm:$0xf]
        %s1519 = scalar_lea.vmem [#allocation7], 3
        %v1520 = vld [vmem:[%s1519] sm:$0x1]
        %v1522 = vlaneseq
        %v1523 = vshrl.u32 %v1522, 7
        %v1524 = vsub.s32 0, %v1523
        %v1525 = vrot.slane %v1520, %v1524
        %v1531 = vunpack.c.l.b16 %v1515
        %v1532 = vunpack.c.l.b16 %v1516
        %v1533 = vunpack.c.l.b16 %v1517
        %v1534 = vunpack.c.l.b16 %v1518
        %v1535 = vpack.c.b16 %v1532, %v1531
        %v1536 = vpack.c.b16 %v1534, %v1533
        %1539 = vmatprep.subr.bf16.mxu0 0
        %1540 = vmatpush1.bf16.msra.mxu0 %v1535
        %1541 = vmatprep.subr.bf16.mxu0 0
        %1542 = vmatpush1.bf16.msra.mxu0 %v1536
        %1543 = vmatprep.subr.bf16.mxu0 0
        %1544 = vmatpush1.bf16.msra.mxu0 0
        %1545 = vmatprep.subr.bf16.mxu0 0
        %1546 = vmatpush1.bf16.msra.mxu0 0
        %1547 = vmatprep.subr.bf16.mxu0 0
        %1548 = vmatpush1.bf16.msra.mxu0 0
        %1549 = vmatprep.subr.bf16.mxu0 0
        %1550 = vmatpush1.bf16.msra.mxu0 0
        %1551 = vmatprep.subr.bf16.mxu0 0
        %1552 = vmatpush1.bf16.msra.mxu0 0
        %1553 = vmatprep.subr.bf16.mxu0 0
        %1554 = vmatpush1.bf16.msra.mxu0 0
        %1555 = vmatprep.subr.bf16.mxu0 0
        %1556 = vmatpush1.bf16.msra.mxu0 0
        %1557 = vmatprep.subr.bf16.mxu0 0
        %1558 = vmatpush1.bf16.msra.mxu0 0
        %1559 = vmatprep.subr.bf16.mxu0 0
        %1560 = vmatpush1.bf16.msra.mxu0 0
        %1561 = vmatprep.subr.bf16.mxu0 0
        %1562 = vmatpush1.bf16.msra.mxu0 0
        %1563 = vmatprep.subr.bf16.mxu0 0
        %1564 = vmatpush1.bf16.msra.mxu0 0
        %1565 = vmatprep.subr.bf16.mxu0 0
        %1566 = vmatpush1.bf16.msra.mxu0 0
        %1567 = vmatprep.subr.bf16.mxu0 0
        %1568 = vmatpush1.bf16.msra.mxu0 0
        %1569 = vmatprep.subr.bf16.mxu0 0
        %1570 = vmatpush1.bf16.msra.mxu0 0
        %1571 = vmatprep.mubr.bf16.mxu0 0
        %1572 = vmatmul.mubr.bf16.gmra.mrb[0].mxu0 %v852
        %v1573 = vpop.f32.mrb[0].mxu0
        %v1574 = vadd.f32 %v1525, %v1573
        %v1575 = vpop.f32.mrb[0].mxu0
        %v1576 = vpop.f32.mrb[0].mxu0
        %v1577 = vpop.f32.mrb[0].mxu0
        %1578 = vdwg.mxu0
        %v1579 = vpack.c.bf16 %v1574, %v1574
        %v1581 = vsel %vm781, %v1579, 0
        %1583 = vmatprep.subr.bf16.mxu0 0
        %1584 = vmatpush1.bf16.xpose.msra.mxu0 %v852
        %1585 = vmatprep.subr.bf16.mxu0 0
        %1586 = vmatpush1.bf16.xpose.msra.mxu0 0
        %1587 = vmatprep.subr.bf16.mxu0 0
        %1588 = vmatpush1.bf16.xpose.msra.mxu0 0
        %1589 = vmatprep.subr.bf16.mxu0 0
        %1590 = vmatpush1.bf16.xpose.msra.mxu0 0
        %1591 = vmatprep.subr.bf16.mxu0 0
        %1592 = vmatpush1.bf16.xpose.msra.mxu0 0
        %1593 = vmatprep.subr.bf16.mxu0 0
        %1594 = vmatpush1.bf16.xpose.msra.mxu0 0
        %1595 = vmatprep.subr.bf16.mxu0 0
        %1596 = vmatpush1.bf16.xpose.msra.mxu0 0
        %1597 = vmatprep.subr.bf16.mxu0 0
        %1598 = vmatpush1.bf16.xpose.msra.mxu0 0
        %1599 = vmatprep.subr.bf16.mxu0 0
        %1600 = vmatpush1.bf16.xpose.msra.mxu0 0
        %1601 = vmatprep.subr.bf16.mxu0 0
        %1602 = vmatpush1.bf16.xpose.msra.mxu0 0
        %1603 = vmatprep.subr.bf16.mxu0 0
        %1604 = vmatpush1.bf16.xpose.msra.mxu0 0
        %1605 = vmatprep.subr.bf16.mxu0 0
        %1606 = vmatpush1.bf16.xpose.msra.mxu0 0
        %1607 = vmatprep.subr.bf16.mxu0 0
        %1608 = vmatpush1.bf16.xpose.msra.mxu0 0
        %1609 = vmatprep.subr.bf16.mxu0 0
        %1610 = vmatpush1.bf16.xpose.msra.mxu0 0
        %1611 = vmatprep.subr.bf16.mxu0 0
        %1612 = vmatpush1.bf16.xpose.msra.mxu0 0
        %1613 = vmatprep.subr.bf16.mxu0 0
        %1614 = vmatpush1.bf16.xpose.msra.mxu0 0
        %1615 = vmatprep.mubr.bf16.mxu0 0
        %1616 = vmatmul.mubr.bf16.gmra.mrb[0].mxu0 %v1581
        %v1617 = vpop.f32.mrb[0].mxu0
        %v1618 = vadd.f32 %v899, %v1617
        %v1619 = vpop.f32.mrb[0].mxu0
        %v1620 = vpop.f32.mrb[0].mxu0
        %v1621 = vpop.f32.mrb[0].mxu0
        %1622 = vdwg.mxu0
        %v1623 = vsel %vm944, %v1618, -inf
        %1624 = vmax.xlane.f32.xlu0 %v1623
        %v1625 = vpop.xlane.xlu0 %1624
        %v1626 = vsub.f32 %v1618, %v1625
        %v1627 = vmul.f32 %v1626, 1.442695
        %v1628 = vpow.pop %v1627
        %v1629 = vsel %vm944, %v1628, 0.0
        %1630 = vadd.xlane.f32.xlu0 %v1629
        %v1631 = vpop.xlane.xlu0 %1630
        %v1632 = vrcp.pop %v1631
        %v1633 = vmul.f32 %v1628, %v1632
        %v1634 = vpack.c.bf16 %v1633, %v1633
        %v1636 = vsel %vm944, %v1634, 0
        %1638 = vmatprep.subr.bf16.mxu0 0
        %1639 = vmatpush1.bf16.msra.mxu0 %v961
        %1640 = vmatprep.subr.bf16.mxu0 0
        %1641 = vmatpush1.bf16.msra.mxu0 0
        %1642 = vmatprep.subr.bf16.mxu0 0
        %1643 = vmatpush1.bf16.msra.mxu0 0
        %1644 = vmatprep.subr.bf16.mxu0 0
        %1645 = vmatpush1.bf16.msra.mxu0 0
        %1646 = vmatprep.subr.bf16.mxu0 0
        %1647 = vmatpush1.bf16.msra.mxu0 0
        %1648 = vmatprep.subr.bf16.mxu0 0
        %1649 = vmatpush1.bf16.msra.mxu0 0
        %1650 = vmatprep.subr.bf16.mxu0 0
        %1651 = vmatpush1.bf16.msra.mxu0 0
        %1652 = vmatprep.subr.bf16.mxu0 0
        %1653 = vmatpush1.bf16.msra.mxu0 0
        %1654 = vmatprep.subr.bf16.mxu0 0
        %1655 = vmatpush1.bf16.msra.mxu0 0
        %1656 = vmatprep.subr.bf16.mxu0 0
        %1657 = vmatpush1.bf16.msra.mxu0 0
        %1658 = vmatprep.subr.bf16.mxu0 0
        %1659 = vmatpush1.bf16.msra.mxu0 0
        %1660 = vmatprep.subr.bf16.mxu0 0
        %1661 = vmatpush1.bf16.msra.mxu0 0
        %1662 = vmatprep.subr.bf16.mxu0 0
        %1663 = vmatpush1.bf16.msra.mxu0 0
        %1664 = vmatprep.subr.bf16.mxu0 0
        %1665 = vmatpush1.bf16.msra.mxu0 0
        %1666 = vmatprep.subr.bf16.mxu0 0
        %1667 = vmatpush1.bf16.msra.mxu0 0
        %1668 = vmatprep.subr.bf16.mxu0 0
        %1669 = vmatpush1.bf16.msra.mxu0 0
        %1670 = vmatprep.mubr.bf16.mxu0 0
        %1671 = vmatmul.mubr.bf16.gmra.mrb[0].mxu0 %v1636
        %v1672 = vpop.f32.mrb[0].mxu0
        %v1673 = vadd.f32 0.0, %v1672
        %v1674 = vpop.f32.mrb[0].mxu0
        %v1675 = vpop.f32.mrb[0].mxu0
        %v1676 = vpop.f32.mrb[0].mxu0
        %1677 = vdwg.mxu0
        %v1678 = vpack.c.bf16 %v1673, %v1673
        %s1679 = scalar_lea.vmem %s7, 48
        %v1680 = vld [vmem:[%s1679] sm:$0xf]
        %v1681 = vld [vmem:[%s1679 + $0x4] sm:$0xf]
        %v1682 = vld [vmem:[%s1679 + $0x8] sm:$0xf]
        %v1683 = vld [vmem:[%s1679 + $0xc] sm:$0xf]
        %v1688 = vunpack.c.l.b16 %v1680
        %v1689 = vunpack.c.l.b16 %v1681
        %v1690 = vunpack.c.l.b16 %v1682
        %v1691 = vunpack.c.l.b16 %v1683
        %v1692 = vpack.c.b16 %v1689, %v1688
        %v1693 = vpack.c.b16 %v1691, %v1690
        %v1697 = vsel %vm781, %v1678, 0
        %1699 = vmatprep.subr.bf16.mxu0 0
        %1700 = vmatpush1.bf16.msra.mxu0 %v1692
        %1701 = vmatprep.subr.bf16.mxu0 0
        %1702 = vmatpush1.bf16.msra.mxu0 %v1693
        %1703 = vmatprep.subr.bf16.mxu0 0
        %1704 = vmatpush1.bf16.msra.mxu0 0
        %1705 = vmatprep.subr.bf16.mxu0 0
        %1706 = vmatpush1.bf16.msra.mxu0 0
        %1707 = vmatprep.subr.bf16.mxu0 0
        %1708 = vmatpush1.bf16.msra.mxu0 0
        %1709 = vmatprep.subr.bf16.mxu0 0
        %1710 = vmatpush1.bf16.msra.mxu0 0
        %1711 = vmatprep.subr.bf16.mxu0 0
        %1712 = vmatpush1.bf16.msra.mxu0 0
        %1713 = vmatprep.subr.bf16.mxu0 0
        %1714 = vmatpush1.bf16.msra.mxu0 0
        %1715 = vmatprep.subr.bf16.mxu0 0
        %1716 = vmatpush1.bf16.msra.mxu0 0
        %1717 = vmatprep.subr.bf16.mxu0 0
        %1718 = vmatpush1.bf16.msra.mxu0 0
        %1719 = vmatprep.subr.bf16.mxu0 0
        %1720 = vmatpush1.bf16.msra.mxu0 0
        %1721 = vmatprep.subr.bf16.mxu0 0
        %1722 = vmatpush1.bf16.msra.mxu0 0
        %1723 = vmatprep.subr.bf16.mxu0 0
        %1724 = vmatpush1.bf16.msra.mxu0 0
        %1725 = vmatprep.subr.bf16.mxu0 0
        %1726 = vmatpush1.bf16.msra.mxu0 0
        %1727 = vmatprep.subr.bf16.mxu0 0
        %1728 = vmatpush1.bf16.msra.mxu0 0
        %1729 = vmatprep.subr.bf16.mxu0 0
        %1730 = vmatpush1.bf16.msra.mxu0 0
        %1731 = vmatprep.mubr.bf16.mxu0 0
        %1732 = vmatmul.mubr.bf16.gmra.mrb[0].mxu0 %v1697
        %v1733 = vpop.f32.mrb[0].mxu0
        %v1734 = vadd.f32 0.0, %v1733
        %v1735 = vpop.f32.mrb[0].mxu0
        %v1736 = vpop.f32.mrb[0].mxu0
        %v1737 = vpop.f32.mrb[0].mxu0
        %1738 = vdwg.mxu0
        %v1739 = vadd.f32 %v1513, %v1734
        %v1740 = vld [vmem:[%s8] sm:$0x1]
        %v1742 = vlaneseq
        %v1743 = vshrl.u32 %v1742, 7
        %v1744 = vsub.s32 0, %v1743
        %v1745 = vrot.slane %v1740, %v1744
        %v1747 = vadd.f32 %v1739, %v1745
        %v1748 = vadd.f32 %v826, %v1747
        %v1749 = vld [vmem:[#allocation8] sm:$0x1]
        %v1750 = vld [vmem:[#allocation10] sm:$0x1]
        %v1751 = vsel %vm781, %v1748, 0.0
        %1752 = vadd.xlane.f32.xlu0 %v1751
        %v1753 = vpop.xlane.xlu0 %1752
        %v1754 = vrcp.pop 32.0
        %v1755 = vmul.f32 %v1753, %v1754
        %v1756 = vsub.f32 %v1748, %v1755
        %v1757 = vmul.f32 %v1756, %v1756
        %v1758 = vsel %vm781, %v1757, 0.0
        %1759 = vadd.xlane.f32.xlu0 %v1758
        %v1760 = vpop.xlane.xlu0 %1759
        %v1761 = vmul.f32 %v1760, %v1754
        %v1762 = vadd.f32 %v1761, 1e-05
        %v1763 = vrsqrt.pop %v1762
        %v1764 = vmul.f32 %v1756, %v1763
        %v1766 = vlaneseq
        %v1767 = vshrl.u32 %v1766, 7
        %v1768 = vsub.s32 0, %v1767
        %v1769 = vrot.slane %v1749, %v1768
        %v1771 = vmul.f32 %v1764, %v1769
        %v1773 = vlaneseq
        %v1774 = vshrl.u32 %v1773, 7
        %v1775 = vsub.s32 0, %v1774
        %v1776 = vrot.slane %v1750, %v1775
        %v1778 = vadd.f32 %v1771, %v1776
        %v1779 = vpack.c.bf16 %v1778, %v1778
        %v1780 = vld [vmem:[%s11] sm:$0xf]
        %v1781 = vld [vmem:[%s11 + $0x4] sm:$0xf]
        %v1782 = vld [vmem:[%s11 + $0x8] sm:$0xf]
        %v1783 = vld [vmem:[%s11 + $0xc] sm:$0xf]
        %v1784 = vld [vmem:[#allocation11] sm:$0x1]
        %v1786 = vlaneseq
        %v1787 = vshrl.u32 %v1786, 7
        %v1788 = vsub.s32 0, %v1787
        %v1789 = vrot.slane %v1784, %v1788
        %v1795 = vunpack.c.l.b16 %v1780
        %v1796 = vunpack.c.l.b16 %v1781
        %v1797 = vunpack.c.l.b16 %v1782
        %v1798 = vunpack.c.l.b16 %v1783
        %v1799 = vpack.c.b16 %v1796, %v1795
        %v1800 = vpack.c.b16 %v1798, %v1797
        %v1804 = vsel %vm781, %v1779, 0
        %1806 = vmatprep.subr.bf16.mxu0 0
        %1807 = vmatpush1.bf16.msra.mxu0 %v1799
        %1808 = vmatprep.subr.bf16.mxu0 0
        %1809 = vmatpush1.bf16.msra.mxu0 %v1800
        %1810 = vmatprep.subr.bf16.mxu0 0
        %1811 = vmatpush1.bf16.msra.mxu0 0
        %1812 = vmatprep.subr.bf16.mxu0 0
        %1813 = vmatpush1.bf16.msra.mxu0 0
        %1814 = vmatprep.subr.bf16.mxu0 0
        %1815 = vmatpush1.bf16.msra.mxu0 0
        %1816 = vmatprep.subr.bf16.mxu0 0
        %1817 = vmatpush1.bf16.msra.mxu0 0
        %1818 = vmatprep.subr.bf16.mxu0 0
        %1819 = vmatpush1.bf16.msra.mxu0 0
        %1820 = vmatprep.subr.bf16.mxu0 0
        %1821 = vmatpush1.bf16.msra.mxu0 0
        %1822 = vmatprep.subr.bf16.mxu0 0
        %1823 = vmatpush1.bf16.msra.mxu0 0
        %1824 = vmatprep.subr.bf16.mxu0 0
        %1825 = vmatpush1.bf16.msra.mxu0 0
        %1826 = vmatprep.subr.bf16.mxu0 0
        %1827 = vmatpush1.bf16.msra.mxu0 0
        %1828 = vmatprep.subr.bf16.mxu0 0
        %1829 = vmatpush1.bf16.msra.mxu0 0
        %1830 = vmatprep.subr.bf16.mxu0 0
        %1831 = vmatpush1.bf16.msra.mxu0 0
        %1832 = vmatprep.subr.bf16.mxu0 0
        %1833 = vmatpush1.bf16.msra.mxu0 0
        %1834 = vmatprep.subr.bf16.mxu0 0
        %1835 = vmatpush1.bf16.msra.mxu0 0
        %1836 = vmatprep.subr.bf16.mxu0 0
        %1837 = vmatpush1.bf16.msra.mxu0 0
        %1838 = vmatprep.mubr.bf16.mxu0 0
        %1839 = vmatmul.mubr.bf16.gmra.mrb[0].mxu0 %v1804
        %v1840 = vpop.f32.mrb[0].mxu0
        %v1841 = vadd.f32 %v1789, %v1840
        %v1842 = vpop.f32.mrb[0].mxu0
        %v1843 = vpop.f32.mrb[0].mxu0
        %v1844 = vpop.f32.mrb[0].mxu0
        %1845 = vdwg.mxu0
        %v1846 = vmax.f32 %v1841, 0.0
        %v1847 = vpack.c.bf16 %v1846, %v1846
        %v1848 = vld [vmem:[%s13] sm:$0xf]
        %v1849 = vld [vmem:[%s13 + $0x4] sm:$0xf]
        %v1850 = vld [vmem:[%s13 + $0x8] sm:$0xf]
        %v1851 = vld [vmem:[%s13 + $0xc] sm:$0xf]
        %v1852 = vld [vmem:[%s13 + $0x10] sm:$0xf]
        %v1853 = vld [vmem:[%s13 + $0x14] sm:$0xf]
        %v1854 = vld [vmem:[%s13 + $0x18] sm:$0xf]
        %v1855 = vld [vmem:[%s13 + $0x1c] sm:$0xf]
        %v1856 = vld [vmem:[#allocation13] sm:$0x1]
        %v1858 = vlaneseq
        %v1859 = vshrl.u32 %v1858, 7
        %v1860 = vsub.s32 0, %v1859
        %v1861 = vrot.slane %v1856, %v1860
        %v1871 = vunpack.c.l.b16 %v1848
        %v1872 = vunpack.c.l.b16 %v1849
        %v1873 = vunpack.c.l.b16 %v1850
        %v1874 = vunpack.c.l.b16 %v1851
        %v1875 = vunpack.c.l.b16 %v1852
        %v1876 = vunpack.c.l.b16 %v1853
        %v1877 = vunpack.c.l.b16 %v1854
        %v1878 = vunpack.c.l.b16 %v1855
        %v1879 = vpack.c.b16 %v1872, %v1871
        %v1880 = vpack.c.b16 %v1874, %v1873
        %v1881 = vpack.c.b16 %v1876, %v1875
        %v1882 = vpack.c.b16 %v1878, %v1877
        %vm1887 = vcmask 523264
        %v1889 = vsel %vm1887, %v1847, 0
        %1891 = vmatprep.subr.bf16.mxu0 0
        %1892 = vmatpush1.bf16.msra.mxu0 %v1879
        %1893 = vmatprep.subr.bf16.mxu0 0
        %1894 = vmatpush1.bf16.msra.mxu0 %v1880
        %1895 = vmatprep.subr.bf16.mxu0 0
        %1896 = vmatpush1.bf16.msra.mxu0 %v1881
        %1897 = vmatprep.subr.bf16.mxu0 0
        %1898 = vmatpush1.bf16.msra.mxu0 %v1882
        %1899 = vmatprep.subr.bf16.mxu0 0
        %1900 = vmatpush1.bf16.msra.mxu0 0
        %1901 = vmatprep.subr.bf16.mxu0 0
        %1902 = vmatpush1.bf16.msra.mxu0 0
        %1903 = vmatprep.subr.bf16.mxu0 0
        %1904 = vmatpush1.bf16.msra.mxu0 0
        %1905 = vmatprep.subr.bf16.mxu0 0
        %1906 = vmatpush1.bf16.msra.mxu0 0
        %1907 = vmatprep.subr.bf16.mxu0 0
        %1908 = vmatpush1.bf16.msra.mxu0 0
        %1909 = vmatprep.subr.bf16.mxu0 0
        %1910 = vmatpush1.bf16.msra.mxu0 0
        %1911 = vmatprep.subr.bf16.mxu0 0
        %1912 = vmatpush1.bf16.msra.mxu0 0
        %1913 = vmatprep.subr.bf16.mxu0 0
        %1914 = vmatpush1.bf16.msra.mxu0 0
        %1915 = vmatprep.subr.bf16.mxu0 0
        %1916 = vmatpush1.bf16.msra.mxu0 0
        %1917 = vmatprep.subr.bf16.mxu0 0
        %1918 = vmatpush1.bf16.msra.mxu0 0
        %1919 = vmatprep.subr.bf16.mxu0 0
        %1920 = vmatpush1.bf16.msra.mxu0 0
        %1921 = vmatprep.subr.bf16.mxu0 0
        %1922 = vmatpush1.bf16.msra.mxu0 0
        %1923 = vmatprep.mubr.bf16.mxu0 0
        %1924 = vmatmul.mubr.bf16.gmra.mrb[0].mxu0 %v1889
        %v1925 = vpop.f32.mrb[0].mxu0
        %v1926 = vadd.f32 %v1861, %v1925
        %v1927 = vpop.f32.mrb[0].mxu0
        %v1928 = vpop.f32.mrb[0].mxu0
        %v1929 = vpop.f32.mrb[0].mxu0
        %1930 = vdwg.mxu0
        %v1931 = vadd.f32 %v1778, %v1926
        %v1932 = vld [vmem:[#allocation14] sm:$0x1]
        %v1933 = vld [vmem:[#allocation16] sm:$0x1]
        %v1934 = vsel %vm781, %v1931, 0.0
        %1935 = vadd.xlane.f32.xlu0 %v1934
        %v1936 = vpop.xlane.xlu0 %1935
        %v1937 = vmul.f32 %v1936, %v1754
        %v1938 = vsub.f32 %v1931, %v1937
        %v1939 = vmul.f32 %v1938, %v1938
        %v1940 = vsel %vm781, %v1939, 0.0
        %1941 = vadd.xlane.f32.xlu0 %v1940
        %v1942 = vpop.xlane.xlu0 %1941
        %v1943 = vmul.f32 %v1942, %v1754
        %v1944 = vadd.f32 %v1943, 1e-05
        %v1945 = vrsqrt.pop %v1944
        %v1946 = vmul.f32 %v1938, %v1945
        %v1948 = vlaneseq
        %v1949 = vshrl.u32 %v1948, 7
        %v1950 = vsub.s32 0, %v1949
        %v1951 = vrot.slane %v1932, %v1950
        %v1953 = vmul.f32 %v1946, %v1951
        %v1955 = vlaneseq
        %v1956 = vshrl.u32 %v1955, 7
        %v1957 = vsub.s32 0, %v1956
        %v1958 = vrot.slane %v1933, %v1957
        %v1960 = vadd.f32 %v1953, %v1958
        %v1961 = vpack.c.bf16 %v1960, %v1960
        %s1962 = scalar_lea.vmem %s5, 64
        %v1963 = vld [vmem:[%s1962] sm:$0xf]
        %v1964 = vld [vmem:[%s1962 + $0x4] sm:$0xf]
        %v1965 = vld [vmem:[%s1962 + $0x8] sm:$0xf]
        %v1966 = vld [vmem:[%s1962 + $0xc] sm:$0xf]
        %s1967 = scalar_lea.vmem [#allocation7], 4
        %v1968 = vld [vmem:[%s1967] sm:$0x1]
        %v1970 = vlaneseq
        %v1971 = vshrl.u32 %v1970, 7
        %v1972 = vsub.s32 0, %v1971
        %v1973 = vrot.slane %v1968, %v1972
        %v1979 = vunpack.c.l.b16 %v1963
        %v1980 = vunpack.c.l.b16 %v1964
        %v1981 = vunpack.c.l.b16 %v1965
        %v1982 = vunpack.c.l.b16 %v1966
        %v1983 = vpack.c.b16 %v1980, %v1979
        %v1984 = vpack.c.b16 %v1982, %v1981
        %v1988 = vsel %vm781, %v1961, 0
        %1990 = vmatprep.subr.bf16.mxu0 0
        %1991 = vmatpush1.bf16.msra.mxu0 %v1983
        %1992 = vmatprep.subr.bf16.mxu0 0
        %1993 = vmatpush1.bf16.msra.mxu0 %v1984
        %1994 = vmatprep.subr.bf16.mxu0 0
        %1995 = vmatpush1.bf16.msra.mxu0 0
        %1996 = vmatprep.subr.bf16.mxu0 0
        %1997 = vmatpush1.bf16.msra.mxu0 0
        %1998 = vmatprep.subr.bf16.mxu0 0
        %1999 = vmatpush1.bf16.msra.mxu0 0
        %2000 = vmatprep.subr.bf16.mxu0 0
        %2001 = vmatpush1.bf16.msra.mxu0 0
        %2002 = vmatprep.subr.bf16.mxu0 0
        %2003 = vmatpush1.bf16.msra.mxu0 0
        %2004 = vmatprep.subr.bf16.mxu0 0
        %2005 = vmatpush1.bf16.msra.mxu0 0
        %2006 = vmatprep.subr.bf16.mxu0 0
        %2007 = vmatpush1.bf16.msra.mxu0 0
        %2008 = vmatprep.subr.bf16.mxu0 0
        %2009 = vmatpush1.bf16.msra.mxu0 0
        %2010 = vmatprep.subr.bf16.mxu0 0
        %2011 = vmatpush1.bf16.msra.mxu0 0
        %2012 = vmatprep.subr.bf16.mxu0 0
        %2013 = vmatpush1.bf16.msra.mxu0 0
        %2014 = vmatprep.subr.bf16.mxu0 0
        %2015 = vmatpush1.bf16.msra.mxu0 0
        %2016 = vmatprep.subr.bf16.mxu0 0
        %2017 = vmatpush1.bf16.msra.mxu0 0
        %2018 = vmatprep.subr.bf16.mxu0 0
        %2019 = vmatpush1.bf16.msra.mxu0 0
        %2020 = vmatprep.subr.bf16.mxu0 0
        %2021 = vmatpush1.bf16.msra.mxu0 0
        %2022 = vmatprep.mubr.bf16.mxu0 0
        %2023 = vmatmul.mubr.bf16.gmra.mrb[0].mxu0 %v1988
        %v2024 = vpop.f32.mrb[0].mxu0
        %v2025 = vadd.f32 %v1973, %v2024
        %v2026 = vpop.f32.mrb[0].mxu0
        %v2027 = vpop.f32.mrb[0].mxu0
        %v2028 = vpop.f32.mrb[0].mxu0
        %2029 = vdwg.mxu0
        %v2030 = vpack.c.bf16 %v2025, %v2025
        %v2032 = vsel %vm781, %v2030, 0
        %2034 = vmatprep.subr.bf16.mxu0 0
        %2035 = vmatpush1.bf16.xpose.msra.mxu0 %v1988
        %2036 = vmatprep.subr.bf16.mxu0 0
        %2037 = vmatpush1.bf16.xpose.msra.mxu0 0
        %2038 = vmatprep.subr.bf16.mxu0 0
        %2039 = vmatpush1.bf16.xpose.msra.mxu0 0
        %2040 = vmatprep.subr.bf16.mxu0 0
        %2041 = vmatpush1.bf16.xpose.msra.mxu0 0
        %2042 = vmatprep.subr.bf16.mxu0 0
        %2043 = vmatpush1.bf16.xpose.msra.mxu0 0
        %2044 = vmatprep.subr.bf16.mxu0 0
        %2045 = vmatpush1.bf16.xpose.msra.mxu0 0
        %2046 = vmatprep.subr.bf16.mxu0 0
        %2047 = vmatpush1.bf16.xpose.msra.mxu0 0
        %2048 = vmatprep.subr.bf16.mxu0 0
        %2049 = vmatpush1.bf16.xpose.msra.mxu0 0
        %2050 = vmatprep.subr.bf16.mxu0 0
        %2051 = vmatpush1.bf16.xpose.msra.mxu0 0
        %2052 = vmatprep.subr.bf16.mxu0 0
        %2053 = vmatpush1.bf16.xpose.msra.mxu0 0
        %2054 = vmatprep.subr.bf16.mxu0 0
        %2055 = vmatpush1.bf16.xpose.msra.mxu0 0
        %2056 = vmatprep.subr.bf16.mxu0 0
        %2057 = vmatpush1.bf16.xpose.msra.mxu0 0
        %2058 = vmatprep.subr.bf16.mxu0 0
        %2059 = vmatpush1.bf16.xpose.msra.mxu0 0
        %2060 = vmatprep.subr.bf16.mxu0 0
        %2061 = vmatpush1.bf16.xpose.msra.mxu0 0
        %2062 = vmatprep.subr.bf16.mxu0 0
        %2063 = vmatpush1.bf16.xpose.msra.mxu0 0
        %2064 = vmatprep.subr.bf16.mxu0 0
        %2065 = vmatpush1.bf16.xpose.msra.mxu0 0
        %2066 = vmatprep.mubr.bf16.mxu0 0
        %2067 = vmatmul.mubr.bf16.gmra.mrb[0].mxu0 %v2032
        %v2068 = vpop.f32.mrb[0].mxu0
        %v2069 = vadd.f32 %v899, %v2068
        %v2070 = vpop.f32.mrb[0].mxu0
        %v2071 = vpop.f32.mrb[0].mxu0
        %v2072 = vpop.f32.mrb[0].mxu0
        %2073 = vdwg.mxu0
        %v2074 = vsel %vm944, %v2069, -inf
        %2075 = vmax.xlane.f32.xlu0 %v2074
        %v2076 = vpop.xlane.xlu0 %2075
        %v2077 = vsub.f32 %v2069, %v2076
        %v2078 = vmul.f32 %v2077, 1.442695
        %v2079 = vpow.pop %v2078
        %v2080 = vsel %vm944, %v2079, 0.0
        %2081 = vadd.xlane.f32.xlu0 %v2080
        %v2082 = vpop.xlane.xlu0 %2081
        %v2083 = vrcp.pop %v2082
        %v2084 = vmul.f32 %v2079, %v2083
        %v2085 = vpack.c.bf16 %v2084, %v2084
        %v2087 = vsel %vm944, %v2085, 0
        %v2089 = vsel %vm960, %v1961, 0
        %2091 = vmatprep.subr.bf16.mxu0 0
        %2092 = vmatpush1.bf16.msra.mxu0 %v2089
        %2093 = vmatprep.subr.bf16.mxu0 0
        %2094 = vmatpush1.bf16.msra.mxu0 0
        %2095 = vmatprep.subr.bf16.mxu0 0
        %2096 = vmatpush1.bf16.msra.mxu0 0
        %2097 = vmatprep.subr.bf16.mxu0 0
        %2098 = vmatpush1.bf16.msra.mxu0 0
        %2099 = vmatprep.subr.bf16.mxu0 0
        %2100 = vmatpush1.bf16.msra.mxu0 0
        %2101 = vmatprep.subr.bf16.mxu0 0
        %2102 = vmatpush1.bf16.msra.mxu0 0
        %2103 = vmatprep.subr.bf16.mxu0 0
        %2104 = vmatpush1.bf16.msra.mxu0 0
        %2105 = vmatprep.subr.bf16.mxu0 0
        %2106 = vmatpush1.bf16.msra.mxu0 0
        %2107 = vmatprep.subr.bf16.mxu0 0
        %2108 = vmatpush1.bf16.msra.mxu0 0
        %2109 = vmatprep.subr.bf16.mxu0 0
        %2110 = vmatpush1.bf16.msra.mxu0 0
        %2111 = vmatprep.subr.bf16.mxu0 0
        %2112 = vmatpush1.bf16.msra.mxu0 0
        %2113 = vmatprep.subr.bf16.mxu0 0
        %2114 = vmatpush1.bf16.msra.mxu0 0
        %2115 = vmatprep.subr.bf16.mxu0 0
        %2116 = vmatpush1.bf16.msra.mxu0 0
        %2117 = vmatprep.subr.bf16.mxu0 0
        %2118 = vmatpush1.bf16.msra.mxu0 0
        %2119 = vmatprep.subr.bf16.mxu0 0
        %2120 = vmatpush1.bf16.msra.mxu0 0
        %2121 = vmatprep.subr.bf16.mxu0 0
        %2122 = vmatpush1.bf16.msra.mxu0 0
        %2123 = vmatprep.mubr.bf16.mxu0 0
        %2124 = vmatmul.mubr.bf16.gmra.mrb[0].mxu0 %v2087
        %v2125 = vpop.f32.mrb[0].mxu0
        %v2126 = vadd.f32 0.0, %v2125
        %v2127 = vpop.f32.mrb[0].mxu0
        %v2128 = vpop.f32.mrb[0].mxu0
        %v2129 = vpop.f32.mrb[0].mxu0
        %2130 = vdwg.mxu0
        %v2131 = vpack.c.bf16 %v2126, %v2126
        %s2132 = scalar_lea.vmem %s7, 64
        %v2133 = vld [vmem:[%s2132] sm:$0xf]
        %v2134 = vld [vmem:[%s2132 + $0x4] sm:$0xf]
        %v2135 = vld [vmem:[%s2132 + $0x8] sm:$0xf]
        %v2136 = vld [vmem:[%s2132 + $0xc] sm:$0xf]
        %s2137 = scalar_lea.vmem %s5, 80
        %v2138 = vld [vmem:[%s2137] sm:$0xf]
        %v2139 = vld [vmem:[%s2137 + $0x4] sm:$0xf]
        %v2140 = vld [vmem:[%s2137 + $0x8] sm:$0xf]
        %v2141 = vld [vmem:[%s2137 + $0xc] sm:$0xf]
        %s2142 = scalar_lea.vmem [#allocation7], 5
        %v2143 = vld [vmem:[%s2142] sm:$0x1]
        %v2145 = vlaneseq
        %v2146 = vshrl.u32 %v2145, 7
        %v2147 = vsub.s32 0, %v2146
        %v2148 = vrot.slane %v2143, %v2147
        %v2154 = vunpack.c.l.b16 %v2138
        %v2155 = vunpack.c.l.b16 %v2139
        %v2156 = vunpack.c.l.b16 %v2140
        %v2157 = vunpack.c.l.b16 %v2141
        %v2158 = vpack.c.b16 %v2155, %v2154
        %v2159 = vpack.c.b16 %v2157, %v2156
        %2162 = vmatprep.subr.bf16.mxu0 0
        %2163 = vmatpush1.bf16.msra.mxu0 %v2158
        %2164 = vmatprep.subr.bf16.mxu0 0
        %2165 = vmatpush1.bf16.msra.mxu0 %v2159
        %2166 = vmatprep.subr.bf16.mxu0 0
        %2167 = vmatpush1.bf16.msra.mxu0 0
        %2168 = vmatprep.subr.bf16.mxu0 0
        %2169 = vmatpush1.bf16.msra.mxu0 0
        %2170 = vmatprep.subr.bf16.mxu0 0
        %2171 = vmatpush1.bf16.msra.mxu0 0
        %2172 = vmatprep.subr.bf16.mxu0 0
        %2173 = vmatpush1.bf16.msra.mxu0 0
        %2174 = vmatprep.subr.bf16.mxu0 0
        %2175 = vmatpush1.bf16.msra.mxu0 0
        %2176 = vmatprep.subr.bf16.mxu0 0
        %2177 = vmatpush1.bf16.msra.mxu0 0
        %2178 = vmatprep.subr.bf16.mxu0 0
        %2179 = vmatpush1.bf16.msra.mxu0 0
        %2180 = vmatprep.subr.bf16.mxu0 0
        %2181 = vmatpush1.bf16.msra.mxu0 0
        %2182 = vmatprep.subr.bf16.mxu0 0
        %2183 = vmatpush1.bf16.msra.mxu0 0
        %2184 = vmatprep.subr.bf16.mxu0 0
        %2185 = vmatpush1.bf16.msra.mxu0 0
        %2186 = vmatprep.subr.bf16.mxu0 0
        %2187 = vmatpush1.bf16.msra.mxu0 0
        %2188 = vmatprep.subr.bf16.mxu0 0
        %2189 = vmatpush1.bf16.msra.mxu0 0
        %2190 = vmatprep.subr.bf16.mxu0 0
        %2191 = vmatpush1.bf16.msra.mxu0 0
        %2192 = vmatprep.subr.bf16.mxu0 0
        %2193 = vmatpush1.bf16.msra.mxu0 0
        %2194 = vmatprep.mubr.bf16.mxu0 0
        %2195 = vmatmul.mubr.bf16.gmra.mrb[0].mxu0 %v1988
        %v2196 = vpop.f32.mrb[0].mxu0
        %v2197 = vadd.f32 %v2148, %v2196
        %v2198 = vpop.f32.mrb[0].mxu0
        %v2199 = vpop.f32.mrb[0].mxu0
        %v2200 = vpop.f32.mrb[0].mxu0
        %2201 = vdwg.mxu0
        %v2202 = vpack.c.bf16 %v2197, %v2197
        %v2204 = vsel %vm781, %v2202, 0
        %2206 = vmatprep.subr.bf16.mxu0 0
        %2207 = vmatpush1.bf16.xpose.msra.mxu0 %v1988
        %2208 = vmatprep.subr.bf16.mxu0 0
        %2209 = vmatpush1.bf16.xpose.msra.mxu0 0
        %2210 = vmatprep.subr.bf16.mxu0 0
        %2211 = vmatpush1.bf16.xpose.msra.mxu0 0
        %2212 = vmatprep.subr.bf16.mxu0 0
        %2213 = vmatpush1.bf16.xpose.msra.mxu0 0
        %2214 = vmatprep.subr.bf16.mxu0 0
        %2215 = vmatpush1.bf16.xpose.msra.mxu0 0
        %2216 = vmatprep.subr.bf16.mxu0 0
        %2217 = vmatpush1.bf16.xpose.msra.mxu0 0
        %2218 = vmatprep.subr.bf16.mxu0 0
        %2219 = vmatpush1.bf16.xpose.msra.mxu0 0
        %2220 = vmatprep.subr.bf16.mxu0 0
        %2221 = vmatpush1.bf16.xpose.msra.mxu0 0
        %2222 = vmatprep.subr.bf16.mxu0 0
        %2223 = vmatpush1.bf16.xpose.msra.mxu0 0
        %2224 = vmatprep.subr.bf16.mxu0 0
        %2225 = vmatpush1.bf16.xpose.msra.mxu0 0
        %2226 = vmatprep.subr.bf16.mxu0 0
        %2227 = vmatpush1.bf16.xpose.msra.mxu0 0
        %2228 = vmatprep.subr.bf16.mxu0 0
        %2229 = vmatpush1.bf16.xpose.msra.mxu0 0
        %2230 = vmatprep.subr.bf16.mxu0 0
        %2231 = vmatpush1.bf16.xpose.msra.mxu0 0
        %2232 = vmatprep.subr.bf16.mxu0 0
        %2233 = vmatpush1.bf16.xpose.msra.mxu0 0
        %2234 = vmatprep.subr.bf16.mxu0 0
        %2235 = vmatpush1.bf16.xpose.msra.mxu0 0
        %2236 = vmatprep.subr.bf16.mxu0 0
        %2237 = vmatpush1.bf16.xpose.msra.mxu0 0
        %2238 = vmatprep.mubr.bf16.mxu0 0
        %2239 = vmatmul.mubr.bf16.gmra.mrb[0].mxu0 %v2204
        %v2240 = vpop.f32.mrb[0].mxu0
        %v2241 = vadd.f32 %v899, %v2240
        %v2242 = vpop.f32.mrb[0].mxu0
        %v2243 = vpop.f32.mrb[0].mxu0
        %v2244 = vpop.f32.mrb[0].mxu0
        %2245 = vdwg.mxu0
        %v2246 = vsel %vm944, %v2241, -inf
        %2247 = vmax.xlane.f32.xlu0 %v2246
        %v2248 = vpop.xlane.xlu0 %2247
        %v2249 = vsub.f32 %v2241, %v2248
        %v2250 = vmul.f32 %v2249, 1.442695
        %v2251 = vpow.pop %v2250
        %v2252 = vsel %vm944, %v2251, 0.0
        %2253 = vadd.xlane.f32.xlu0 %v2252
        %v2254 = vpop.xlane.xlu0 %2253
        %v2255 = vrcp.pop %v2254
        %v2256 = vmul.f32 %v2251, %v2255
        %v2257 = vpack.c.bf16 %v2256, %v2256
        %v2259 = vsel %vm944, %v2257, 0
        %2261 = vmatprep.subr.bf16.mxu0 0
        %2262 = vmatpush1.bf16.msra.mxu0 %v2089
        %2263 = vmatprep.subr.bf16.mxu0 0
        %2264 = vmatpush1.bf16.msra.mxu0 0
        %2265 = vmatprep.subr.bf16.mxu0 0
        %2266 = vmatpush1.bf16.msra.mxu0 0
        %2267 = vmatprep.subr.bf16.mxu0 0
        %2268 = vmatpush1.bf16.msra.mxu0 0
        %2269 = vmatprep.subr.bf16.mxu0 0
        %2270 = vmatpush1.bf16.msra.mxu0 0
        %2271 = vmatprep.subr.bf16.mxu0 0
        %2272 = vmatpush1.bf16.msra.mxu0 0
        %2273 = vmatprep.subr.bf16.mxu0 0
        %2274 = vmatpush1.bf16.msra.mxu0 0
        %2275 = vmatprep.subr.bf16.mxu0 0
        %2276 = vmatpush1.bf16.msra.mxu0 0
        %2277 = vmatprep.subr.bf16.mxu0 0
        %2278 = vmatpush1.bf16.msra.mxu0 0
        %2279 = vmatprep.subr.bf16.mxu0 0
        %2280 = vmatpush1.bf16.msra.mxu0 0
        %2281 = vmatprep.subr.bf16.mxu0 0
        %2282 = vmatpush1.bf16.msra.mxu0 0
        %2283 = vmatprep.subr.bf16.mxu0 0
        %2284 = vmatpush1.bf16.msra.mxu0 0
        %2285 = vmatprep.subr.bf16.mxu0 0
        %2286 = vmatpush1.bf16.msra.mxu0 0
        %2287 = vmatprep.subr.bf16.mxu0 0
        %2288 = vmatpush1.bf16.msra.mxu0 0
        %2289 = vmatprep.subr.bf16.mxu0 0
        %2290 = vmatpush1.bf16.msra.mxu0 0
        %2291 = vmatprep.subr.bf16.mxu0 0
        %2292 = vmatpush1.bf16.msra.mxu0 0
        %2293 = vmatprep.mubr.bf16.mxu0 0
        %2294 = vmatmul.mubr.bf16.gmra.mrb[0].mxu0 %v2259
        %v2295 = vpop.f32.mrb[0].mxu0
        %v2296 = vadd.f32 0.0, %v2295
        %v2297 = vpop.f32.mrb[0].mxu0
        %v2298 = vpop.f32.mrb[0].mxu0
        %v2299 = vpop.f32.mrb[0].mxu0
        %2300 = vdwg.mxu0
        %v2301 = vpack.c.bf16 %v2296, %v2296
        %s2302 = scalar_lea.vmem %s7, 80
        %v2303 = vld [vmem:[%s2302] sm:$0xf]
        %v2304 = vld [vmem:[%s2302 + $0x4] sm:$0xf]
        %v2305 = vld [vmem:[%s2302 + $0x8] sm:$0xf]
        %v2306 = vld [vmem:[%s2302 + $0xc] sm:$0xf]
        %v2311 = vunpack.c.l.b16 %v2303
        %v2312 = vunpack.c.l.b16 %v2304
        %v2313 = vunpack.c.l.b16 %v2305
        %v2314 = vunpack.c.l.b16 %v2306
        %v2315 = vpack.c.b16 %v2312, %v2311
        %v2316 = vpack.c.b16 %v2314, %v2313
        %v2320 = vsel %vm781, %v2301, 0
        %2322 = vmatprep.subr.bf16.mxu0 0
        %2323 = vmatpush1.bf16.msra.mxu0 %v2315
        %2324 = vmatprep.subr.bf16.mxu0 0
        %2325 = vmatpush1.bf16.msra.mxu0 %v2316
        %2326 = vmatprep.subr.bf16.mxu0 0
        %2327 = vmatpush1.bf16.msra.mxu0 0
        %2328 = vmatprep.subr.bf16.mxu0 0
        %2329 = vmatpush1.bf16.msra.mxu0 0
        %2330 = vmatprep.subr.bf16.mxu0 0
        %2331 = vmatpush1.bf16.msra.mxu0 0
        %2332 = vmatprep.subr.bf16.mxu0 0
        %2333 = vmatpush1.bf16.msra.mxu0 0
        %2334 = vmatprep.subr.bf16.mxu0 0
        %2335 = vmatpush1.bf16.msra.mxu0 0
        %2336 = vmatprep.subr.bf16.mxu0 0
        %2337 = vmatpush1.bf16.msra.mxu0 0
        %2338 = vmatprep.subr.bf16.mxu0 0
        %2339 = vmatpush1.bf16.msra.mxu0 0
        %2340 = vmatprep.subr.bf16.mxu0 0
        %2341 = vmatpush1.bf16.msra.mxu0 0
        %2342 = vmatprep.subr.bf16.mxu0 0
        %2343 = vmatpush1.bf16.msra.mxu0 0
        %2344 = vmatprep.subr.bf16.mxu0 0
        %2345 = vmatpush1.bf16.msra.mxu0 0
        %2346 = vmatprep.subr.bf16.mxu0 0
        %2347 = vmatpush1.bf16.msra.mxu0 0
        %2348 = vmatprep.subr.bf16.mxu0 0
        %2349 = vmatpush1.bf16.msra.mxu0 0
        %2350 = vmatprep.subr.bf16.mxu0 0
        %2351 = vmatpush1.bf16.msra.mxu0 0
        %2352 = vmatprep.subr.bf16.mxu0 0
        %2353 = vmatpush1.bf16.msra.mxu0 0
        %2354 = vmatprep.mubr.bf16.mxu0 0
        %2355 = vmatmul.mubr.bf16.gmra.mrb[0].mxu0 %v2320
        %v2356 = vpop.f32.mrb[0].mxu0
        %v2357 = vadd.f32 0.0, %v2356
        %v2358 = vpop.f32.mrb[0].mxu0
        %v2359 = vpop.f32.mrb[0].mxu0
        %v2360 = vpop.f32.mrb[0].mxu0
        %2361 = vdwg.mxu0
        %v2366 = vunpack.c.l.b16 %v2133
        %v2367 = vunpack.c.l.b16 %v2134
        %v2368 = vunpack.c.l.b16 %v2135
        %v2369 = vunpack.c.l.b16 %v2136
        %v2370 = vpack.c.b16 %v2367, %v2366
        %v2371 = vpack.c.b16 %v2369, %v2368
        %v2375 = vsel %vm781, %v2131, 0
        %2377 = vmatprep.subr.bf16.mxu0 0
        %2378 = vmatpush1.bf16.msra.mxu0 %v2370
        %2379 = vmatprep.subr.bf16.mxu0 0
        %2380 = vmatpush1.bf16.msra.mxu0 %v2371
        %2381 = vmatprep.subr.bf16.mxu0 0
        %2382 = vmatpush1.bf16.msra.mxu0 0
        %2383 = vmatprep.subr.bf16.mxu0 0
        %2384 = vmatpush1.bf16.msra.mxu0 0
        %2385 = vmatprep.subr.bf16.mxu0 0
        %2386 = vmatpush1.bf16.msra.mxu0 0
        %2387 = vmatprep.subr.bf16.mxu0 0
        %2388 = vmatpush1.bf16.msra.mxu0 0
        %2389 = vmatprep.subr.bf16.mxu0 0
        %2390 = vmatpush1.bf16.msra.mxu0 0
        %2391 = vmatprep.subr.bf16.mxu0 0
        %2392 = vmatpush1.bf16.msra.mxu0 0
        %2393 = vmatprep.subr.bf16.mxu0 0
        %2394 = vmatpush1.bf16.msra.mxu0 0
        %2395 = vmatprep.subr.bf16.mxu0 0
        %2396 = vmatpush1.bf16.msra.mxu0 0
        %2397 = vmatprep.subr.bf16.mxu0 0
        %2398 = vmatpush1.bf16.msra.mxu0 0
        %2399 = vmatprep.subr.bf16.mxu0 0
        %2400 = vmatpush1.bf16.msra.mxu0 0
        %2401 = vmatprep.subr.bf16.mxu0 0
        %2402 = vmatpush1.bf16.msra.mxu0 0
        %2403 = vmatprep.subr.bf16.mxu0 0
        %2404 = vmatpush1.bf16.msra.mxu0 0
        %2405 = vmatprep.subr.bf16.mxu0 0
        %2406 = vmatpush1.bf16.msra.mxu0 0
        %2407 = vmatprep.subr.bf16.mxu0 0
        %2408 = vmatpush1.bf16.msra.mxu0 0
        %2409 = vmatprep.mubr.bf16.mxu0 0
        %2410 = vmatmul.mubr.bf16.gmra.mrb[0].mxu0 %v2375
        %v2411 = vpop.f32.mrb[0].mxu0
        %v2412 = vadd.f32 %v2357, %v2411
        %v2413 = vpop.f32.mrb[0].mxu0
        %v2414 = vpop.f32.mrb[0].mxu0
        %v2415 = vpop.f32.mrb[0].mxu0
        %2416 = vdwg.mxu0
        %s2417 = scalar_lea.vmem %s5, 96
        %v2418 = vld [vmem:[%s2417] sm:$0xf]
        %v2419 = vld [vmem:[%s2417 + $0x4] sm:$0xf]
        %v2420 = vld [vmem:[%s2417 + $0x8] sm:$0xf]
        %v2421 = vld [vmem:[%s2417 + $0xc] sm:$0xf]
        %s2422 = scalar_lea.vmem [#allocation7], 6
        %v2423 = vld [vmem:[%s2422] sm:$0x1]
        %v2425 = vlaneseq
        %v2426 = vshrl.u32 %v2425, 7
        %v2427 = vsub.s32 0, %v2426
        %v2428 = vrot.slane %v2423, %v2427
        %v2434 = vunpack.c.l.b16 %v2418
        %v2435 = vunpack.c.l.b16 %v2419
        %v2436 = vunpack.c.l.b16 %v2420
        %v2437 = vunpack.c.l.b16 %v2421
        %v2438 = vpack.c.b16 %v2435, %v2434
        %v2439 = vpack.c.b16 %v2437, %v2436
        %2442 = vmatprep.subr.bf16.mxu0 0
        %2443 = vmatpush1.bf16.msra.mxu0 %v2438
        %2444 = vmatprep.subr.bf16.mxu0 0
        %2445 = vmatpush1.bf16.msra.mxu0 %v2439
        %2446 = vmatprep.subr.bf16.mxu0 0
        %2447 = vmatpush1.bf16.msra.mxu0 0
        %2448 = vmatprep.subr.bf16.mxu0 0
        %2449 = vmatpush1.bf16.msra.mxu0 0
        %2450 = vmatprep.subr.bf16.mxu0 0
        %2451 = vmatpush1.bf16.msra.mxu0 0
        %2452 = vmatprep.subr.bf16.mxu0 0
        %2453 = vmatpush1.bf16.msra.mxu0 0
        %2454 = vmatprep.subr.bf16.mxu0 0
        %2455 = vmatpush1.bf16.msra.mxu0 0
        %2456 = vmatprep.subr.bf16.mxu0 0
        %2457 = vmatpush1.bf16.msra.mxu0 0
        %2458 = vmatprep.subr.bf16.mxu0 0
        %2459 = vmatpush1.bf16.msra.mxu0 0
        %2460 = vmatprep.subr.bf16.mxu0 0
        %2461 = vmatpush1.bf16.msra.mxu0 0
        %2462 = vmatprep.subr.bf16.mxu0 0
        %2463 = vmatpush1.bf16.msra.mxu0 0
        %2464 = vmatprep.subr.bf16.mxu0 0
        %2465 = vmatpush1.bf16.msra.mxu0 0
        %2466 = vmatprep.subr.bf16.mxu0 0
        %2467 = vmatpush1.bf16.msra.mxu0 0
        %2468 = vmatprep.subr.bf16.mxu0 0
        %2469 = vmatpush1.bf16.msra.mxu0 0
        %2470 = vmatprep.subr.bf16.mxu0 0
        %2471 = vmatpush1.bf16.msra.mxu0 0
        %2472 = vmatprep.subr.bf16.mxu0 0
        %2473 = vmatpush1.bf16.msra.mxu0 0
        %2474 = vmatprep.mubr.bf16.mxu0 0
        %2475 = vmatmul.mubr.bf16.gmra.mrb[0].mxu0 %v1988
        %v2476 = vpop.f32.mrb[0].mxu0
        %v2477 = vadd.f32 %v2428, %v2476
        %v2478 = vpop.f32.mrb[0].mxu0
        %v2479 = vpop.f32.mrb[0].mxu0
        %v2480 = vpop.f32.mrb[0].mxu0
        %2481 = vdwg.mxu0
        %v2482 = vpack.c.bf16 %v2477, %v2477
        %v2484 = vsel %vm781, %v2482, 0
        %2486 = vmatprep.subr.bf16.mxu0 0
        %2487 = vmatpush1.bf16.xpose.msra.mxu0 %v1988
        %2488 = vmatprep.subr.bf16.mxu0 0
        %2489 = vmatpush1.bf16.xpose.msra.mxu0 0
        %2490 = vmatprep.subr.bf16.mxu0 0
        %2491 = vmatpush1.bf16.xpose.msra.mxu0 0
        %2492 = vmatprep.subr.bf16.mxu0 0
        %2493 = vmatpush1.bf16.xpose.msra.mxu0 0
        %2494 = vmatprep.subr.bf16.mxu0 0
        %2495 = vmatpush1.bf16.xpose.msra.mxu0 0
        %2496 = vmatprep.subr.bf16.mxu0 0
        %2497 = vmatpush1.bf16.xpose.msra.mxu0 0
        %2498 = vmatprep.subr.bf16.mxu0 0
        %2499 = vmatpush1.bf16.xpose.msra.mxu0 0
        %2500 = vmatprep.subr.bf16.mxu0 0
        %2501 = vmatpush1.bf16.xpose.msra.mxu0 0
        %2502 = vmatprep.subr.bf16.mxu0 0
        %2503 = vmatpush1.bf16.xpose.msra.mxu0 0
        %2504 = vmatprep.subr.bf16.mxu0 0
        %2505 = vmatpush1.bf16.xpose.msra.mxu0 0
        %2506 = vmatprep.subr.bf16.mxu0 0
        %2507 = vmatpush1.bf16.xpose.msra.mxu0 0
        %2508 = vmatprep.subr.bf16.mxu0 0
        %2509 = vmatpush1.bf16.xpose.msra.mxu0 0
        %2510 = vmatprep.subr.bf16.mxu0 0
        %2511 = vmatpush1.bf16.xpose.msra.mxu0 0
        %2512 = vmatprep.subr.bf16.mxu0 0
        %2513 = vmatpush1.bf16.xpose.msra.mxu0 0
        %2514 = vmatprep.subr.bf16.mxu0 0
        %2515 = vmatpush1.bf16.xpose.msra.mxu0 0
        %2516 = vmatprep.subr.bf16.mxu0 0
        %2517 = vmatpush1.bf16.xpose.msra.mxu0 0
        %2518 = vmatprep.mubr.bf16.mxu0 0
        %2519 = vmatmul.mubr.bf16.gmra.mrb[0].mxu0 %v2484
        %v2520 = vpop.f32.mrb[0].mxu0
        %v2521 = vadd.f32 %v899, %v2520
        %v2522 = vpop.f32.mrb[0].mxu0
        %v2523 = vpop.f32.mrb[0].mxu0
        %v2524 = vpop.f32.mrb[0].mxu0
        %2525 = vdwg.mxu0
        %v2526 = vsel %vm944, %v2521, -inf
        %2527 = vmax.xlane.f32.xlu0 %v2526
        %v2528 = vpop.xlane.xlu0 %2527
        %v2529 = vsub.f32 %v2521, %v2528
        %v2530 = vmul.f32 %v2529, 1.442695
        %v2531 = vpow.pop %v2530
        %v2532 = vsel %vm944, %v2531, 0.0
        %2533 = vadd.xlane.f32.xlu0 %v2532
        %v2534 = vpop.xlane.xlu0 %2533
        %v2535 = vrcp.pop %v2534
        %v2536 = vmul.f32 %v2531, %v2535
        %v2537 = vpack.c.bf16 %v2536, %v2536
        %v2539 = vsel %vm944, %v2537, 0
        %2541 = vmatprep.subr.bf16.mxu0 0
        %2542 = vmatpush1.bf16.msra.mxu0 %v2089
        %2543 = vmatprep.subr.bf16.mxu0 0
        %2544 = vmatpush1.bf16.msra.mxu0 0
        %2545 = vmatprep.subr.bf16.mxu0 0
        %2546 = vmatpush1.bf16.msra.mxu0 0
        %2547 = vmatprep.subr.bf16.mxu0 0
        %2548 = vmatpush1.bf16.msra.mxu0 0
        %2549 = vmatprep.subr.bf16.mxu0 0
        %2550 = vmatpush1.bf16.msra.mxu0 0
        %2551 = vmatprep.subr.bf16.mxu0 0
        %2552 = vmatpush1.bf16.msra.mxu0 0
        %2553 = vmatprep.subr.bf16.mxu0 0
        %2554 = vmatpush1.bf16.msra.mxu0 0
        %2555 = vmatprep.subr.bf16.mxu0 0
        %2556 = vmatpush1.bf16.msra.mxu0 0
        %2557 = vmatprep.subr.bf16.mxu0 0
        %2558 = vmatpush1.bf16.msra.mxu0 0
        %2559 = vmatprep.subr.bf16.mxu0 0
        %2560 = vmatpush1.bf16.msra.mxu0 0
        %2561 = vmatprep.subr.bf16.mxu0 0
        %2562 = vmatpush1.bf16.msra.mxu0 0
        %2563 = vmatprep.subr.bf16.mxu0 0
        %2564 = vmatpush1.bf16.msra.mxu0 0
        %2565 = vmatprep.subr.bf16.mxu0 0
        %2566 = vmatpush1.bf16.msra.mxu0 0
        %2567 = vmatprep.subr.bf16.mxu0 0
        %2568 = vmatpush1.bf16.msra.mxu0 0
        %2569 = vmatprep.subr.bf16.mxu0 0
        %2570 = vmatpush1.bf16.msra.mxu0 0
        %2571 = vmatprep.subr.bf16.mxu0 0
        %2572 = vmatpush1.bf16.msra.mxu0 0
        %2573 = vmatprep.mubr.bf16.mxu0 0
        %2574 = vmatmul.mubr.bf16.gmra.mrb[0].mxu0 %v2539
        %v2575 = vpop.f32.mrb[0].mxu0
        %v2576 = vadd.f32 0.0, %v2575
        %v2577 = vpop.f32.mrb[0].mxu0
        %v2578 = vpop.f32.mrb[0].mxu0
        %v2579 = vpop.f32.mrb[0].mxu0
        %2580 = vdwg.mxu0
        %v2581 = vpack.c.bf16 %v2576, %v2576
        %s2582 = scalar_lea.vmem %s7, 96
        %v2583 = vld [vmem:[%s2582] sm:$0xf]
        %v2584 = vld [vmem:[%s2582 + $0x4] sm:$0xf]
        %v2585 = vld [vmem:[%s2582 + $0x8] sm:$0xf]
        %v2586 = vld [vmem:[%s2582 + $0xc] sm:$0xf]
        %v2591 = vunpack.c.l.b16 %v2583
        %v2592 = vunpack.c.l.b16 %v2584
        %v2593 = vunpack.c.l.b16 %v2585
        %v2594 = vunpack.c.l.b16 %v2586
        %v2595 = vpack.c.b16 %v2592, %v2591
        %v2596 = vpack.c.b16 %v2594, %v2593
        %v2600 = vsel %vm781, %v2581, 0
        %2602 = vmatprep.subr.bf16.mxu0 0
        %2603 = vmatpush1.bf16.msra.mxu0 %v2595
        %2604 = vmatprep.subr.bf16.mxu0 0
        %2605 = vmatpush1.bf16.msra.mxu0 %v2596
        %2606 = vmatprep.subr.bf16.mxu0 0
        %2607 = vmatpush1.bf16.msra.mxu0 0
        %2608 = vmatprep.subr.bf16.mxu0 0
        %2609 = vmatpush1.bf16.msra.mxu0 0
        %2610 = vmatprep.subr.bf16.mxu0 0
        %2611 = vmatpush1.bf16.msra.mxu0 0
        %2612 = vmatprep.subr.bf16.mxu0 0
        %2613 = vmatpush1.bf16.msra.mxu0 0
        %2614 = vmatprep.subr.bf16.mxu0 0
        %2615 = vmatpush1.bf16.msra.mxu0 0
        %2616 = vmatprep.subr.bf16.mxu0 0
        %2617 = vmatpush1.bf16.msra.mxu0 0
        %2618 = vmatprep.subr.bf16.mxu0 0
        %2619 = vmatpush1.bf16.msra.mxu0 0
        %2620 = vmatprep.subr.bf16.mxu0 0
        %2621 = vmatpush1.bf16.msra.mxu0 0
        %2622 = vmatprep.subr.bf16.mxu0 0
        %2623 = vmatpush1.bf16.msra.mxu0 0
        %2624 = vmatprep.subr.bf16.mxu0 0
        %2625 = vmatpush1.bf16.msra.mxu0 0
        %2626 = vmatprep.subr.bf16.mxu0 0
        %2627 = vmatpush1.bf16.msra.mxu0 0
        %2628 = vmatprep.subr.bf16.mxu0 0
        %2629 = vmatpush1.bf16.msra.mxu0 0
        %2630 = vmatprep.subr.bf16.mxu0 0
        %2631 = vmatpush1.bf16.msra.mxu0 0
        %2632 = vmatprep.subr.bf16.mxu0 0
        %2633 = vmatpush1.bf16.msra.mxu0 0
        %2634 = vmatprep.mubr.bf16.mxu0 0
        %2635 = vmatmul.mubr.bf16.gmra.mrb[0].mxu0 %v2600
        %v2636 = vpop.f32.mrb[0].mxu0
        %v2637 = vadd.f32 0.0, %v2636
        %v2638 = vpop.f32.mrb[0].mxu0
        %v2639 = vpop.f32.mrb[0].mxu0
        %v2640 = vpop.f32.mrb[0].mxu0
        %2641 = vdwg.mxu0
        %v2642 = vadd.f32 %v2412, %v2637
        %s2643 = scalar_lea.vmem %s5, 112
        %v2644 = vld [vmem:[%s2643] sm:$0xf]
        %v2645 = vld [vmem:[%s2643 + $0x4] sm:$0xf]
        %v2646 = vld [vmem:[%s2643 + $0x8] sm:$0xf]
        %v2647 = vld [vmem:[%s2643 + $0xc] sm:$0xf]
        %s2648 = scalar_lea.vmem [#allocation7], 7
        %v2649 = vld [vmem:[%s2648] sm:$0x1]
        %v2651 = vlaneseq
        %v2652 = vshrl.u32 %v2651, 7
        %v2653 = vsub.s32 0, %v2652
        %v2654 = vrot.slane %v2649, %v2653
        %v2660 = vunpack.c.l.b16 %v2644
        %v2661 = vunpack.c.l.b16 %v2645
        %v2662 = vunpack.c.l.b16 %v2646
        %v2663 = vunpack.c.l.b16 %v2647
        %v2664 = vpack.c.b16 %v2661, %v2660
        %v2665 = vpack.c.b16 %v2663, %v2662
        %2668 = vmatprep.subr.bf16.mxu0 0
        %2669 = vmatpush1.bf16.msra.mxu0 %v2664
        %2670 = vmatprep.subr.bf16.mxu0 0
        %2671 = vmatpush1.bf16.msra.mxu0 %v2665
        %2672 = vmatprep.subr.bf16.mxu0 0
        %2673 = vmatpush1.bf16.msra.mxu0 0
        %2674 = vmatprep.subr.bf16.mxu0 0
        %2675 = vmatpush1.bf16.msra.mxu0 0
        %2676 = vmatprep.subr.bf16.mxu0 0
        %2677 = vmatpush1.bf16.msra.mxu0 0
        %2678 = vmatprep.subr.bf16.mxu0 0
        %2679 = vmatpush1.bf16.msra.mxu0 0
        %2680 = vmatprep.subr.bf16.mxu0 0
        %2681 = vmatpush1.bf16.msra.mxu0 0
        %2682 = vmatprep.subr.bf16.mxu0 0
        %2683 = vmatpush1.bf16.msra.mxu0 0
        %2684 = vmatprep.subr.bf16.mxu0 0
        %2685 = vmatpush1.bf16.msra.mxu0 0
        %2686 = vmatprep.subr.bf16.mxu0 0
        %2687 = vmatpush1.bf16.msra.mxu0 0
        %2688 = vmatprep.subr.bf16.mxu0 0
        %2689 = vmatpush1.bf16.msra.mxu0 0
        %2690 = vmatprep.subr.bf16.mxu0 0
        %2691 = vmatpush1.bf16.msra.mxu0 0
        %2692 = vmatprep.subr.bf16.mxu0 0
        %2693 = vmatpush1.bf16.msra.mxu0 0
        %2694 = vmatprep.subr.bf16.mxu0 0
        %2695 = vmatpush1.bf16.msra.mxu0 0
        %2696 = vmatprep.subr.bf16.mxu0 0
        %2697 = vmatpush1.bf16.msra.mxu0 0
        %2698 = vmatprep.subr.bf16.mxu0 0
        %2699 = vmatpush1.bf16.msra.mxu0 0
        %2700 = vmatprep.mubr.bf16.mxu0 0
        %2701 = vmatmul.mubr.bf16.gmra.mrb[0].mxu0 %v1988
        %v2702 = vpop.f32.mrb[0].mxu0
        %v2703 = vadd.f32 %v2654, %v2702
        %v2704 = vpop.f32.mrb[0].mxu0
        %v2705 = vpop.f32.mrb[0].mxu0
        %v2706 = vpop.f32.mrb[0].mxu0
        %2707 = vdwg.mxu0
        %v2708 = vpack.c.bf16 %v2703, %v2703
        %v2710 = vsel %vm781, %v2708, 0
        %2712 = vmatprep.subr.bf16.mxu0 0
        %2713 = vmatpush1.bf16.xpose.msra.mxu0 %v1988
        %2714 = vmatprep.subr.bf16.mxu0 0
        %2715 = vmatpush1.bf16.xpose.msra.mxu0 0
        %2716 = vmatprep.subr.bf16.mxu0 0
        %2717 = vmatpush1.bf16.xpose.msra.mxu0 0
        %2718 = vmatprep.subr.bf16.mxu0 0
        %2719 = vmatpush1.bf16.xpose.msra.mxu0 0
        %2720 = vmatprep.subr.bf16.mxu0 0
        %2721 = vmatpush1.bf16.xpose.msra.mxu0 0
        %2722 = vmatprep.subr.bf16.mxu0 0
        %2723 = vmatpush1.bf16.xpose.msra.mxu0 0
        %2724 = vmatprep.subr.bf16.mxu0 0
        %2725 = vmatpush1.bf16.xpose.msra.mxu0 0
        %2726 = vmatprep.subr.bf16.mxu0 0
        %2727 = vmatpush1.bf16.xpose.msra.mxu0 0
        %2728 = vmatprep.subr.bf16.mxu0 0
        %2729 = vmatpush1.bf16.xpose.msra.mxu0 0
        %2730 = vmatprep.subr.bf16.mxu0 0
        %2731 = vmatpush1.bf16.xpose.msra.mxu0 0
        %2732 = vmatprep.subr.bf16.mxu0 0
        %2733 = vmatpush1.bf16.xpose.msra.mxu0 0
        %2734 = vmatprep.subr.bf16.mxu0 0
        %2735 = vmatpush1.bf16.xpose.msra.mxu0 0
        %2736 = vmatprep.subr.bf16.mxu0 0
        %2737 = vmatpush1.bf16.xpose.msra.mxu0 0
        %2738 = vmatprep.subr.bf16.mxu0 0
        %2739 = vmatpush1.bf16.xpose.msra.mxu0 0
        %2740 = vmatprep.subr.bf16.mxu0 0
        %2741 = vmatpush1.bf16.xpose.msra.mxu0 0
        %2742 = vmatprep.subr.bf16.mxu0 0
        %2743 = vmatpush1.bf16.xpose.msra.mxu0 0
        %2744 = vmatprep.mubr.bf16.mxu0 0
        %2745 = vmatmul.mubr.bf16.gmra.mrb[0].mxu0 %v2710
        %v2746 = vpop.f32.mrb[0].mxu0
        %v2747 = vadd.f32 %v899, %v2746
        %v2748 = vpop.f32.mrb[0].mxu0
        %v2749 = vpop.f32.mrb[0].mxu0
        %v2750 = vpop.f32.mrb[0].mxu0
        %2751 = vdwg.mxu0
        %v2752 = vsel %vm944, %v2747, -inf
        %2753 = vmax.xlane.f32.xlu0 %v2752
        %v2754 = vpop.xlane.xlu0 %2753
        %v2755 = vsub.f32 %v2747, %v2754
        %v2756 = vmul.f32 %v2755, 1.442695
        %v2757 = vpow.pop %v2756
        %v2758 = vsel %vm944, %v2757, 0.0
        %2759 = vadd.xlane.f32.xlu0 %v2758
        %v2760 = vpop.xlane.xlu0 %2759
        %v2761 = vrcp.pop %v2760
        %v2762 = vmul.f32 %v2757, %v2761
        %v2763 = vpack.c.bf16 %v2762, %v2762
        %v2765 = vsel %vm944, %v2763, 0
        %2767 = vmatprep.subr.bf16.mxu0 0
        %2768 = vmatpush1.bf16.msra.mxu0 %v2089
        %2769 = vmatprep.subr.bf16.mxu0 0
        %2770 = vmatpush1.bf16.msra.mxu0 0
        %2771 = vmatprep.subr.bf16.mxu0 0
        %2772 = vmatpush1.bf16.msra.mxu0 0
        %2773 = vmatprep.subr.bf16.mxu0 0
        %2774 = vmatpush1.bf16.msra.mxu0 0
        %2775 = vmatprep.subr.bf16.mxu0 0
        %2776 = vmatpush1.bf16.msra.mxu0 0
        %2777 = vmatprep.subr.bf16.mxu0 0
        %2778 = vmatpush1.bf16.msra.mxu0 0
        %2779 = vmatprep.subr.bf16.mxu0 0
        %2780 = vmatpush1.bf16.msra.mxu0 0
        %2781 = vmatprep.subr.bf16.mxu0 0
        %2782 = vmatpush1.bf16.msra.mxu0 0
        %2783 = vmatprep.subr.bf16.mxu0 0
        %2784 = vmatpush1.bf16.msra.mxu0 0
        %2785 = vmatprep.subr.bf16.mxu0 0
        %2786 = vmatpush1.bf16.msra.mxu0 0
        %2787 = vmatprep.subr.bf16.mxu0 0
        %2788 = vmatpush1.bf16.msra.mxu0 0
        %2789 = vmatprep.subr.bf16.mxu0 0
        %2790 = vmatpush1.bf16.msra.mxu0 0
        %2791 = vmatprep.subr.bf16.mxu0 0
        %2792 = vmatpush1.bf16.msra.mxu0 0
        %2793 = vmatprep.subr.bf16.mxu0 0
        %2794 = vmatpush1.bf16.msra.mxu0 0
        %2795 = vmatprep.subr.bf16.mxu0 0
        %2796 = vmatpush1.bf16.msra.mxu0 0
        %2797 = vmatprep.subr.bf16.mxu0 0
        %2798 = vmatpush1.bf16.msra.mxu0 0
        %2799 = vmatprep.mubr.bf16.mxu0 0
        %2800 = vmatmul.mubr.bf16.gmra.mrb[0].mxu0 %v2765
        %v2801 = vpop.f32.mrb[0].mxu0
        %v2802 = vadd.f32 0.0, %v2801
        %v2803 = vpop.f32.mrb[0].mxu0
        %v2804 = vpop.f32.mrb[0].mxu0
        %v2805 = vpop.f32.mrb[0].mxu0
        %2806 = vdwg.mxu0
        %v2807 = vpack.c.bf16 %v2802, %v2802
        %s2808 = scalar_lea.vmem %s7, 112
        %v2809 = vld [vmem:[%s2808] sm:$0xf]
        %v2810 = vld [vmem:[%s2808 + $0x4] sm:$0xf]
        %v2811 = vld [vmem:[%s2808 + $0x8] sm:$0xf]
        %v2812 = vld [vmem:[%s2808 + $0xc] sm:$0xf]
        %v2817 = vunpack.c.l.b16 %v2809
        %v2818 = vunpack.c.l.b16 %v2810
        %v2819 = vunpack.c.l.b16 %v2811
        %v2820 = vunpack.c.l.b16 %v2812
        %v2821 = vpack.c.b16 %v2818, %v2817
        %v2822 = vpack.c.b16 %v2820, %v2819
        %v2826 = vsel %vm781, %v2807, 0
        %2828 = vmatprep.subr.bf16.mxu0 0
        %2829 = vmatpush1.bf16.msra.mxu0 %v2821
        %2830 = vmatprep.subr.bf16.mxu0 0
        %2831 = vmatpush1.bf16.msra.mxu0 %v2822
        %2832 = vmatprep.subr.bf16.mxu0 0
        %2833 = vmatpush1.bf16.msra.mxu0 0
        %2834 = vmatprep.subr.bf16.mxu0 0
        %2835 = vmatpush1.bf16.msra.mxu0 0
        %2836 = vmatprep.subr.bf16.mxu0 0
        %2837 = vmatpush1.bf16.msra.mxu0 0
        %2838 = vmatprep.subr.bf16.mxu0 0
        %2839 = vmatpush1.bf16.msra.mxu0 0
        %2840 = vmatprep.subr.bf16.mxu0 0
        %2841 = vmatpush1.bf16.msra.mxu0 0
        %2842 = vmatprep.subr.bf16.mxu0 0
        %2843 = vmatpush1.bf16.msra.mxu0 0
        %2844 = vmatprep.subr.bf16.mxu0 0
        %2845 = vmatpush1.bf16.msra.mxu0 0
        %2846 = vmatprep.subr.bf16.mxu0 0
        %2847 = vmatpush1.bf16.msra.mxu0 0
        %2848 = vmatprep.subr.bf16.mxu0 0
        %2849 = vmatpush1.bf16.msra.mxu0 0
        %2850 = vmatprep.subr.bf16.mxu0 0
        %2851 = vmatpush1.bf16.msra.mxu0 0
        %2852 = vmatprep.subr.bf16.mxu0 0
        %2853 = vmatpush1.bf16.msra.mxu0 0
        %2854 = vmatprep.subr.bf16.mxu0 0
        %2855 = vmatpush1.bf16.msra.mxu0 0
        %2856 = vmatprep.subr.bf16.mxu0 0
        %2857 = vmatpush1.bf16.msra.mxu0 0
        %2858 = vmatprep.subr.bf16.mxu0 0
        %2859 = vmatpush1.bf16.msra.mxu0 0
        %2860 = vmatprep.mubr.bf16.mxu0 0
        %2861 = vmatmul.mubr.bf16.gmra.mrb[0].mxu0 %v2826
        %v2862 = vpop.f32.mrb[0].mxu0
        %v2863 = vadd.f32 0.0, %v2862
        %v2864 = vpop.f32.mrb[0].mxu0
        %v2865 = vpop.f32.mrb[0].mxu0
        %v2866 = vpop.f32.mrb[0].mxu0
        %2867 = vdwg.mxu0
        %v2868 = vadd.f32 %v2642, %v2863
        %s2869 = scalar_lea.vmem %s8, 1
        %v2870 = vld [vmem:[%s2869] sm:$0x1]
        %v2872 = vlaneseq
        %v2873 = vshrl.u32 %v2872, 7
        %v2874 = vsub.s32 0, %v2873
        %v2875 = vrot.slane %v2870, %v2874
        %v2877 = vadd.f32 %v2868, %v2875
        %v2878 = vadd.f32 %v1960, %v2877
        %s2879 = scalar_lea.vmem [#allocation8], 1
        %v2880 = vld [vmem:[%s2879] sm:$0x1]
        %s2881 = scalar_lea.vmem [#allocation10], 1
        %v2882 = vld [vmem:[%s2881] sm:$0x1]
        %v2883 = vsel %vm781, %v2878, 0.0
        %2884 = vadd.xlane.f32.xlu0 %v2883
        %v2885 = vpop.xlane.xlu0 %2884
        %v2886 = vmul.f32 %v2885, %v1754
        %v2887 = vsub.f32 %v2878, %v2886
        %v2888 = vmul.f32 %v2887, %v2887
        %v2889 = vsel %vm781, %v2888, 0.0
        %2890 = vadd.xlane.f32.xlu0 %v2889
        %v2891 = vpop.xlane.xlu0 %2890
        %v2892 = vmul.f32 %v2891, %v1754
        %v2893 = vadd.f32 %v2892, 1e-05
        %v2894 = vrsqrt.pop %v2893
        %v2895 = vmul.f32 %v2887, %v2894
        %v2897 = vlaneseq
        %v2898 = vshrl.u32 %v2897, 7
        %v2899 = vsub.s32 0, %v2898
        %v2900 = vrot.slane %v2880, %v2899
        %v2902 = vmul.f32 %v2895, %v2900
        %v2904 = vlaneseq
        %v2905 = vshrl.u32 %v2904, 7
        %v2906 = vsub.s32 0, %v2905
        %v2907 = vrot.slane %v2882, %v2906
        %v2909 = vadd.f32 %v2902, %v2907
        %v2910 = vpack.c.bf16 %v2909, %v2909
        %s2911 = scalar_lea.vmem %s11, 16
        %v2912 = vld [vmem:[%s2911] sm:$0xf]
        %v2913 = vld [vmem:[%s2911 + $0x4] sm:$0xf]
        %v2914 = vld [vmem:[%s2911 + $0x8] sm:$0xf]
        %v2915 = vld [vmem:[%s2911 + $0xc] sm:$0xf]
        %s2916 = scalar_lea.vmem [#allocation11], 1
        %v2917 = vld [vmem:[%s2916] sm:$0x1]
        %v2919 = vlaneseq
        %v2920 = vshrl.u32 %v2919, 7
        %v2921 = vsub.s32 0, %v2920
        %v2922 = vrot.slane %v2917, %v2921
        %v2928 = vunpack.c.l.b16 %v2912
        %v2929 = vunpack.c.l.b16 %v2913
        %v2930 = vunpack.c.l.b16 %v2914
        %v2931 = vunpack.c.l.b16 %v2915
        %v2932 = vpack.c.b16 %v2929, %v2928
        %v2933 = vpack.c.b16 %v2931, %v2930
        %v2937 = vsel %vm781, %v2910, 0
        %2939 = vmatprep.subr.bf16.mxu0 0
        %2940 = vmatpush1.bf16.msra.mxu0 %v2932
        %2941 = vmatprep.subr.bf16.mxu0 0
        %2942 = vmatpush1.bf16.msra.mxu0 %v2933
        %2943 = vmatprep.subr.bf16.mxu0 0
        %2944 = vmatpush1.bf16.msra.mxu0 0
        %2945 = vmatprep.subr.bf16.mxu0 0
        %2946 = vmatpush1.bf16.msra.mxu0 0
        %2947 = vmatprep.subr.bf16.mxu0 0
        %2948 = vmatpush1.bf16.msra.mxu0 0
        %2949 = vmatprep.subr.bf16.mxu0 0
        %2950 = vmatpush1.bf16.msra.mxu0 0
        %2951 = vmatprep.subr.bf16.mxu0 0
        %2952 = vmatpush1.bf16.msra.mxu0 0
        %2953 = vmatprep.subr.bf16.mxu0 0
        %2954 = vmatpush1.bf16.msra.mxu0 0
        %2955 = vmatprep.subr.bf16.mxu0 0
        %2956 = vmatpush1.bf16.msra.mxu0 0
        %2957 = vmatprep.subr.bf16.mxu0 0
        %2958 = vmatpush1.bf16.msra.mxu0 0
        %2959 = vmatprep.subr.bf16.mxu0 0
        %2960 = vmatpush1.bf16.msra.mxu0 0
        %2961 = vmatprep.subr.bf16.mxu0 0
        %2962 = vmatpush1.bf16.msra.mxu0 0
        %2963 = vmatprep.subr.bf16.mxu0 0
        %2964 = vmatpush1.bf16.msra.mxu0 0
        %2965 = vmatprep.subr.bf16.mxu0 0
        %2966 = vmatpush1.bf16.msra.mxu0 0
        %2967 = vmatprep.subr.bf16.mxu0 0
        %2968 = vmatpush1.bf16.msra.mxu0 0
        %2969 = vmatprep.subr.bf16.mxu0 0
        %2970 = vmatpush1.bf16.msra.mxu0 0
        %2971 = vmatprep.mubr.bf16.mxu0 0
        %2972 = vmatmul.mubr.bf16.gmra.mrb[0].mxu0 %v2937
        %v2973 = vpop.f32.mrb[0].mxu0
        %v2974 = vadd.f32 %v2922, %v2973
        %v2975 = vpop.f32.mrb[0].mxu0
        %v2976 = vpop.f32.mrb[0].mxu0
        %v2977 = vpop.f32.mrb[0].mxu0
        %2978 = vdwg.mxu0
        %v2979 = vmax.f32 %v2974, 0.0
        %v2980 = vpack.c.bf16 %v2979, %v2979
        %s2981 = scalar_lea.vmem %s13, 32
        %v2982 = vld [vmem:[%s2981] sm:$0xf]
        %v2983 = vld [vmem:[%s2981 + $0x4] sm:$0xf]
        %v2984 = vld [vmem:[%s2981 + $0x8] sm:$0xf]
        %v2985 = vld [vmem:[%s2981 + $0xc] sm:$0xf]
        %v2986 = vld [vmem:[%s2981 + $0x10] sm:$0xf]
        %v2987 = vld [vmem:[%s2981 + $0x14] sm:$0xf]
        %v2988 = vld [vmem:[%s2981 + $0x18] sm:$0xf]
        %v2989 = vld [vmem:[%s2981 + $0x1c] sm:$0xf]
        %s2990 = scalar_lea.vmem [#allocation13], 1
        %v2991 = vld [vmem:[%s2990] sm:$0x1]
        %v2993 = vlaneseq
        %v2994 = vshrl.u32 %v2993, 7
        %v2995 = vsub.s32 0, %v2994
        %v2996 = vrot.slane %v2991, %v2995
        %v3006 = vunpack.c.l.b16 %v2982
        %v3007 = vunpack.c.l.b16 %v2983
        %v3008 = vunpack.c.l.b16 %v2984
        %v3009 = vunpack.c.l.b16 %v2985
        %v3010 = vunpack.c.l.b16 %v2986
        %v3011 = vunpack.c.l.b16 %v2987
        %v3012 = vunpack.c.l.b16 %v2988
        %v3013 = vunpack.c.l.b16 %v2989
        %v3014 = vpack.c.b16 %v3007, %v3006
        %v3015 = vpack.c.b16 %v3009, %v3008
        %v3016 = vpack.c.b16 %v3011, %v3010
        %v3017 = vpack.c.b16 %v3013, %v3012
        %v3023 = vsel %vm1887, %v2980, 0
        %3025 = vmatprep.subr.bf16.mxu0 0
        %3026 = vmatpush1.bf16.msra.mxu0 %v3014
        %3027 = vmatprep.subr.bf16.mxu0 0
        %3028 = vmatpush1.bf16.msra.mxu0 %v3015
        %3029 = vmatprep.subr.bf16.mxu0 0
        %3030 = vmatpush1.bf16.msra.mxu0 %v3016
        %3031 = vmatprep.subr.bf16.mxu0 0
        %3032 = vmatpush1.bf16.msra.mxu0 %v3017
        %3033 = vmatprep.subr.bf16.mxu0 0
        %3034 = vmatpush1.bf16.msra.mxu0 0
        %3035 = vmatprep.subr.bf16.mxu0 0
        %3036 = vmatpush1.bf16.msra.mxu0 0
        %3037 = vmatprep.subr.bf16.mxu0 0
        %3038 = vmatpush1.bf16.msra.mxu0 0
        %3039 = vmatprep.subr.bf16.mxu0 0
        %3040 = vmatpush1.bf16.msra.mxu0 0
        %3041 = vmatprep.subr.bf16.mxu0 0
        %3042 = vmatpush1.bf16.msra.mxu0 0
        %3043 = vmatprep.subr.bf16.mxu0 0
        %3044 = vmatpush1.bf16.msra.mxu0 0
        %3045 = vmatprep.subr.bf16.mxu0 0
        %3046 = vmatpush1.bf16.msra.mxu0 0
        %3047 = vmatprep.subr.bf16.mxu0 0
        %3048 = vmatpush1.bf16.msra.mxu0 0
        %3049 = vmatprep.subr.bf16.mxu0 0
        %3050 = vmatpush1.bf16.msra.mxu0 0
        %3051 = vmatprep.subr.bf16.mxu0 0
        %3052 = vmatpush1.bf16.msra.mxu0 0
        %3053 = vmatprep.subr.bf16.mxu0 0
        %3054 = vmatpush1.bf16.msra.mxu0 0
        %3055 = vmatprep.subr.bf16.mxu0 0
        %3056 = vmatpush1.bf16.msra.mxu0 0
        %3057 = vmatprep.mubr.bf16.mxu0 0
        %3058 = vmatmul.mubr.bf16.gmra.mrb[0].mxu0 %v3023
        %v3059 = vpop.f32.mrb[0].mxu0
        %v3060 = vadd.f32 %v2996, %v3059
        %v3061 = vpop.f32.mrb[0].mxu0
        %v3062 = vpop.f32.mrb[0].mxu0
        %v3063 = vpop.f32.mrb[0].mxu0
        %3064 = vdwg.mxu0
        %v3065 = vadd.f32 %v2909, %v3060
        %s3066 = scalar_lea.vmem [#allocation14], 1
        %v3067 = vld [vmem:[%s3066] sm:$0x1]
        %s3068 = scalar_lea.vmem [#allocation16], 1
        %v3069 = vld [vmem:[%s3068] sm:$0x1]
        %v3070 = vsel %vm781, %v3065, 0.0
        %3071 = vadd.xlane.f32.xlu0 %v3070
        %v3072 = vpop.xlane.xlu0 %3071
        %v3073 = vmul.f32 %v3072, %v1754
        %v3074 = vsub.f32 %v3065, %v3073
        %v3075 = vmul.f32 %v3074, %v3074
        %v3076 = vsel %vm781, %v3075, 0.0
        %3077 = vadd.xlane.f32.xlu0 %v3076
        %v3078 = vpop.xlane.xlu0 %3077
        %v3079 = vmul.f32 %v3078, %v1754
        %v3080 = vadd.f32 %v3079, 1e-05
        %v3081 = vrsqrt.pop %v3080
        %v3082 = vmul.f32 %v3074, %v3081
        %v3084 = vlaneseq
        %v3085 = vshrl.u32 %v3084, 7
        %v3086 = vsub.s32 0, %v3085
        %v3087 = vrot.slane %v3067, %v3086
        %v3089 = vmul.f32 %v3082, %v3087
        %v3091 = vlaneseq
        %v3092 = vshrl.u32 %v3091, 7
        %v3093 = vsub.s32 0, %v3092
        %v3094 = vrot.slane %v3069, %v3093
        %v3096 = vadd.f32 %v3089, %v3094
        %v3097 = vpack.c.bf16 %v3096, %v3096
        %v3099 = vsel %vm944, 1040203264, 0
        %v3102 = vsel %vm960, %v3097, 0
        %3104 = vmatprep.subr.bf16.mxu0 0
        %3105 = vmatpush1.bf16.msra.mxu0 %v3102
        %3106 = vmatprep.subr.bf16.mxu0 0
        %3107 = vmatpush1.bf16.msra.mxu0 0
        %3108 = vmatprep.subr.bf16.mxu0 0
        %3109 = vmatpush1.bf16.msra.mxu0 0
        %3110 = vmatprep.subr.bf16.mxu0 0
        %3111 = vmatpush1.bf16.msra.mxu0 0
        %3112 = vmatprep.subr.bf16.mxu0 0
        %3113 = vmatpush1.bf16.msra.mxu0 0
        %3114 = vmatprep.subr.bf16.mxu0 0
        %3115 = vmatpush1.bf16.msra.mxu0 0
        %3116 = vmatprep.subr.bf16.mxu0 0
        %3117 = vmatpush1.bf16.msra.mxu0 0
        %3118 = vmatprep.subr.bf16.mxu0 0
        %3119 = vmatpush1.bf16.msra.mxu0 0
        %3120 = vmatprep.subr.bf16.mxu0 0
        %3121 = vmatpush1.bf16.msra.mxu0 0
        %3122 = vmatprep.subr.bf16.mxu0 0
        %3123 = vmatpush1.bf16.msra.mxu0 0
        %3124 = vmatprep.subr.bf16.mxu0 0
        %3125 = vmatpush1.bf16.msra.mxu0 0
        %3126 = vmatprep.subr.bf16.mxu0 0
        %3127 = vmatpush1.bf16.msra.mxu0 0
        %3128 = vmatprep.subr.bf16.mxu0 0
        %3129 = vmatpush1.bf16.msra.mxu0 0
        %3130 = vmatprep.subr.bf16.mxu0 0
        %3131 = vmatpush1.bf16.msra.mxu0 0
        %3132 = vmatprep.subr.bf16.mxu0 0
        %3133 = vmatpush1.bf16.msra.mxu0 0
        %3134 = vmatprep.subr.bf16.mxu0 0
        %3135 = vmatpush1.bf16.msra.mxu0 0
        %3136 = vmatprep.mubr.bf16.mxu0 0
        %3137 = vmatmul.mubr.bf16.gmra.mrb[0].mxu0 %v3099
        %v3138 = vpop.f32.mrb[0].mxu0
        %v3139 = vadd.f32 0.0, %v3138
        %v3140 = vpop.f32.mrb[0].mxu0
        %v3141 = vpop.f32.mrb[0].mxu0
        %v3142 = vpop.f32.mrb[0].mxu0
        %3143 = vdwg.mxu0
        %v3144 = vpack.c.bf16 %v3139, %v3139
        %v3145 = vld [vmem:[%s17] sm:$0xf]
        %v3146 = vld [vmem:[%s17 + $0x4] sm:$0xf]
        %v3147 = vld [vmem:[%s17 + $0x8] sm:$0xf]
        %v3148 = vld [vmem:[%s17 + $0xc] sm:$0xf]
        %v3149 = vld [vmem:[#allocation17] sm:$0x1]
        %v3154 = vunpack.c.l.b16 %v3145
        %v3155 = vunpack.c.l.b16 %v3146
        %v3156 = vunpack.c.l.b16 %v3147
        %v3157 = vunpack.c.l.b16 %v3148
        %v3158 = vpack.c.b16 %v3155, %v3154
        %v3159 = vpack.c.b16 %v3157, %v3156
        %v3163 = vsel %vm781, %v3144, 0
        %3165 = vmatprep.subr.bf16.mxu0 0
        %3166 = vmatpush1.bf16.msra.mxu0 %v3158
        %3167 = vmatprep.subr.bf16.mxu0 0
        %3168 = vmatpush1.bf16.msra.mxu0 %v3159
        %3169 = vmatprep.subr.bf16.mxu0 0
        %3170 = vmatpush1.bf16.msra.mxu0 0
        %3171 = vmatprep.subr.bf16.mxu0 0
        %3172 = vmatpush1.bf16.msra.mxu0 0
        %3173 = vmatprep.subr.bf16.mxu0 0
        %3174 = vmatpush1.bf16.msra.mxu0 0
        %3175 = vmatprep.subr.bf16.mxu0 0
        %3176 = vmatpush1.bf16.msra.mxu0 0
        %3177 = vmatprep.subr.bf16.mxu0 0
        %3178 = vmatpush1.bf16.msra.mxu0 0
        %3179 = vmatprep.subr.bf16.mxu0 0
        %3180 = vmatpush1.bf16.msra.mxu0 0
        %3181 = vmatprep.subr.bf16.mxu0 0
        %3182 = vmatpush1.bf16.msra.mxu0 0
        %3183 = vmatprep.subr.bf16.mxu0 0
        %3184 = vmatpush1.bf16.msra.mxu0 0
        %3185 = vmatprep.subr.bf16.mxu0 0
        %3186 = vmatpush1.bf16.msra.mxu0 0
        %3187 = vmatprep.subr.bf16.mxu0 0
        %3188 = vmatpush1.bf16.msra.mxu0 0
        %3189 = vmatprep.subr.bf16.mxu0 0
        %3190 = vmatpush1.bf16.msra.mxu0 0
        %3191 = vmatprep.subr.bf16.mxu0 0
        %3192 = vmatpush1.bf16.msra.mxu0 0
        %3193 = vmatprep.subr.bf16.mxu0 0
        %3194 = vmatpush1.bf16.msra.mxu0 0
        %3195 = vmatprep.subr.bf16.mxu0 0
        %3196 = vmatpush1.bf16.msra.mxu0 0
        %3197 = vmatprep.mubr.bf16.mxu0 0
        %3198 = vmatmul.mubr.bf16.gmra.mrb[0].mxu0 %v3163
        %v3199 = vpop.f32.mrb[0].mxu0
        %v3200 = vadd.f32 %v3149, %v3199
        %v3201 = vpop.f32.mrb[0].mxu0
        %v3202 = vpop.f32.mrb[0].mxu0
        %v3203 = vpop.f32.mrb[0].mxu0
        %3204 = vdwg.mxu0
        %vm3205 = vcmask 253952
        %3206 = vst.msk [vmem:[%s745] sm:$0x1] %vm3205, %v3200
        %s3207 = sand.u32 %s456, 1
        %s3208 = scalar_lea.sflag [#allocation4], %s3207
        %s3209 = sand.u32 %s456, 1
        %s3210 = scalar_lea.vmem [#allocation19], %s3209
        // Predicated region
        $region137: #{transformer_forward.1} parent=95 // pred_check
          %p3211 = pneg %p466
        $region138: #{transformer_forward.1} parent=95 // pred_check_branch
          %3213 = sbr.rel (%p3211) target = $region140
        $region139: #{transformer_forward.1} parent=95 // pred_region
          %s3215 = ssub.s32 16, 16
          %3216 = vsyncadd %s3208, %s3215
          %s3217 = smul.addr %s39, 16
          %s3218 = scalar_lea.hbm %s19, %s3217
          %s3220 = sshll.u32 %s3210, 4
          %s3221 = int_to_ptr.vmem [resolvable:$true] %s3220
          %3223 = dma.vmem_to_hbm [thread:$0]  %s3221, 16, %s3218, %s3208
        $region140: #{transformer_forward.1} parent=95 // pred_fallthru
          _
      $region96: #{transformer_forward.1} parent=5 // pred_fallthru
        _
      %p3224 = scmp.le.s32.totalorder 2, %s34
      // Predicated region
      $region141: #{transformer_forward.1} parent=5 // pred_check
        %p3225 = pneg %p3224
      $region142: #{transformer_forward.1} parent=5 // pred_check_branch
        %3227 = sbr.rel (%p3225) target = $region144
      $region143: #{transformer_forward.1} parent=5 // pred_region
        %s3228 = ssub.s32 %s34, 2
        // Predicated region
        $region145: #{transformer_forward.1} parent=143 // pred_check
          %p3229 = pneg %p472
        $region146: #{transformer_forward.1} parent=143 // pred_check_branch
          %3231 = sbr.rel (%p3229) target = $region148
        $region147: #{transformer_forward.1} parent=143 // pred_region
          %s3232 = sand.u32 %s457, 1
          %s3233 = scalar_lea.sflag [#allocation4], %s3232
          %s3234 = sand.u32 %s457, 1
          %s3235 = scalar_lea.vmem [#allocation19], %s3234
          %3236 = dma.done %s3233, 16
        $region148: #{transformer_forward.1} parent=143 // pred_fallthru
          _
      $region144: #{transformer_forward.1} parent=5 // pred_fallthru
        _
    $region6: #{transformer_forward.1} parent=1 // loop_footer
      %s38 = sadd.s32 1, %s34
    $region7: #{transformer_forward.1} parent=1 // loop_footer_branch
      %33 = sbr.rel target = $region3
    $region8: #{transformer_forward.1} parent=1 // loop_exit
      _
    %3237 = vsyncpa [#allocation3], 1
    %s3238 = scalar_lea.sflag [#allocation3], 1
    %3239 = vsyncpa %s3238, 1
    %3240 = vsyncpa [#allocation6], 1
    %3241 = vsyncpa [#allocation9], 1
    %3242 = vsyncpa [#allocation12], 1
    %3243 = vsyncpa [#allocation15], 1
    %3244 = vsyncpa [#allocation18], 1
    %3245 = vsyncpa [#allocation4], 1
    %s3246 = scalar_lea.sflag [#allocation4], 1
    %3247 = vsyncpa %s3246, 1

</llo_original>
